<compile_context>
chip_gen: v5e
topology: v5e:2x2
jax: 0.10.0
libtpu: 0.0.40
codegen_flags: <defaults>
</compile_context>

<pallas_src>
import functools

import numpy as np
import jax
import jax.numpy as jnp
from jax import lax
from jax.experimental import pallas as pl
from jax.experimental.pallas import tpu as pltpu

BN_EPS = 1e-5
LANE = 128
HALO = 16          # zero rows before/after the flattened map (>= 9, multiple of 8)


def _round_up(x, m):
    return (x + m - 1) // m * m


# --------------------------------------------------------------------------
# fused residual-block kernel
# --------------------------------------------------------------------------
def _resblock_kernel(xh_ref, x_ref, mask_ref, w1_ref, b1_ref, w2_hbm_ref,
                     b2_ref, o_ref, h_ref, w2_ref, sem, *, mpad, wp):
    """Fused: conv3x3+BN+ReLU -> conv3x3+BN -> +residual -> ReLU.

    xh_ref  : (HALO+mpad+HALO, Cp) f32   halo-padded input feature map
    x_ref   : (mpad, Cp) f32             input rows (residual add)
    mask_ref: (mpad, 1) f32              1.0 at board positions, 0.0 at pads
    w1_ref  : (5, 2*Cp, Cp) bf16         BN-folded conv1 weights, paired taps
    b1_ref  : (1, Cp) f32
    w2_hbm_ref: (5, 2*Cp, Cp) bf16 (HBM) prefetched under conv1
    b2_ref  : (1, Cp) f32
    o_ref   : (mpad, Cp) f32
    h_ref   : (HALO+mpad+HALO, Cp) f32   VMEM scratch for the hidden map
    w2_ref  : (5, 2*Cp, Cp) bf16         VMEM scratch for conv2 weights
    sem     : DMA semaphore
    """
    cp = o_ref.shape[1]

    # start the conv2 weight DMA now; it completes while conv1 runs on the MXU
    w2_copy = pltpu.make_async_copy(w2_hbm_ref, w2_ref, sem)
    w2_copy.start()

    def conv3x3(src_ref, w_ref):
        acc = jnp.zeros((mpad, cp), jnp.float32)
        for p in range(5):                       # taps paired along K: 9 -> 5 dots
            ka, kb = 2 * p, min(2 * p + 1, 8)    # pair 4 reuses tap 8 (zero weights)
            sa = HALO + (ka // 3 - 1) * wp + (ka % 3 - 1)
            sb = HALO + (kb // 3 - 1) * wp + (kb % 3 - 1)
            lhs = jnp.concatenate(
                [src_ref[sa:sa + mpad, :], src_ref[sb:sb + mpad, :]],
                axis=1).astype(jnp.bfloat16)
            acc = acc + jnp.dot(lhs, w_ref[p],
                                preferred_element_type=jnp.float32)
        return acc

    # conv1 + folded BN1 + ReLU; one-shot mask re-zeroes pad rows / pad column
    h = jnp.maximum(conv3x3(xh_ref, w1_ref) + b1_ref[...], 0.0) * mask_ref[...]

    # stage h in VMEM with a zero halo (only the halo rows get zeroed)
    h_ref[:HALO, :] = jnp.zeros((HALO, cp), h_ref.dtype)
    h_ref[HALO + mpad:, :] = jnp.zeros((HALO, cp), h_ref.dtype)
    h_ref[HALO:HALO + mpad, :] = h

    # conv2 weights must be resident now
    w2_copy.wait()

    # conv2 + folded BN2 + residual + ReLU (pad positions are garbage but are
    # sliced away by the wrapper)
    out = conv3x3(h_ref, w2_ref) + b2_ref[...] + x_ref[...]
    o_ref[...] = jnp.maximum(out, 0.0)


# --------------------------------------------------------------------------
# wrapper: layout glue + pallas_call
# --------------------------------------------------------------------------
def pathogen_residual_block(params, x_nchw):
    B, C, H, W = x_nchw.shape
    Cp = params["w1"].shape[-1]
    Wp = _round_up(W + 1, 8)       # board width + >=1 zero column, sublane mult
    Hp = H + 2                     # one zero row above and below the board
    Mpad = B * Hp * Wp
    Rtot = HALO + Mpad + HALO

    # NCHW -> zero-padded (B, Hp, Wp, Cp) flattened rows.  One-time glue; for a
    # tower of blocks keep activations in this layout across blocks.
    x_nhwc = jnp.transpose(x_nchw, (0, 2, 3, 1))
    x_pad = jnp.pad(x_nhwc, ((0, 0), (1, 1), (0, Wp - W), (0, Cp - C)))
    x_flat = x_pad.reshape(Mpad, Cp)
    x_halo = jnp.pad(x_flat, ((HALO, HALO), (0, 0)))

    # static validity mask (board positions = 1, pad rows / pad column = 0)
    q = np.arange(Hp * Wp)
    yp, xp = q // Wp, q % Wp
    valid = ((yp >= 1) & (yp <= H) & (xp < W)).astype(np.float32)
    mask = jnp.asarray(np.tile(valid, B).reshape(Mpad, 1))

    kernel = functools.partial(_resblock_kernel, mpad=Mpad, wp=Wp)
    vmem = pl.BlockSpec(memory_space=pltpu.MemorySpace.VMEM)
    hbm = pl.BlockSpec(memory_space=pl.ANY)

    flops = 2 * 5 * 2 * Mpad * (2 * Cp) * Cp
    bytes_accessed = int(
        4 * (x_halo.size + x_flat.size + mask.size + Mpad * Cp)
        + 2 * (params["w1"].size + params["w2"].size)
        + 4 * (params["b1"].size + params["b2"].size))

    out = pl.pallas_call(
        kernel,
        out_shape=jax.ShapeDtypeStruct((Mpad, Cp), jnp.float32),
        in_specs=[vmem, vmem, vmem, vmem, vmem, hbm, vmem],
        out_specs=vmem,
        scratch_shapes=[
            pltpu.VMEM((Rtot, Cp), jnp.float32),            # hidden map + halo
            pltpu.VMEM(params["w2"].shape, jnp.bfloat16),   # conv2 weights
            pltpu.SemaphoreType.DMA,
        ],
        cost_estimate=pl.CostEstimate(flops=flops, transcendentals=0,
                                      bytes_accessed=bytes_accessed),
        # TODO(synk): for large batches/boards add a row-tile grid axis with
        # dimension_semantics=("parallel",) so v7x's second TensorCore helps;
        # at B=2, 7x7 the per-step overhead would dominate.
    )(x_halo, x_flat, mask, params["w1"], params["b1"], params["w2"],
      params["b2"])

    out = out.reshape(B, Hp, Wp, Cp)[:, 1:1 + H, :W, :C]
    return jnp.transpose(out, (0, 3, 1, 2))                 # back to NCHW


# --------------------------------------------------------------------------
# parameter prep: fold BN (inference mode) into conv weights / bias, pair taps
# --------------------------------------------------------------------------
def _fold_conv_bn(conv_w, conv_b, gamma, beta, mean, var):
    # conv_w: (Cout, Cin, 3, 3) OIHW  ->  tap-major (9, Cin, Cout), BN folded
    inv_std = gamma / jnp.sqrt(var + BN_EPS)
    w = conv_w * inv_std[:, None, None, None]
    b = (conv_b - mean) * inv_std + beta
    w = jnp.transpose(w, (2, 3, 1, 0)).reshape(9, conv_w.shape[1],
                                               conv_w.shape[0])
    return w, b


def prepare_params(raw, cp):
    out = {}
    for i in (1, 2):
        w, b = _fold_conv_bn(raw[f"conv{i}_w"], raw[f"conv{i}_b"],
                             raw[f"bn{i}_gamma"], raw[f"bn{i}_beta"],
                             raw[f"bn{i}_mean"], raw[f"bn{i}_var"])
        cin, cout = w.shape[1], w.shape[2]
        w = jnp.pad(w, ((0, 1), (0, cp - cin), (0, cp - cout)))  # 10th tap = 0
        w = w.reshape(5, 2 * cp, cp)     # pair taps along K for 256-deep MXU
        b = jnp.pad(b, ((0, cp - cout),))
        out[f"w{i}"] = w.astype(jnp.bfloat16)
        out[f"b{i}"] = b.reshape(1, cp).astype(jnp.float32)
    return out


def init_raw_params(key, c):
    ks = jax.random.split(key, 12)
    n = lambda k, shape, s=1.0: s * jax.random.normal(k, shape, jnp.float32)
    raw = {}
    for i, off in ((1, 0), (2, 6)):
        raw[f"conv{i}_w"] = n(ks[off + 0], (c, c, 3, 3), 0.05)
        raw[f"conv{i}_b"] = n(ks[off + 1], (c,), 0.05)
        raw[f"bn{i}_gamma"] = 1.0 + 0.1 * n(ks[off + 2], (c,))
        raw[f"bn{i}_beta"] = 0.1 * n(ks[off + 3], (c,))
        raw[f"bn{i}_mean"] = 0.05 * n(ks[off + 4], (c,))
        raw[f"bn{i}_var"] = 0.5 + jax.random.uniform(ks[off + 5], (c,),
                                                     jnp.float32)
    return raw


# --------------------------------------------------------------------------
# pure-JAX reference (PyTorch semantics, BN in eval mode)
# --------------------------------------------------------------------------
def reference_block(raw, x):
    def conv_bn(z, i):
        y = lax.conv_general_dilated(
            z, raw[f"conv{i}_w"], window_strides=(1, 1),
            padding=((1, 1), (1, 1)),
            dimension_numbers=("NCHW", "OIHW", "NCHW"))
        y = y + raw[f"conv{i}_b"][None, :, None, None]
        inv = raw[f"bn{i}_gamma"] / jnp.sqrt(raw[f"bn{i}_var"] + BN_EPS)
        return ((y - raw[f"bn{i}_mean"][None, :, None, None])
                * inv[None, :, None, None]
                + raw[f"bn{i}_beta"][None, :, None, None])

    h = jax.nn.relu(conv_bn(x, 1))
    return jax.nn.relu(conv_bn(h, 2) + x)


# --------------------------------------------------------------------------
if __name__ == "__main__":
    key = jax.random.PRNGKey(0)
    pkey, xkey = jax.random.split(key)

    B, C, H, W = 2, 100, 7, 7           # Pathogen board: 7x7, 100-channel tower
    raw = init_raw_params(pkey, C)
    x = jax.random.normal(xkey, (B, C, H, W), jnp.float32)

    cp = _round_up(C, LANE)             # 100 -> 128 lane-dense channels
    params = prepare_params(raw, cp)

    fwd = jax.jit(pathogen_residual_block)
    out = fwd(params, x)
    jax.block_until_ready(out)

    ref = reference_block(raw, x)

    assert out.shape == (B, C, H, W)
    assert bool(jnp.all(jnp.isfinite(out)))
    err = jnp.abs(out - ref)
    # bf16 weights / f32 accumulation vs f32 reference
    assert bool(jnp.all(err <= 0.25 + 0.05 * jnp.abs(ref))), float(jnp.max(err))
    assert float(jnp.mean(err)) <= 0.05, float(jnp.mean(err))
    print("KERNEL_OK")
</pallas_src>

<mosaic_0001>
module attributes {stable_mosaic.version = 11 : i64} {
  func.func @_resblock_kernel(%arg0: memref<176x128xf32, #tpu.memory_space<vmem>>, %arg1: memref<144x128xf32, #tpu.memory_space<vmem>>, %arg2: memref<144x1xf32, #tpu.memory_space<vmem>>, %arg3: memref<5x256x128xbf16, #tpu.memory_space<vmem>>, %arg4: memref<1x128xf32, #tpu.memory_space<vmem>>, %arg5: memref<5x256x128xbf16, #tpu.memory_space<any>>, %arg6: memref<1x128xf32, #tpu.memory_space<vmem>>, %arg7: memref<144x128xf32, #tpu.memory_space<vmem>>, %arg8: memref<176x128xf32, #tpu.memory_space<vmem>>, %arg9: memref<5x256x128xbf16, #tpu.memory_space<vmem>>, %arg10: memref<!tpu.dma_semaphore, #tpu.memory_space<semaphore_mem>>) attributes {dimension_semantics = [], scalar_prefetch = 0 : i64, scratch_operands = 3 : i64, tpu.core_type = #tpu.core_type<tc>} {
    tpu.enqueue_dma source(%arg5 : memref<5x256x128xbf16, #tpu.memory_space<any>>) target(%arg9 : memref<5x256x128xbf16, #tpu.memory_space<vmem>>) target_semaphore(%arg10 : memref<!tpu.dma_semaphore, #tpu.memory_space<semaphore_mem>>)
    %cst = arith.constant 0.000000e+00 : f32
    %0 = vector.broadcast %cst : f32 to vector<144x128xf32>
    %c7 = arith.constant 7 : index
    %c0 = arith.constant 0 : index
    %1 = vector.load %arg0[%c7, %c0] : memref<176x128xf32, #tpu.memory_space<vmem>>, vector<144x128xf32>
    %c8 = arith.constant 8 : index
    %c0_0 = arith.constant 0 : index
    %2 = vector.load %arg0[%c8, %c0_0] : memref<176x128xf32, #tpu.memory_space<vmem>>, vector<144x128xf32>
    %3 = tpu.concatenate %1, %2 in 1 : vector<144x128xf32>, vector<144x128xf32> -> vector<144x256xf32>
    %4 = arith.truncf %3 : vector<144x256xf32> to vector<144x256xbf16>
    %c0_1 = arith.constant 0 : index
    %c0_2 = arith.constant 0 : index
    %c0_3 = arith.constant 0 : index
    %5 = vector.load %arg3[%c0_1, %c0_2, %c0_3] : memref<5x256x128xbf16, #tpu.memory_space<vmem>>, vector<1x256x128xbf16>
    %6 = vector.shape_cast %5 : vector<1x256x128xbf16> to vector<256x128xbf16>
    %cst_4 = arith.constant dense<0.000000e+00> : vector<144x128xf32>
    %7 = tpu.matmul %4, %6, %cst_4 {dimension_numbers = #tpu.dot_dimension_numbers<[1], [0], [0], [1], [0, 0, 1, 1], [], []>} : vector<144x256xbf16>, vector<256x128xbf16>, vector<144x128xf32> -> vector<144x128xf32>
    %8 = arith.addf %0, %7 : vector<144x128xf32>
    %c9 = arith.constant 9 : index
    %c0_5 = arith.constant 0 : index
    %9 = vector.load %arg0[%c9, %c0_5] : memref<176x128xf32, #tpu.memory_space<vmem>>, vector<144x128xf32>
    %c15 = arith.constant 15 : index
    %c0_6 = arith.constant 0 : index
    %10 = vector.load %arg0[%c15, %c0_6] : memref<176x128xf32, #tpu.memory_space<vmem>>, vector<144x128xf32>
    %11 = tpu.concatenate %9, %10 in 1 : vector<144x128xf32>, vector<144x128xf32> -> vector<144x256xf32>
    %12 = arith.truncf %11 : vector<144x256xf32> to vector<144x256xbf16>
    %c1 = arith.constant 1 : index
    %c0_7 = arith.constant 0 : index
    %c0_8 = arith.constant 0 : index
    %13 = vector.load %arg3[%c1, %c0_7, %c0_8] : memref<5x256x128xbf16, #tpu.memory_space<vmem>>, vector<1x256x128xbf16>
    %14 = vector.shape_cast %13 : vector<1x256x128xbf16> to vector<256x128xbf16>
    %cst_9 = arith.constant dense<0.000000e+00> : vector<144x128xf32>
    %15 = tpu.matmul %12, %14, %cst_9 {dimension_numbers = #tpu.dot_dimension_numbers<[1], [0], [0], [1], [0, 0, 1, 1], [], []>} : vector<144x256xbf16>, vector<256x128xbf16>, vector<144x128xf32> -> vector<144x128xf32>
    %16 = arith.addf %8, %15 : vector<144x128xf32>
    %c16 = arith.constant 16 : index
    %c0_10 = arith.constant 0 : index
    %17 = vector.load %arg0[%c16, %c0_10] : memref<176x128xf32, #tpu.memory_space<vmem>>, vector<144x128xf32>
    %c17 = arith.constant 17 : index
    %c0_11 = arith.constant 0 : index
    %18 = vector.load %arg0[%c17, %c0_11] : memref<176x128xf32, #tpu.memory_space<vmem>>, vector<144x128xf32>
    %19 = tpu.concatenate %17, %18 in 1 : vector<144x128xf32>, vector<144x128xf32> -> vector<144x256xf32>
    %20 = arith.truncf %19 : vector<144x256xf32> to vector<144x256xbf16>
    %c2 = arith.constant 2 : index
    %c0_12 = arith.constant 0 : index
    %c0_13 = arith.constant 0 : index
    %21 = vector.load %arg3[%c2, %c0_12, %c0_13] : memref<5x256x128xbf16, #tpu.memory_space<vmem>>, vector<1x256x128xbf16>
    %22 = vector.shape_cast %21 : vector<1x256x128xbf16> to vector<256x128xbf16>
    %cst_14 = arith.constant dense<0.000000e+00> : vector<144x128xf32>
    %23 = tpu.matmul %20, %22, %cst_14 {dimension_numbers = #tpu.dot_dimension_numbers<[1], [0], [0], [1], [0, 0, 1, 1], [], []>} : vector<144x256xbf16>, vector<256x128xbf16>, vector<144x128xf32> -> vector<144x128xf32>
    %24 = arith.addf %16, %23 : vector<144x128xf32>
    %c23 = arith.constant 23 : index
    %c0_15 = arith.constant 0 : index
    %25 = vector.load %arg0[%c23, %c0_15] : memref<176x128xf32, #tpu.memory_space<vmem>>, vector<144x128xf32>
    %c24 = arith.constant 24 : index
    %c0_16 = arith.constant 0 : index
    %26 = vector.load %arg0[%c24, %c0_16] : memref<176x128xf32, #tpu.memory_space<vmem>>, vector<144x128xf32>
    %27 = tpu.concatenate %25, %26 in 1 : vector<144x128xf32>, vector<144x128xf32> -> vector<144x256xf32>
    %28 = arith.truncf %27 : vector<144x256xf32> to vector<144x256xbf16>
    %c3 = arith.constant 3 : index
    %c0_17 = arith.constant 0 : index
    %c0_18 = arith.constant 0 : index
    %29 = vector.load %arg3[%c3, %c0_17, %c0_18] : memref<5x256x128xbf16, #tpu.memory_space<vmem>>, vector<1x256x128xbf16>
    %30 = vector.shape_cast %29 : vector<1x256x128xbf16> to vector<256x128xbf16>
    %cst_19 = arith.constant dense<0.000000e+00> : vector<144x128xf32>
    %31 = tpu.matmul %28, %30, %cst_19 {dimension_numbers = #tpu.dot_dimension_numbers<[1], [0], [0], [1], [0, 0, 1, 1], [], []>} : vector<144x256xbf16>, vector<256x128xbf16>, vector<144x128xf32> -> vector<144x128xf32>
    %32 = arith.addf %24, %31 : vector<144x128xf32>
    %c25 = arith.constant 25 : index
    %c0_20 = arith.constant 0 : index
    %33 = vector.load %arg0[%c25, %c0_20] : memref<176x128xf32, #tpu.memory_space<vmem>>, vector<144x128xf32>
    %c25_21 = arith.constant 25 : index
    %c0_22 = arith.constant 0 : index
    %34 = vector.load %arg0[%c25_21, %c0_22] : memref<176x128xf32, #tpu.memory_space<vmem>>, vector<144x128xf32>
    %35 = tpu.concatenate %33, %34 in 1 : vector<144x128xf32>, vector<144x128xf32> -> vector<144x256xf32>
    %36 = arith.truncf %35 : vector<144x256xf32> to vector<144x256xbf16>
    %c4 = arith.constant 4 : index
    %c0_23 = arith.constant 0 : index
    %c0_24 = arith.constant 0 : index
    %37 = vector.load %arg3[%c4, %c0_23, %c0_24] : memref<5x256x128xbf16, #tpu.memory_space<vmem>>, vector<1x256x128xbf16>
    %38 = vector.shape_cast %37 : vector<1x256x128xbf16> to vector<256x128xbf16>
    %cst_25 = arith.constant dense<0.000000e+00> : vector<144x128xf32>
    %39 = tpu.matmul %36, %38, %cst_25 {dimension_numbers = #tpu.dot_dimension_numbers<[1], [0], [0], [1], [0, 0, 1, 1], [], []>} : vector<144x256xbf16>, vector<256x128xbf16>, vector<144x128xf32> -> vector<144x128xf32>
    %40 = arith.addf %32, %39 : vector<144x128xf32>
    %c0_26 = arith.constant 0 : index
    %c0_27 = arith.constant 0 : index
    %41 = vector.load %arg4[%c0_26, %c0_27] : memref<1x128xf32, #tpu.memory_space<vmem>>, vector<1x128xf32>
    %42 = vector.broadcast %41 : vector<1x128xf32> to vector<144x128xf32>
    %43 = arith.addf %40, %42 : vector<144x128xf32>
    %cst_28 = arith.constant 0.000000e+00 : f32
    %44 = vector.broadcast %cst_28 : f32 to vector<144x128xf32>
    %45 = arith.maximumf %43, %44 : vector<144x128xf32>
    %c0_29 = arith.constant 0 : index
    %c0_30 = arith.constant 0 : index
    %46 = vector.load %arg2[%c0_29, %c0_30] : memref<144x1xf32, #tpu.memory_space<vmem>>, vector<144x1xf32>
    %47 = vector.broadcast %46 : vector<144x1xf32> to vector<144x128xf32>
    %48 = arith.mulf %45, %47 : vector<144x128xf32>
    %cst_31 = arith.constant 0.000000e+00 : f32
    %49 = vector.broadcast %cst_31 : f32 to vector<16x128xf32>
    %c0_32 = arith.constant 0 : index
    %c0_33 = arith.constant 0 : index
    %50 = vector.load %arg8[%c0_32, %c0_33] : memref<176x128xf32, #tpu.memory_space<vmem>>, vector<16x128xf32>
    tpu.vector_store %arg8[%c0_32, %c0_33], %49 {strides = array<i32>} : memref<176x128xf32, #tpu.memory_space<vmem>>, vector<16x128xf32>,
    %cst_34 = arith.constant 0.000000e+00 : f32
    %51 = vector.broadcast %cst_34 : f32 to vector<16x128xf32>
    %c160 = arith.constant 160 : index
    %c0_35 = arith.constant 0 : index
    %52 = vector.load %arg8[%c160, %c0_35] : memref<176x128xf32, #tpu.memory_space<vmem>>, vector<16x128xf32>
    tpu.vector_store %arg8[%c160, %c0_35], %51 {strides = array<i32>} : memref<176x128xf32, #tpu.memory_space<vmem>>, vector<16x128xf32>,
    %c16_36 = arith.constant 16 : index
    %c0_37 = arith.constant 0 : index
    %53 = vector.load %arg8[%c16_36, %c0_37] : memref<176x128xf32, #tpu.memory_space<vmem>>, vector<144x128xf32>
    tpu.vector_store %arg8[%c16_36, %c0_37], %48 {strides = array<i32>} : memref<176x128xf32, #tpu.memory_space<vmem>>, vector<144x128xf32>,
    tpu.wait_dma2 semaphore(%arg10 : memref<!tpu.dma_semaphore, #tpu.memory_space<semaphore_mem>>) src(%arg5 : memref<5x256x128xbf16, #tpu.memory_space<any>>) dst(%arg9 : memref<5x256x128xbf16, #tpu.memory_space<vmem>>)
    %cst_38 = arith.constant 0.000000e+00 : f32
    %54 = vector.broadcast %cst_38 : f32 to vector<144x128xf32>
    %c7_39 = arith.constant 7 : index
    %c0_40 = arith.constant 0 : index
    %55 = vector.load %arg8[%c7_39, %c0_40] : memref<176x128xf32, #tpu.memory_space<vmem>>, vector<144x128xf32>
    %c8_41 = arith.constant 8 : index
    %c0_42 = arith.constant 0 : index
    %56 = vector.load %arg8[%c8_41, %c0_42] : memref<176x128xf32, #tpu.memory_space<vmem>>, vector<144x128xf32>
    %57 = tpu.concatenate %55, %56 in 1 : vector<144x128xf32>, vector<144x128xf32> -> vector<144x256xf32>
    %58 = arith.truncf %57 : vector<144x256xf32> to vector<144x256xbf16>
    %c0_43 = arith.constant 0 : index
    %c0_44 = arith.constant 0 : index
    %c0_45 = arith.constant 0 : index
    %59 = vector.load %arg9[%c0_43, %c0_44, %c0_45] : memref<5x256x128xbf16, #tpu.memory_space<vmem>>, vector<1x256x128xbf16>
    %60 = vector.shape_cast %59 : vector<1x256x128xbf16> to vector<256x128xbf16>
    %cst_46 = arith.constant dense<0.000000e+00> : vector<144x128xf32>
    %61 = tpu.matmul %58, %60, %cst_46 {dimension_numbers = #tpu.dot_dimension_numbers<[1], [0], [0], [1], [0, 0, 1, 1], [], []>} : vector<144x256xbf16>, vector<256x128xbf16>, vector<144x128xf32> -> vector<144x128xf32>
    %62 = arith.addf %54, %61 : vector<144x128xf32>
    %c9_47 = arith.constant 9 : index
    %c0_48 = arith.constant 0 : index
    %63 = vector.load %arg8[%c9_47, %c0_48] : memref<176x128xf32, #tpu.memory_space<vmem>>, vector<144x128xf32>
    %c15_49 = arith.constant 15 : index
    %c0_50 = arith.constant 0 : index
    %64 = vector.load %arg8[%c15_49, %c0_50] : memref<176x128xf32, #tpu.memory_space<vmem>>, vector<144x128xf32>
    %65 = tpu.concatenate %63, %64 in 1 : vector<144x128xf32>, vector<144x128xf32> -> vector<144x256xf32>
    %66 = arith.truncf %65 : vector<144x256xf32> to vector<144x256xbf16>
    %c1_51 = arith.constant 1 : index
    %c0_52 = arith.constant 0 : index
    %c0_53 = arith.constant 0 : index
    %67 = vector.load %arg9[%c1_51, %c0_52, %c0_53] : memref<5x256x128xbf16, #tpu.memory_space<vmem>>, vector<1x256x128xbf16>
    %68 = vector.shape_cast %67 : vector<1x256x128xbf16> to vector<256x128xbf16>
    %cst_54 = arith.constant dense<0.000000e+00> : vector<144x128xf32>
    %69 = tpu.matmul %66, %68, %cst_54 {dimension_numbers = #tpu.dot_dimension_numbers<[1], [0], [0], [1], [0, 0, 1, 1], [], []>} : vector<144x256xbf16>, vector<256x128xbf16>, vector<144x128xf32> -> vector<144x128xf32>
    %70 = arith.addf %62, %69 : vector<144x128xf32>
    %c16_55 = arith.constant 16 : index
    %c0_56 = arith.constant 0 : index
    %71 = vector.load %arg8[%c16_55, %c0_56] : memref<176x128xf32, #tpu.memory_space<vmem>>, vector<144x128xf32>
    %c17_57 = arith.constant 17 : index
    %c0_58 = arith.constant 0 : index
    %72 = vector.load %arg8[%c17_57, %c0_58] : memref<176x128xf32, #tpu.memory_space<vmem>>, vector<144x128xf32>
    %73 = tpu.concatenate %71, %72 in 1 : vector<144x128xf32>, vector<144x128xf32> -> vector<144x256xf32>
    %74 = arith.truncf %73 : vector<144x256xf32> to vector<144x256xbf16>
    %c2_59 = arith.constant 2 : index
    %c0_60 = arith.constant 0 : index
    %c0_61 = arith.constant 0 : index
    %75 = vector.load %arg9[%c2_59, %c0_60, %c0_61] : memref<5x256x128xbf16, #tpu.memory_space<vmem>>, vector<1x256x128xbf16>
    %76 = vector.shape_cast %75 : vector<1x256x128xbf16> to vector<256x128xbf16>
    %cst_62 = arith.constant dense<0.000000e+00> : vector<144x128xf32>
    %77 = tpu.matmul %74, %76, %cst_62 {dimension_numbers = #tpu.dot_dimension_numbers<[1], [0], [0], [1], [0, 0, 1, 1], [], []>} : vector<144x256xbf16>, vector<256x128xbf16>, vector<144x128xf32> -> vector<144x128xf32>
    %78 = arith.addf %70, %77 : vector<144x128xf32>
    %c23_63 = arith.constant 23 : index
    %c0_64 = arith.constant 0 : index
    %79 = vector.load %arg8[%c23_63, %c0_64] : memref<176x128xf32, #tpu.memory_space<vmem>>, vector<144x128xf32>
    %c24_65 = arith.constant 24 : index
    %c0_66 = arith.constant 0 : index
    %80 = vector.load %arg8[%c24_65, %c0_66] : memref<176x128xf32, #tpu.memory_space<vmem>>, vector<144x128xf32>
    %81 = tpu.concatenate %79, %80 in 1 : vector<144x128xf32>, vector<144x128xf32> -> vector<144x256xf32>
    %82 = arith.truncf %81 : vector<144x256xf32> to vector<144x256xbf16>
    %c3_67 = arith.constant 3 : index
    %c0_68 = arith.constant 0 : index
    %c0_69 = arith.constant 0 : index
    %83 = vector.load %arg9[%c3_67, %c0_68, %c0_69] : memref<5x256x128xbf16, #tpu.memory_space<vmem>>, vector<1x256x128xbf16>
    %84 = vector.shape_cast %83 : vector<1x256x128xbf16> to vector<256x128xbf16>
    %cst_70 = arith.constant dense<0.000000e+00> : vector<144x128xf32>
    %85 = tpu.matmul %82, %84, %cst_70 {dimension_numbers = #tpu.dot_dimension_numbers<[1], [0], [0], [1], [0, 0, 1, 1], [], []>} : vector<144x256xbf16>, vector<256x128xbf16>, vector<144x128xf32> -> vector<144x128xf32>
    %86 = arith.addf %78, %85 : vector<144x128xf32>
    %c25_71 = arith.constant 25 : index
    %c0_72 = arith.constant 0 : index
    %87 = vector.load %arg8[%c25_71, %c0_72] : memref<176x128xf32, #tpu.memory_space<vmem>>, vector<144x128xf32>
    %c25_73 = arith.constant 25 : index
    %c0_74 = arith.constant 0 : index
    %88 = vector.load %arg8[%c25_73, %c0_74] : memref<176x128xf32, #tpu.memory_space<vmem>>, vector<144x128xf32>
    %89 = tpu.concatenate %87, %88 in 1 : vector<144x128xf32>, vector<144x128xf32> -> vector<144x256xf32>
    %90 = arith.truncf %89 : vector<144x256xf32> to vector<144x256xbf16>
    %c4_75 = arith.constant 4 : index
    %c0_76 = arith.constant 0 : index
    %c0_77 = arith.constant 0 : index
    %91 = vector.load %arg9[%c4_75, %c0_76, %c0_77] : memref<5x256x128xbf16, #tpu.memory_space<vmem>>, vector<1x256x128xbf16>
    %92 = vector.shape_cast %91 : vector<1x256x128xbf16> to vector<256x128xbf16>
    %cst_78 = arith.constant dense<0.000000e+00> : vector<144x128xf32>
    %93 = tpu.matmul %90, %92, %cst_78 {dimension_numbers = #tpu.dot_dimension_numbers<[1], [0], [0], [1], [0, 0, 1, 1], [], []>} : vector<144x256xbf16>, vector<256x128xbf16>, vector<144x128xf32> -> vector<144x128xf32>
    %94 = arith.addf %86, %93 : vector<144x128xf32>
    %c0_79 = arith.constant 0 : index
    %c0_80 = arith.constant 0 : index
    %95 = vector.load %arg6[%c0_79, %c0_80] : memref<1x128xf32, #tpu.memory_space<vmem>>, vector<1x128xf32>
    %96 = vector.broadcast %95 : vector<1x128xf32> to vector<144x128xf32>
    %97 = arith.addf %94, %96 : vector<144x128xf32>
    %c0_81 = arith.constant 0 : index
    %c0_82 = arith.constant 0 : index
    %98 = vector.load %arg1[%c0_81, %c0_82] : memref<144x128xf32, #tpu.memory_space<vmem>>, vector<144x128xf32>
    %99 = arith.addf %97, %98 : vector<144x128xf32>
    %cst_83 = arith.constant 0.000000e+00 : f32
    %100 = vector.broadcast %cst_83 : f32 to vector<144x128xf32>
    %101 = arith.maximumf %99, %100 : vector<144x128xf32>
    %c0_84 = arith.constant 0 : index
    %c0_85 = arith.constant 0 : index
    %102 = vector.load %arg7[%c0_84, %c0_85] : memref<144x128xf32, #tpu.memory_space<vmem>>, vector<144x128xf32>
    tpu.vector_store %arg7[%c0_84, %c0_85], %101 {strides = array<i32>} : memref<144x128xf32, #tpu.memory_space<vmem>>, vector<144x128xf32>,
    return
  }
}

</mosaic_0001>

<llo_original>
// kernel: pathogen_residual_block.1
$region0: #{pathogen_residual_block.1}
  #allocation0 [shape = 'u32[]', space=smem, size = 0x4, offset = 0x4, fixed_abs, tag = 'smem constant byte address 0x4 - core index']
  #allocation1 [shape = 'u32[72,128]{1,0:T(1,128)}', space=vmem, size = 0x9000, scoped, tag = 'internal scratch']
  #allocation2 [shape = 'f32[176,128]{1,0:T(8,128)}', space=vmem, size = 0x16000, scoped, tag = 'scratch operand']
  #allocation3 [shape = 'bf16[5,256,128]{2,1,0:T(8,128)(2,1)}', space=vmem, size = 0x50000, scoped, tag = 'scratch operand']
  #allocation4 [shape = 's32[1]{0}', space=sflag, size = 0x4, scoped, tag = 'scratch operand']
  #allocation5 [shape = 's32[]', space=sflag, size = 0x4, offset = 0, fixed_abs, tag = 'sflag constant byte address 0x0 - dummy sync flag']
  #allocation6 [shape = 's32[]', space=sflag, size = 0x4, offset = 0, fixed_abs, tag = 'sflag constant byte address 0x0 - dummy sync flag']
  #allocation7 [shape = 'u32[]', space=smem, size = 0x4, offset = 0x44, fixed_abs, tag = 'smem constant byte address 0x44 - assertion arg 0']
  #allocation8 [shape = 'u32[]', space=smem, size = 0x4, offset = 0x48, fixed_abs, tag = 'smem constant byte address 0x48 - assertion arg 1']
  %s0 = inlined_call_operand.vmem [shape: f32[176,128], index: 0, kind: input, shape index: {}]
  %s1 = inlined_call_operand.vmem [shape: f32[144,128], index: 1, kind: input, shape index: {}]
  %s2 = inlined_call_operand.vmem [shape: f32[144,1], index: 2, kind: input, shape index: {}]
  %s3 = inlined_call_operand.vmem [shape: bf16[5,256,128], index: 3, kind: input, shape index: {}]
  %s4 = inlined_call_operand.vmem [shape: f32[1,128], index: 4, kind: input, shape index: {}]
  %s5 = inlined_call_operand.hbm [shape: bf16[5,256,128], index: 5, kind: input, shape index: {}]
  %s6 = inlined_call_operand.vmem [shape: f32[1,128], index: 6, kind: input, shape index: {}]
  %s7 = inlined_call_operand.vmem [shape: f32[144,128], index: 7, kind: output, shape index: {}]
  %s8 = sld [smem:[#allocation0]]
  $region38: #{pathogen_residual_block.1} parent=0
    _
  %s10 = ssub.s32 1, %s8
  %s11 = scalar_select 0, %s10, %s8
  // Predicated region
  $region2: #{pathogen_residual_block.1} parent=0 // pred_check
    _
  $region3: #{pathogen_residual_block.1} parent=0 // pred_check_branch
    %13 = sbr.rel (0) target = $region5
  $region4: #{pathogen_residual_block.1} parent=0 // pred_region
    _
  $region5: #{pathogen_residual_block.1} parent=0 // pred_fallthru
    _
  // Predicated region
  $region6: #{pathogen_residual_block.1} parent=0 // pred_check
    _
  $region7: #{pathogen_residual_block.1} parent=0 // pred_check_branch
    %15 = sbr.rel (0) target = $region9
  $region8: #{pathogen_residual_block.1} parent=0 // pred_region
    _
  $region9: #{pathogen_residual_block.1} parent=0 // pred_fallthru
    _
  // Predicated region
  $region10: #{pathogen_residual_block.1} parent=0 // pred_check
    _
  $region11: #{pathogen_residual_block.1} parent=0 // pred_check_branch
    %17 = sbr.rel (0) target = $region13
  $region12: #{pathogen_residual_block.1} parent=0 // pred_region
    _
  $region13: #{pathogen_residual_block.1} parent=0 // pred_fallthru
    _
  // Predicated region
  $region14: #{pathogen_residual_block.1} parent=0 // pred_check
    _
  $region15: #{pathogen_residual_block.1} parent=0 // pred_check_branch
    %19 = sbr.rel (0) target = $region17
  $region16: #{pathogen_residual_block.1} parent=0 // pred_region
    _
  $region17: #{pathogen_residual_block.1} parent=0 // pred_fallthru
    _
  // Predicated region
  $region18: #{pathogen_residual_block.1} parent=0 // pred_check
    _
  $region19: #{pathogen_residual_block.1} parent=0 // pred_check_branch
    %21 = sbr.rel (0) target = $region21
  $region20: #{pathogen_residual_block.1} parent=0 // pred_region
    _
  $region21: #{pathogen_residual_block.1} parent=0 // pred_fallthru
    _
  // Predicated region
  $region22: #{pathogen_residual_block.1} parent=0 // pred_check
    _
  $region23: #{pathogen_residual_block.1} parent=0 // pred_check_branch
    %23 = sbr.rel (0) target = $region25
  $region24: #{pathogen_residual_block.1} parent=0 // pred_region
    _
  $region25: #{pathogen_residual_block.1} parent=0 // pred_fallthru
    _
  // Predicated region
  $region26: #{pathogen_residual_block.1} parent=0 // pred_check
    _
  $region27: #{pathogen_residual_block.1} parent=0 // pred_check_branch
    %25 = sbr.rel target = $region29
  $region28: #{pathogen_residual_block.1} parent=0 // pred_region
    %26 = sst [smem:[#allocation7]] [#allocation6]
    %27 = sst [smem:[#allocation8]] [#allocation5]
  $region29: #{pathogen_residual_block.1} parent=0 // pred_fallthru
    _
  %29 = shalt.err (0)
  %s31 = sshll.u32 %s5, 4
  %s32 = int_to_ptr.hbm [resolvable:$true] %s31
  %s33 = sshll.u32 [#allocation3], 4
  %s34 = int_to_ptr.vmem [resolvable:$true] %s33
  %36 = dma.hbm_to_vmem [thread:$0]  %s32, 10240, %s34, [#allocation4]
  %v37 = vld [vmem:[%s0 + $0x7] sm:$0xff]
  %v38 = vld [vmem:[%s0 + $0xf] sm:$0xff]
  %v39 = vld [vmem:[%s0 + $0x17] sm:$0xff]
  %v40 = vld [vmem:[%s0 + $0x1f] sm:$0xff]
  %v41 = vld [vmem:[%s0 + $0x27] sm:$0xff]
  %v42 = vld [vmem:[%s0 + $0x2f] sm:$0xff]
  %v43 = vld [vmem:[%s0 + $0x37] sm:$0xff]
  %v44 = vld [vmem:[%s0 + $0x3f] sm:$0xff]
  %v45 = vld [vmem:[%s0 + $0x47] sm:$0xff]
  %v46 = vld [vmem:[%s0 + $0x4f] sm:$0xff]
  %v47 = vld [vmem:[%s0 + $0x57] sm:$0xff]
  %v48 = vld [vmem:[%s0 + $0x5f] sm:$0xff]
  %v49 = vld [vmem:[%s0 + $0x67] sm:$0xff]
  %v50 = vld [vmem:[%s0 + $0x6f] sm:$0xff]
  %v51 = vld [vmem:[%s0 + $0x77] sm:$0xff]
  %v52 = vld [vmem:[%s0 + $0x7f] sm:$0xff]
  %v53 = vld [vmem:[%s0 + $0x87] sm:$0xff]
  %v54 = vld [vmem:[%s0 + $0x8f] sm:$0xff]
  %v55 = vld [vmem:[%s0 + $0x8] sm:$0xff]
  %v56 = vld [vmem:[%s0 + $0x10] sm:$0xff]
  %v57 = vld [vmem:[%s0 + $0x18] sm:$0xff]
  %v58 = vld [vmem:[%s0 + $0x20] sm:$0xff]
  %v59 = vld [vmem:[%s0 + $0x28] sm:$0xff]
  %v60 = vld [vmem:[%s0 + $0x30] sm:$0xff]
  %v61 = vld [vmem:[%s0 + $0x38] sm:$0xff]
  %v62 = vld [vmem:[%s0 + $0x40] sm:$0xff]
  %v63 = vld [vmem:[%s0 + $0x48] sm:$0xff]
  %v64 = vld [vmem:[%s0 + $0x50] sm:$0xff]
  %v65 = vld [vmem:[%s0 + $0x58] sm:$0xff]
  %v66 = vld [vmem:[%s0 + $0x60] sm:$0xff]
  %v67 = vld [vmem:[%s0 + $0x68] sm:$0xff]
  %v68 = vld [vmem:[%s0 + $0x70] sm:$0xff]
  %v69 = vld [vmem:[%s0 + $0x78] sm:$0xff]
  %v70 = vld [vmem:[%s0 + $0x80] sm:$0xff]
  %v71 = vld [vmem:[%s0 + $0x88] sm:$0xff]
  %v72 = vld [vmem:[%s0 + $0x90] sm:$0xff]
  %v73 = vpack.c.bf16 %v38, %v37
  %v74 = vpack.c.bf16 %v56, %v55
  %v75 = vpack.c.bf16 %v40, %v39
  %v76 = vpack.c.bf16 %v58, %v57
  %v77 = vpack.c.bf16 %v42, %v41
  %v78 = vpack.c.bf16 %v60, %v59
  %v79 = vpack.c.bf16 %v44, %v43
  %v80 = vpack.c.bf16 %v62, %v61
  %v81 = vpack.c.bf16 %v46, %v45
  %v82 = vpack.c.bf16 %v64, %v63
  %v83 = vpack.c.bf16 %v48, %v47
  %v84 = vpack.c.bf16 %v66, %v65
  %v85 = vpack.c.bf16 %v50, %v49
  %v86 = vpack.c.bf16 %v68, %v67
  %v87 = vpack.c.bf16 %v52, %v51
  %v88 = vpack.c.bf16 %v70, %v69
  %v89 = vpack.c.bf16 %v54, %v53
  %v90 = vpack.c.bf16 %v72, %v71
  %v91 = vld [vmem:[%s3] sm:$0xf]
  %v92 = vld [vmem:[%s3 + $0x4] sm:$0xf]
  %v93 = vld [vmem:[%s3 + $0x8] sm:$0xf]
  %v94 = vld [vmem:[%s3 + $0xc] sm:$0xf]
  %v95 = vld [vmem:[%s3 + $0x10] sm:$0xf]
  %v96 = vld [vmem:[%s3 + $0x14] sm:$0xf]
  %v97 = vld [vmem:[%s3 + $0x18] sm:$0xf]
  %v98 = vld [vmem:[%s3 + $0x1c] sm:$0xf]
  %v99 = vld [vmem:[%s3 + $0x20] sm:$0xf]
  %v100 = vld [vmem:[%s3 + $0x24] sm:$0xf]
  %v101 = vld [vmem:[%s3 + $0x28] sm:$0xf]
  %v102 = vld [vmem:[%s3 + $0x2c] sm:$0xf]
  %v103 = vld [vmem:[%s3 + $0x30] sm:$0xf]
  %v104 = vld [vmem:[%s3 + $0x34] sm:$0xf]
  %v105 = vld [vmem:[%s3 + $0x38] sm:$0xf]
  %v106 = vld [vmem:[%s3 + $0x3c] sm:$0xf]
  %v107 = vld [vmem:[%s3 + $0x40] sm:$0xf]
  %v108 = vld [vmem:[%s3 + $0x44] sm:$0xf]
  %v109 = vld [vmem:[%s3 + $0x48] sm:$0xf]
  %v110 = vld [vmem:[%s3 + $0x4c] sm:$0xf]
  %v111 = vld [vmem:[%s3 + $0x50] sm:$0xf]
  %v112 = vld [vmem:[%s3 + $0x54] sm:$0xf]
  %v113 = vld [vmem:[%s3 + $0x58] sm:$0xf]
  %v114 = vld [vmem:[%s3 + $0x5c] sm:$0xf]
  %v115 = vld [vmem:[%s3 + $0x60] sm:$0xf]
  %v116 = vld [vmem:[%s3 + $0x64] sm:$0xf]
  %v117 = vld [vmem:[%s3 + $0x68] sm:$0xf]
  %v118 = vld [vmem:[%s3 + $0x6c] sm:$0xf]
  %v119 = vld [vmem:[%s3 + $0x70] sm:$0xf]
  %v120 = vld [vmem:[%s3 + $0x74] sm:$0xf]
  %v121 = vld [vmem:[%s3 + $0x78] sm:$0xf]
  %v122 = vld [vmem:[%s3 + $0x7c] sm:$0xf]
  %v123 = vld [vmem:[%s0 + $0x9] sm:$0xff]
  %v124 = vld [vmem:[%s0 + $0x11] sm:$0xff]
  %v125 = vld [vmem:[%s0 + $0x19] sm:$0xff]
  %v126 = vld [vmem:[%s0 + $0x21] sm:$0xff]
  %v127 = vld [vmem:[%s0 + $0x29] sm:$0xff]
  %v128 = vld [vmem:[%s0 + $0x31] sm:$0xff]
  %v129 = vld [vmem:[%s0 + $0x39] sm:$0xff]
  %v130 = vld [vmem:[%s0 + $0x41] sm:$0xff]
  %v131 = vld [vmem:[%s0 + $0x49] sm:$0xff]
  %v132 = vld [vmem:[%s0 + $0x51] sm:$0xff]
  %v133 = vld [vmem:[%s0 + $0x59] sm:$0xff]
  %v134 = vld [vmem:[%s0 + $0x61] sm:$0xff]
  %v135 = vld [vmem:[%s0 + $0x69] sm:$0xff]
  %v136 = vld [vmem:[%s0 + $0x71] sm:$0xff]
  %v137 = vld [vmem:[%s0 + $0x79] sm:$0xff]
  %v138 = vld [vmem:[%s0 + $0x81] sm:$0xff]
  %v139 = vld [vmem:[%s0 + $0x89] sm:$0xff]
  %v140 = vld [vmem:[%s0 + $0x91] sm:$0xff]
  %v141 = vld [vmem:[%s0 + $0x97] sm:$0xff]
  %v142 = vpack.c.bf16 %v124, %v123
  %v143 = vpack.c.bf16 %v39, %v38
  %v144 = vpack.c.bf16 %v126, %v125
  %v145 = vpack.c.bf16 %v41, %v40
  %v146 = vpack.c.bf16 %v128, %v127
  %v147 = vpack.c.bf16 %v43, %v42
  %v148 = vpack.c.bf16 %v130, %v129
  %v149 = vpack.c.bf16 %v45, %v44
  %v150 = vpack.c.bf16 %v132, %v131
  %v151 = vpack.c.bf16 %v47, %v46
  %v152 = vpack.c.bf16 %v134, %v133
  %v153 = vpack.c.bf16 %v49, %v48
  %v154 = vpack.c.bf16 %v136, %v135
  %v155 = vpack.c.bf16 %v51, %v50
  %v156 = vpack.c.bf16 %v138, %v137
  %v157 = vpack.c.bf16 %v53, %v52
  %v158 = vpack.c.bf16 %v140, %v139
  %v159 = vpack.c.bf16 %v141, %v54
  %s160 = scalar_lea.vmem %s3, 128
  %v161 = vld [vmem:[%s160] sm:$0xf]
  %v162 = vld [vmem:[%s160 + $0x4] sm:$0xf]
  %v163 = vld [vmem:[%s160 + $0x8] sm:$0xf]
  %v164 = vld [vmem:[%s160 + $0xc] sm:$0xf]
  %v165 = vld [vmem:[%s160 + $0x10] sm:$0xf]
  %v166 = vld [vmem:[%s160 + $0x14] sm:$0xf]
  %v167 = vld [vmem:[%s160 + $0x18] sm:$0xf]
  %v168 = vld [vmem:[%s160 + $0x1c] sm:$0xf]
  %v169 = vld [vmem:[%s160 + $0x20] sm:$0xf]
  %v170 = vld [vmem:[%s160 + $0x24] sm:$0xf]
  %v171 = vld [vmem:[%s160 + $0x28] sm:$0xf]
  %v172 = vld [vmem:[%s160 + $0x2c] sm:$0xf]
  %v173 = vld [vmem:[%s160 + $0x30] sm:$0xf]
  %v174 = vld [vmem:[%s160 + $0x34] sm:$0xf]
  %v175 = vld [vmem:[%s160 + $0x38] sm:$0xf]
  %v176 = vld [vmem:[%s160 + $0x3c] sm:$0xf]
  %v177 = vld [vmem:[%s160 + $0x40] sm:$0xf]
  %v178 = vld [vmem:[%s160 + $0x44] sm:$0xf]
  %v179 = vld [vmem:[%s160 + $0x48] sm:$0xf]
  %v180 = vld [vmem:[%s160 + $0x4c] sm:$0xf]
  %v181 = vld [vmem:[%s160 + $0x50] sm:$0xf]
  %v182 = vld [vmem:[%s160 + $0x54] sm:$0xf]
  %v183 = vld [vmem:[%s160 + $0x58] sm:$0xf]
  %v184 = vld [vmem:[%s160 + $0x5c] sm:$0xf]
  %v185 = vld [vmem:[%s160 + $0x60] sm:$0xf]
  %v186 = vld [vmem:[%s160 + $0x64] sm:$0xf]
  %v187 = vld [vmem:[%s160 + $0x68] sm:$0xf]
  %v188 = vld [vmem:[%s160 + $0x6c] sm:$0xf]
  %v189 = vld [vmem:[%s160 + $0x70] sm:$0xf]
  %v190 = vld [vmem:[%s160 + $0x74] sm:$0xf]
  %v191 = vld [vmem:[%s160 + $0x78] sm:$0xf]
  %v192 = vld [vmem:[%s160 + $0x7c] sm:$0xf]
  %v225 = vunpack.c.l.b16 %v161
  %v226 = vunpack.c.l.b16 %v162
  %v227 = vunpack.c.l.b16 %v163
  %v228 = vunpack.c.l.b16 %v164
  %v229 = vunpack.c.l.b16 %v165
  %v230 = vunpack.c.l.b16 %v166
  %v231 = vunpack.c.l.b16 %v167
  %v232 = vunpack.c.l.b16 %v168
  %v233 = vunpack.c.l.b16 %v169
  %v234 = vunpack.c.l.b16 %v170
  %v235 = vunpack.c.l.b16 %v171
  %v236 = vunpack.c.l.b16 %v172
  %v237 = vunpack.c.l.b16 %v173
  %v238 = vunpack.c.l.b16 %v174
  %v239 = vunpack.c.l.b16 %v175
  %v240 = vunpack.c.l.b16 %v176
  %v241 = vunpack.c.l.b16 %v177
  %v242 = vunpack.c.l.b16 %v178
  %v243 = vunpack.c.l.b16 %v179
  %v244 = vunpack.c.l.b16 %v180
  %v245 = vunpack.c.l.b16 %v181
  %v246 = vunpack.c.l.b16 %v182
  %v247 = vunpack.c.l.b16 %v183
  %v248 = vunpack.c.l.b16 %v184
  %v249 = vunpack.c.l.b16 %v185
  %v250 = vunpack.c.l.b16 %v186
  %v251 = vunpack.c.l.b16 %v187
  %v252 = vunpack.c.l.b16 %v188
  %v253 = vunpack.c.l.b16 %v189
  %v254 = vunpack.c.l.b16 %v190
  %v255 = vunpack.c.l.b16 %v191
  %v256 = vunpack.c.l.b16 %v192
  %v257 = vpack.c.b16 %v226, %v225
  %v258 = vpack.c.b16 %v228, %v227
  %v259 = vpack.c.b16 %v230, %v229
  %v260 = vpack.c.b16 %v232, %v231
  %v261 = vpack.c.b16 %v234, %v233
  %v262 = vpack.c.b16 %v236, %v235
  %v263 = vpack.c.b16 %v238, %v237
  %v264 = vpack.c.b16 %v240, %v239
  %v265 = vpack.c.b16 %v242, %v241
  %v266 = vpack.c.b16 %v244, %v243
  %v267 = vpack.c.b16 %v246, %v245
  %v268 = vpack.c.b16 %v248, %v247
  %v269 = vpack.c.b16 %v250, %v249
  %v270 = vpack.c.b16 %v252, %v251
  %v271 = vpack.c.b16 %v254, %v253
  %v272 = vpack.c.b16 %v256, %v255
  %289 = vmatpush.bf16.msra.mxu0 %v264
  %290 = vmatpush.bf16.msra.mxu0 %v263
  %291 = vmatpush.bf16.msra.mxu0 %v262
  %292 = vmatpush.bf16.msra.mxu0 %v261
  %293 = vmatpush.bf16.msra.mxu0 %v260
  %294 = vmatpush.bf16.msra.mxu0 %v259
  %295 = vmatpush.bf16.msra.mxu0 %v258
  %296 = vmatpush.bf16.msra.mxu0 %v257
  %297 = vmatmul.bf16.gmra.mxu0 %v142
  %v298 = vpop.f32.mrf.mxu0
  %v299 = vadd.f32 0.0, %v298
  %v300 = vpop.f32.mrf.mxu0
  %v301 = vadd.f32 0.0, %v300
  %302 = vmatmul.bf16.gmra.mxu0 %v144
  %v303 = vpop.f32.mrf.mxu0
  %v304 = vadd.f32 0.0, %v303
  %v305 = vpop.f32.mrf.mxu0
  %v306 = vadd.f32 0.0, %v305
  %307 = vmatmul.bf16.gmra.mxu0 %v146
  %v308 = vpop.f32.mrf.mxu0
  %v309 = vadd.f32 0.0, %v308
  %v310 = vpop.f32.mrf.mxu0
  %v311 = vadd.f32 0.0, %v310
  %312 = vmatmul.bf16.gmra.mxu0 %v148
  %v313 = vpop.f32.mrf.mxu0
  %v314 = vadd.f32 0.0, %v313
  %v315 = vpop.f32.mrf.mxu0
  %v316 = vadd.f32 0.0, %v315
  %317 = vmatmul.bf16.gmra.mxu0 %v150
  %v318 = vpop.f32.mrf.mxu0
  %v319 = vadd.f32 0.0, %v318
  %v320 = vpop.f32.mrf.mxu0
  %v321 = vadd.f32 0.0, %v320
  %322 = vmatmul.bf16.gmra.mxu0 %v152
  %v323 = vpop.f32.mrf.mxu0
  %v324 = vadd.f32 0.0, %v323
  %v325 = vpop.f32.mrf.mxu0
  %v326 = vadd.f32 0.0, %v325
  %327 = vmatmul.bf16.gmra.mxu0 %v154
  %v328 = vpop.f32.mrf.mxu0
  %v329 = vadd.f32 0.0, %v328
  %v330 = vpop.f32.mrf.mxu0
  %v331 = vadd.f32 0.0, %v330
  %332 = vmatmul.bf16.gmra.mxu0 %v156
  %v333 = vpop.f32.mrf.mxu0
  %v334 = vadd.f32 0.0, %v333
  %v335 = vpop.f32.mrf.mxu0
  %v336 = vadd.f32 0.0, %v335
  %337 = vmatmul.bf16.gmra.mxu0 %v158
  %v338 = vpop.f32.mrf.mxu0
  %v339 = vadd.f32 0.0, %v338
  %v340 = vpop.f32.mrf.mxu0
  %v341 = vadd.f32 0.0, %v340
  %342 = vdwg.mxu0
  %343 = vmatpush.bf16.msra.mxu0 %v272
  %344 = vmatpush.bf16.msra.mxu0 %v271
  %345 = vmatpush.bf16.msra.mxu0 %v270
  %346 = vmatpush.bf16.msra.mxu0 %v269
  %347 = vmatpush.bf16.msra.mxu0 %v268
  %348 = vmatpush.bf16.msra.mxu0 %v267
  %349 = vmatpush.bf16.msra.mxu0 %v266
  %350 = vmatpush.bf16.msra.mxu0 %v265
  %351 = vmatmul.bf16.gmra.mxu0 %v143
  %v352 = vpop.f32.mrf.mxu0
  %v353 = vadd.f32 %v299, %v352
  %v354 = vpop.f32.mrf.mxu0
  %v355 = vadd.f32 %v301, %v354
  %356 = vmatmul.bf16.gmra.mxu0 %v145
  %v357 = vpop.f32.mrf.mxu0
  %v358 = vadd.f32 %v304, %v357
  %v359 = vpop.f32.mrf.mxu0
  %v360 = vadd.f32 %v306, %v359
  %361 = vmatmul.bf16.gmra.mxu0 %v147
  %v362 = vpop.f32.mrf.mxu0
  %v363 = vadd.f32 %v309, %v362
  %v364 = vpop.f32.mrf.mxu0
  %v365 = vadd.f32 %v311, %v364
  %366 = vmatmul.bf16.gmra.mxu0 %v149
  %v367 = vpop.f32.mrf.mxu0
  %v368 = vadd.f32 %v314, %v367
  %v369 = vpop.f32.mrf.mxu0
  %v370 = vadd.f32 %v316, %v369
  %371 = vmatmul.bf16.gmra.mxu0 %v151
  %v372 = vpop.f32.mrf.mxu0
  %v373 = vadd.f32 %v319, %v372
  %v374 = vpop.f32.mrf.mxu0
  %v375 = vadd.f32 %v321, %v374
  %376 = vmatmul.bf16.gmra.mxu0 %v153
  %v377 = vpop.f32.mrf.mxu0
  %v378 = vadd.f32 %v324, %v377
  %v379 = vpop.f32.mrf.mxu0
  %v380 = vadd.f32 %v326, %v379
  %381 = vmatmul.bf16.gmra.mxu0 %v155
  %v382 = vpop.f32.mrf.mxu0
  %v383 = vadd.f32 %v329, %v382
  %v384 = vpop.f32.mrf.mxu0
  %v385 = vadd.f32 %v331, %v384
  %386 = vmatmul.bf16.gmra.mxu0 %v157
  %v387 = vpop.f32.mrf.mxu0
  %v388 = vadd.f32 %v334, %v387
  %v389 = vpop.f32.mrf.mxu0
  %v390 = vadd.f32 %v336, %v389
  %391 = vmatmul.bf16.gmra.mxu0 %v159
  %v392 = vpop.f32.mrf.mxu0
  %v393 = vadd.f32 %v339, %v392
  %v394 = vpop.f32.mrf.mxu0
  %v395 = vadd.f32 %v341, %v394
  %396 = vdwg.mxu0
  %v429 = vunpack.c.l.b16 %v91
  %v430 = vunpack.c.l.b16 %v92
  %v431 = vunpack.c.l.b16 %v93
  %v432 = vunpack.c.l.b16 %v94
  %v433 = vunpack.c.l.b16 %v95
  %v434 = vunpack.c.l.b16 %v96
  %v435 = vunpack.c.l.b16 %v97
  %v436 = vunpack.c.l.b16 %v98
  %v437 = vunpack.c.l.b16 %v99
  %v438 = vunpack.c.l.b16 %v100
  %v439 = vunpack.c.l.b16 %v101
  %v440 = vunpack.c.l.b16 %v102
  %v441 = vunpack.c.l.b16 %v103
  %v442 = vunpack.c.l.b16 %v104
  %v443 = vunpack.c.l.b16 %v105
  %v444 = vunpack.c.l.b16 %v106
  %v445 = vunpack.c.l.b16 %v107
  %v446 = vunpack.c.l.b16 %v108
  %v447 = vunpack.c.l.b16 %v109
  %v448 = vunpack.c.l.b16 %v110
  %v449 = vunpack.c.l.b16 %v111
  %v450 = vunpack.c.l.b16 %v112
  %v451 = vunpack.c.l.b16 %v113
  %v452 = vunpack.c.l.b16 %v114
  %v453 = vunpack.c.l.b16 %v115
  %v454 = vunpack.c.l.b16 %v116
  %v455 = vunpack.c.l.b16 %v117
  %v456 = vunpack.c.l.b16 %v118
  %v457 = vunpack.c.l.b16 %v119
  %v458 = vunpack.c.l.b16 %v120
  %v459 = vunpack.c.l.b16 %v121
  %v460 = vunpack.c.l.b16 %v122
  %v461 = vpack.c.b16 %v430, %v429
  %v462 = vpack.c.b16 %v432, %v431
  %v463 = vpack.c.b16 %v434, %v433
  %v464 = vpack.c.b16 %v436, %v435
  %v465 = vpack.c.b16 %v438, %v437
  %v466 = vpack.c.b16 %v440, %v439
  %v467 = vpack.c.b16 %v442, %v441
  %v468 = vpack.c.b16 %v444, %v443
  %v469 = vpack.c.b16 %v446, %v445
  %v470 = vpack.c.b16 %v448, %v447
  %v471 = vpack.c.b16 %v450, %v449
  %v472 = vpack.c.b16 %v452, %v451
  %v473 = vpack.c.b16 %v454, %v453
  %v474 = vpack.c.b16 %v456, %v455
  %v475 = vpack.c.b16 %v458, %v457
  %v476 = vpack.c.b16 %v460, %v459
  %493 = vmatpush.bf16.msra.mxu0 %v468
  %494 = vmatpush.bf16.msra.mxu0 %v467
  %495 = vmatpush.bf16.msra.mxu0 %v466
  %496 = vmatpush.bf16.msra.mxu0 %v465
  %497 = vmatpush.bf16.msra.mxu0 %v464
  %498 = vmatpush.bf16.msra.mxu0 %v463
  %499 = vmatpush.bf16.msra.mxu0 %v462
  %500 = vmatpush.bf16.msra.mxu0 %v461
  %501 = vmatmul.bf16.gmra.mxu0 %v73
  %v502 = vpop.f32.mrf.mxu0
  %v503 = vadd.f32 %v353, %v502
  %v504 = vpop.f32.mrf.mxu0
  %v505 = vadd.f32 %v355, %v504
  %506 = vmatmul.bf16.gmra.mxu0 %v75
  %v507 = vpop.f32.mrf.mxu0
  %v508 = vadd.f32 %v358, %v507
  %v509 = vpop.f32.mrf.mxu0
  %v510 = vadd.f32 %v360, %v509
  %511 = vmatmul.bf16.gmra.mxu0 %v77
  %v512 = vpop.f32.mrf.mxu0
  %v513 = vadd.f32 %v363, %v512
  %v514 = vpop.f32.mrf.mxu0
  %v515 = vadd.f32 %v365, %v514
  %516 = vmatmul.bf16.gmra.mxu0 %v79
  %v517 = vpop.f32.mrf.mxu0
  %v518 = vadd.f32 %v368, %v517
  %v519 = vpop.f32.mrf.mxu0
  %v520 = vadd.f32 %v370, %v519
  %521 = vmatmul.bf16.gmra.mxu0 %v81
  %v522 = vpop.f32.mrf.mxu0
  %v523 = vadd.f32 %v373, %v522
  %v524 = vpop.f32.mrf.mxu0
  %v525 = vadd.f32 %v375, %v524
  %526 = vmatmul.bf16.gmra.mxu0 %v83
  %v527 = vpop.f32.mrf.mxu0
  %v528 = vadd.f32 %v378, %v527
  %v529 = vpop.f32.mrf.mxu0
  %v530 = vadd.f32 %v380, %v529
  %531 = vmatmul.bf16.gmra.mxu0 %v85
  %v532 = vpop.f32.mrf.mxu0
  %v533 = vadd.f32 %v383, %v532
  %v534 = vpop.f32.mrf.mxu0
  %v535 = vadd.f32 %v385, %v534
  %536 = vmatmul.bf16.gmra.mxu0 %v87
  %v537 = vpop.f32.mrf.mxu0
  %v538 = vadd.f32 %v388, %v537
  %v539 = vpop.f32.mrf.mxu0
  %v540 = vadd.f32 %v390, %v539
  %541 = vmatmul.bf16.gmra.mxu0 %v89
  %v542 = vpop.f32.mrf.mxu0
  %v543 = vadd.f32 %v393, %v542
  %v544 = vpop.f32.mrf.mxu0
  %v545 = vadd.f32 %v395, %v544
  %546 = vdwg.mxu0
  %547 = vmatpush.bf16.msra.mxu0 %v476
  %548 = vmatpush.bf16.msra.mxu0 %v475
  %549 = vmatpush.bf16.msra.mxu0 %v474
  %550 = vmatpush.bf16.msra.mxu0 %v473
  %551 = vmatpush.bf16.msra.mxu0 %v472
  %552 = vmatpush.bf16.msra.mxu0 %v471
  %553 = vmatpush.bf16.msra.mxu0 %v470
  %554 = vmatpush.bf16.msra.mxu0 %v469
  %555 = vmatmul.bf16.gmra.mxu0 %v74
  %v556 = vpop.f32.mrf.mxu0
  %v557 = vadd.f32 %v503, %v556
  %v558 = vpop.f32.mrf.mxu0
  %v559 = vadd.f32 %v505, %v558
  %560 = vmatmul.bf16.gmra.mxu0 %v76
  %v561 = vpop.f32.mrf.mxu0
  %v562 = vadd.f32 %v508, %v561
  %v563 = vpop.f32.mrf.mxu0
  %v564 = vadd.f32 %v510, %v563
  %565 = vmatmul.bf16.gmra.mxu0 %v78
  %v566 = vpop.f32.mrf.mxu0
  %v567 = vadd.f32 %v513, %v566
  %v568 = vpop.f32.mrf.mxu0
  %v569 = vadd.f32 %v515, %v568
  %570 = vmatmul.bf16.gmra.mxu0 %v80
  %v571 = vpop.f32.mrf.mxu0
  %v572 = vadd.f32 %v518, %v571
  %v573 = vpop.f32.mrf.mxu0
  %v574 = vadd.f32 %v520, %v573
  %575 = vmatmul.bf16.gmra.mxu0 %v82
  %v576 = vpop.f32.mrf.mxu0
  %v577 = vadd.f32 %v523, %v576
  %v578 = vpop.f32.mrf.mxu0
  %v579 = vadd.f32 %v525, %v578
  %580 = vmatmul.bf16.gmra.mxu0 %v84
  %v581 = vpop.f32.mrf.mxu0
  %v582 = vadd.f32 %v528, %v581
  %v583 = vpop.f32.mrf.mxu0
  %v584 = vadd.f32 %v530, %v583
  %585 = vmatmul.bf16.gmra.mxu0 %v86
  %v586 = vpop.f32.mrf.mxu0
  %v587 = vadd.f32 %v533, %v586
  %v588 = vpop.f32.mrf.mxu0
  %v589 = vadd.f32 %v535, %v588
  %590 = vmatmul.bf16.gmra.mxu0 %v88
  %v591 = vpop.f32.mrf.mxu0
  %v592 = vadd.f32 %v538, %v591
  %v593 = vpop.f32.mrf.mxu0
  %v594 = vadd.f32 %v540, %v593
  %595 = vmatmul.bf16.gmra.mxu0 %v90
  %v596 = vpop.f32.mrf.mxu0
  %v597 = vadd.f32 %v543, %v596
  %v598 = vpop.f32.mrf.mxu0
  %v599 = vadd.f32 %v545, %v598
  %600 = vdwg.mxu0
  %v601 = vld [vmem:[%s0 + $0x10] sm:$0xff]
  %v602 = vld [vmem:[%s0 + $0x18] sm:$0xff]
  %v603 = vld [vmem:[%s0 + $0x20] sm:$0xff]
  %v604 = vld [vmem:[%s0 + $0x28] sm:$0xff]
  %v605 = vld [vmem:[%s0 + $0x30] sm:$0xff]
  %v606 = vld [vmem:[%s0 + $0x38] sm:$0xff]
  %v607 = vld [vmem:[%s0 + $0x40] sm:$0xff]
  %v608 = vld [vmem:[%s0 + $0x48] sm:$0xff]
  %v609 = vld [vmem:[%s0 + $0x50] sm:$0xff]
  %v610 = vld [vmem:[%s0 + $0x58] sm:$0xff]
  %v611 = vld [vmem:[%s0 + $0x60] sm:$0xff]
  %v612 = vld [vmem:[%s0 + $0x68] sm:$0xff]
  %v613 = vld [vmem:[%s0 + $0x70] sm:$0xff]
  %v614 = vld [vmem:[%s0 + $0x78] sm:$0xff]
  %v615 = vld [vmem:[%s0 + $0x80] sm:$0xff]
  %v616 = vld [vmem:[%s0 + $0x88] sm:$0xff]
  %v617 = vld [vmem:[%s0 + $0x90] sm:$0xff]
  %v618 = vld [vmem:[%s0 + $0x98] sm:$0xff]
  %v619 = vld [vmem:[%s0 + $0x11] sm:$0xff]
  %v620 = vld [vmem:[%s0 + $0x19] sm:$0xff]
  %v621 = vld [vmem:[%s0 + $0x21] sm:$0xff]
  %v622 = vld [vmem:[%s0 + $0x29] sm:$0xff]
  %v623 = vld [vmem:[%s0 + $0x31] sm:$0xff]
  %v624 = vld [vmem:[%s0 + $0x39] sm:$0xff]
  %v625 = vld [vmem:[%s0 + $0x41] sm:$0xff]
  %v626 = vld [vmem:[%s0 + $0x49] sm:$0xff]
  %v627 = vld [vmem:[%s0 + $0x51] sm:$0xff]
  %v628 = vld [vmem:[%s0 + $0x59] sm:$0xff]
  %v629 = vld [vmem:[%s0 + $0x61] sm:$0xff]
  %v630 = vld [vmem:[%s0 + $0x69] sm:$0xff]
  %v631 = vld [vmem:[%s0 + $0x71] sm:$0xff]
  %v632 = vld [vmem:[%s0 + $0x79] sm:$0xff]
  %v633 = vld [vmem:[%s0 + $0x81] sm:$0xff]
  %v634 = vld [vmem:[%s0 + $0x89] sm:$0xff]
  %v635 = vld [vmem:[%s0 + $0x91] sm:$0xff]
  %v636 = vld [vmem:[%s0 + $0x99] sm:$0xff]
  %v637 = vpack.c.bf16 %v602, %v601
  %v638 = vpack.c.bf16 %v620, %v619
  %v639 = vpack.c.bf16 %v604, %v603
  %v640 = vpack.c.bf16 %v622, %v621
  %v641 = vpack.c.bf16 %v606, %v605
  %v642 = vpack.c.bf16 %v624, %v623
  %v643 = vpack.c.bf16 %v608, %v607
  %v644 = vpack.c.bf16 %v626, %v625
  %v645 = vpack.c.bf16 %v610, %v609
  %v646 = vpack.c.bf16 %v628, %v627
  %v647 = vpack.c.bf16 %v612, %v611
  %v648 = vpack.c.bf16 %v630, %v629
  %v649 = vpack.c.bf16 %v614, %v613
  %v650 = vpack.c.bf16 %v632, %v631
  %v651 = vpack.c.bf16 %v616, %v615
  %v652 = vpack.c.bf16 %v634, %v633
  %v653 = vpack.c.bf16 %v618, %v617
  %v654 = vpack.c.bf16 %v636, %v635
  %s655 = scalar_lea.vmem %s3, 256
  %v656 = vld [vmem:[%s655] sm:$0xf]
  %v657 = vld [vmem:[%s655 + $0x4] sm:$0xf]
  %v658 = vld [vmem:[%s655 + $0x8] sm:$0xf]
  %v659 = vld [vmem:[%s655 + $0xc] sm:$0xf]
  %v660 = vld [vmem:[%s655 + $0x10] sm:$0xf]
  %v661 = vld [vmem:[%s655 + $0x14] sm:$0xf]
  %v662 = vld [vmem:[%s655 + $0x18] sm:$0xf]
  %v663 = vld [vmem:[%s655 + $0x1c] sm:$0xf]
  %v664 = vld [vmem:[%s655 + $0x20] sm:$0xf]
  %v665 = vld [vmem:[%s655 + $0x24] sm:$0xf]
  %v666 = vld [vmem:[%s655 + $0x28] sm:$0xf]
  %v667 = vld [vmem:[%s655 + $0x2c] sm:$0xf]
  %v668 = vld [vmem:[%s655 + $0x30] sm:$0xf]
  %v669 = vld [vmem:[%s655 + $0x34] sm:$0xf]
  %v670 = vld [vmem:[%s655 + $0x38] sm:$0xf]
  %v671 = vld [vmem:[%s655 + $0x3c] sm:$0xf]
  %v672 = vld [vmem:[%s655 + $0x40] sm:$0xf]
  %v673 = vld [vmem:[%s655 + $0x44] sm:$0xf]
  %v674 = vld [vmem:[%s655 + $0x48] sm:$0xf]
  %v675 = vld [vmem:[%s655 + $0x4c] sm:$0xf]
  %v676 = vld [vmem:[%s655 + $0x50] sm:$0xf]
  %v677 = vld [vmem:[%s655 + $0x54] sm:$0xf]
  %v678 = vld [vmem:[%s655 + $0x58] sm:$0xf]
  %v679 = vld [vmem:[%s655 + $0x5c] sm:$0xf]
  %v680 = vld [vmem:[%s655 + $0x60] sm:$0xf]
  %v681 = vld [vmem:[%s655 + $0x64] sm:$0xf]
  %v682 = vld [vmem:[%s655 + $0x68] sm:$0xf]
  %v683 = vld [vmem:[%s655 + $0x6c] sm:$0xf]
  %v684 = vld [vmem:[%s655 + $0x70] sm:$0xf]
  %v685 = vld [vmem:[%s655 + $0x74] sm:$0xf]
  %v686 = vld [vmem:[%s655 + $0x78] sm:$0xf]
  %v687 = vld [vmem:[%s655 + $0x7c] sm:$0xf]
  %v720 = vunpack.c.l.b16 %v656
  %v721 = vunpack.c.l.b16 %v657
  %v722 = vunpack.c.l.b16 %v658
  %v723 = vunpack.c.l.b16 %v659
  %v724 = vunpack.c.l.b16 %v660
  %v725 = vunpack.c.l.b16 %v661
  %v726 = vunpack.c.l.b16 %v662
  %v727 = vunpack.c.l.b16 %v663
  %v728 = vunpack.c.l.b16 %v664
  %v729 = vunpack.c.l.b16 %v665
  %v730 = vunpack.c.l.b16 %v666
  %v731 = vunpack.c.l.b16 %v667
  %v732 = vunpack.c.l.b16 %v668
  %v733 = vunpack.c.l.b16 %v669
  %v734 = vunpack.c.l.b16 %v670
  %v735 = vunpack.c.l.b16 %v671
  %v736 = vunpack.c.l.b16 %v672
  %v737 = vunpack.c.l.b16 %v673
  %v738 = vunpack.c.l.b16 %v674
  %v739 = vunpack.c.l.b16 %v675
  %v740 = vunpack.c.l.b16 %v676
  %v741 = vunpack.c.l.b16 %v677
  %v742 = vunpack.c.l.b16 %v678
  %v743 = vunpack.c.l.b16 %v679
  %v744 = vunpack.c.l.b16 %v680
  %v745 = vunpack.c.l.b16 %v681
  %v746 = vunpack.c.l.b16 %v682
  %v747 = vunpack.c.l.b16 %v683
  %v748 = vunpack.c.l.b16 %v684
  %v749 = vunpack.c.l.b16 %v685
  %v750 = vunpack.c.l.b16 %v686
  %v751 = vunpack.c.l.b16 %v687
  %v752 = vpack.c.b16 %v721, %v720
  %v753 = vpack.c.b16 %v723, %v722
  %v754 = vpack.c.b16 %v725, %v724
  %v755 = vpack.c.b16 %v727, %v726
  %v756 = vpack.c.b16 %v729, %v728
  %v757 = vpack.c.b16 %v731, %v730
  %v758 = vpack.c.b16 %v733, %v732
  %v759 = vpack.c.b16 %v735, %v734
  %v760 = vpack.c.b16 %v737, %v736
  %v761 = vpack.c.b16 %v739, %v738
  %v762 = vpack.c.b16 %v741, %v740
  %v763 = vpack.c.b16 %v743, %v742
  %v764 = vpack.c.b16 %v745, %v744
  %v765 = vpack.c.b16 %v747, %v746
  %v766 = vpack.c.b16 %v749, %v748
  %v767 = vpack.c.b16 %v751, %v750
  %784 = vmatpush.bf16.msra.mxu0 %v759
  %785 = vmatpush.bf16.msra.mxu0 %v758
  %786 = vmatpush.bf16.msra.mxu0 %v757
  %787 = vmatpush.bf16.msra.mxu0 %v756
  %788 = vmatpush.bf16.msra.mxu0 %v755
  %789 = vmatpush.bf16.msra.mxu0 %v754
  %790 = vmatpush.bf16.msra.mxu0 %v753
  %791 = vmatpush.bf16.msra.mxu0 %v752
  %792 = vmatmul.bf16.gmra.mxu0 %v637
  %v793 = vpop.f32.mrf.mxu0
  %v794 = vadd.f32 0.0, %v793
  %v795 = vpop.f32.mrf.mxu0
  %v796 = vadd.f32 0.0, %v795
  %797 = vmatmul.bf16.gmra.mxu0 %v639
  %v798 = vpop.f32.mrf.mxu0
  %v799 = vadd.f32 0.0, %v798
  %v800 = vpop.f32.mrf.mxu0
  %v801 = vadd.f32 0.0, %v800
  %802 = vmatmul.bf16.gmra.mxu0 %v641
  %v803 = vpop.f32.mrf.mxu0
  %v804 = vadd.f32 0.0, %v803
  %v805 = vpop.f32.mrf.mxu0
  %v806 = vadd.f32 0.0, %v805
  %807 = vmatmul.bf16.gmra.mxu0 %v643
  %v808 = vpop.f32.mrf.mxu0
  %v809 = vadd.f32 0.0, %v808
  %v810 = vpop.f32.mrf.mxu0
  %v811 = vadd.f32 0.0, %v810
  %812 = vmatmul.bf16.gmra.mxu0 %v645
  %v813 = vpop.f32.mrf.mxu0
  %v814 = vadd.f32 0.0, %v813
  %v815 = vpop.f32.mrf.mxu0
  %v816 = vadd.f32 0.0, %v815
  %817 = vmatmul.bf16.gmra.mxu0 %v647
  %v818 = vpop.f32.mrf.mxu0
  %v819 = vadd.f32 0.0, %v818
  %v820 = vpop.f32.mrf.mxu0
  %v821 = vadd.f32 0.0, %v820
  %822 = vmatmul.bf16.gmra.mxu0 %v649
  %v823 = vpop.f32.mrf.mxu0
  %v824 = vadd.f32 0.0, %v823
  %v825 = vpop.f32.mrf.mxu0
  %v826 = vadd.f32 0.0, %v825
  %827 = vmatmul.bf16.gmra.mxu0 %v651
  %v828 = vpop.f32.mrf.mxu0
  %v829 = vadd.f32 0.0, %v828
  %v830 = vpop.f32.mrf.mxu0
  %v831 = vadd.f32 0.0, %v830
  %832 = vmatmul.bf16.gmra.mxu0 %v653
  %v833 = vpop.f32.mrf.mxu0
  %v834 = vadd.f32 0.0, %v833
  %v835 = vpop.f32.mrf.mxu0
  %v836 = vadd.f32 0.0, %v835
  %837 = vdwg.mxu0
  %838 = vmatpush.bf16.msra.mxu0 %v767
  %839 = vmatpush.bf16.msra.mxu0 %v766
  %840 = vmatpush.bf16.msra.mxu0 %v765
  %841 = vmatpush.bf16.msra.mxu0 %v764
  %842 = vmatpush.bf16.msra.mxu0 %v763
  %843 = vmatpush.bf16.msra.mxu0 %v762
  %844 = vmatpush.bf16.msra.mxu0 %v761
  %845 = vmatpush.bf16.msra.mxu0 %v760
  %846 = vmatmul.bf16.gmra.mxu0 %v638
  %v847 = vpop.f32.mrf.mxu0
  %v848 = vadd.f32 %v794, %v847
  %v849 = vpop.f32.mrf.mxu0
  %v850 = vadd.f32 %v796, %v849
  %851 = vmatmul.bf16.gmra.mxu0 %v640
  %v852 = vpop.f32.mrf.mxu0
  %v853 = vadd.f32 %v799, %v852
  %v854 = vpop.f32.mrf.mxu0
  %v855 = vadd.f32 %v801, %v854
  %856 = vmatmul.bf16.gmra.mxu0 %v642
  %v857 = vpop.f32.mrf.mxu0
  %v858 = vadd.f32 %v804, %v857
  %v859 = vpop.f32.mrf.mxu0
  %v860 = vadd.f32 %v806, %v859
  %861 = vmatmul.bf16.gmra.mxu0 %v644
  %v862 = vpop.f32.mrf.mxu0
  %v863 = vadd.f32 %v809, %v862
  %v864 = vpop.f32.mrf.mxu0
  %v865 = vadd.f32 %v811, %v864
  %866 = vmatmul.bf16.gmra.mxu0 %v646
  %v867 = vpop.f32.mrf.mxu0
  %v868 = vadd.f32 %v814, %v867
  %v869 = vpop.f32.mrf.mxu0
  %v870 = vadd.f32 %v816, %v869
  %871 = vmatmul.bf16.gmra.mxu0 %v648
  %v872 = vpop.f32.mrf.mxu0
  %v873 = vadd.f32 %v819, %v872
  %v874 = vpop.f32.mrf.mxu0
  %v875 = vadd.f32 %v821, %v874
  %876 = vmatmul.bf16.gmra.mxu0 %v650
  %v877 = vpop.f32.mrf.mxu0
  %v878 = vadd.f32 %v824, %v877
  %v879 = vpop.f32.mrf.mxu0
  %v880 = vadd.f32 %v826, %v879
  %881 = vmatmul.bf16.gmra.mxu0 %v652
  %v882 = vpop.f32.mrf.mxu0
  %v883 = vadd.f32 %v829, %v882
  %v884 = vpop.f32.mrf.mxu0
  %v885 = vadd.f32 %v831, %v884
  %886 = vmatmul.bf16.gmra.mxu0 %v654
  %v887 = vpop.f32.mrf.mxu0
  %v888 = vadd.f32 %v834, %v887
  %v889 = vpop.f32.mrf.mxu0
  %v890 = vadd.f32 %v836, %v889
  %891 = vdwg.mxu0
  %v892 = vadd.f32 %v557, %v848
  %v893 = vadd.f32 %v559, %v850
  %v894 = vadd.f32 %v562, %v853
  %v895 = vadd.f32 %v564, %v855
  %v896 = vadd.f32 %v567, %v858
  %v897 = vadd.f32 %v569, %v860
  %v898 = vadd.f32 %v572, %v863
  %v899 = vadd.f32 %v574, %v865
  %v900 = vadd.f32 %v577, %v868
  %v901 = vadd.f32 %v579, %v870
  %v902 = vadd.f32 %v582, %v873
  %v903 = vadd.f32 %v584, %v875
  %v904 = vadd.f32 %v587, %v878
  %v905 = vadd.f32 %v589, %v880
  %v906 = vadd.f32 %v592, %v883
  %v907 = vadd.f32 %v594, %v885
  %v908 = vadd.f32 %v597, %v888
  %v909 = vadd.f32 %v599, %v890
  %v910 = vld [vmem:[%s0 + $0x17] sm:$0xff]
  %v911 = vld [vmem:[%s0 + $0x1f] sm:$0xff]
  %v912 = vld [vmem:[%s0 + $0x27] sm:$0xff]
  %v913 = vld [vmem:[%s0 + $0x2f] sm:$0xff]
  %v914 = vld [vmem:[%s0 + $0x37] sm:$0xff]
  %v915 = vld [vmem:[%s0 + $0x3f] sm:$0xff]
  %v916 = vld [vmem:[%s0 + $0x47] sm:$0xff]
  %v917 = vld [vmem:[%s0 + $0x4f] sm:$0xff]
  %v918 = vld [vmem:[%s0 + $0x57] sm:$0xff]
  %v919 = vld [vmem:[%s0 + $0x5f] sm:$0xff]
  %v920 = vld [vmem:[%s0 + $0x67] sm:$0xff]
  %v921 = vld [vmem:[%s0 + $0x6f] sm:$0xff]
  %v922 = vld [vmem:[%s0 + $0x77] sm:$0xff]
  %v923 = vld [vmem:[%s0 + $0x7f] sm:$0xff]
  %v924 = vld [vmem:[%s0 + $0x87] sm:$0xff]
  %v925 = vld [vmem:[%s0 + $0x8f] sm:$0xff]
  %v926 = vld [vmem:[%s0 + $0x97] sm:$0xff]
  %v927 = vld [vmem:[%s0 + $0x9f] sm:$0xff]
  %v928 = vld [vmem:[%s0 + $0x18] sm:$0xff]
  %v929 = vld [vmem:[%s0 + $0x20] sm:$0xff]
  %v930 = vld [vmem:[%s0 + $0x28] sm:$0xff]
  %v931 = vld [vmem:[%s0 + $0x30] sm:$0xff]
  %v932 = vld [vmem:[%s0 + $0x38] sm:$0xff]
  %v933 = vld [vmem:[%s0 + $0x40] sm:$0xff]
  %v934 = vld [vmem:[%s0 + $0x48] sm:$0xff]
  %v935 = vld [vmem:[%s0 + $0x50] sm:$0xff]
  %v936 = vld [vmem:[%s0 + $0x58] sm:$0xff]
  %v937 = vld [vmem:[%s0 + $0x60] sm:$0xff]
  %v938 = vld [vmem:[%s0 + $0x68] sm:$0xff]
  %v939 = vld [vmem:[%s0 + $0x70] sm:$0xff]
  %v940 = vld [vmem:[%s0 + $0x78] sm:$0xff]
  %v941 = vld [vmem:[%s0 + $0x80] sm:$0xff]
  %v942 = vld [vmem:[%s0 + $0x88] sm:$0xff]
  %v943 = vld [vmem:[%s0 + $0x90] sm:$0xff]
  %v944 = vld [vmem:[%s0 + $0x98] sm:$0xff]
  %v945 = vld [vmem:[%s0 + $0xa0] sm:$0xff]
  %v946 = vpack.c.bf16 %v911, %v910
  %v947 = vpack.c.bf16 %v929, %v928
  %v948 = vpack.c.bf16 %v913, %v912
  %v949 = vpack.c.bf16 %v931, %v930
  %v950 = vpack.c.bf16 %v915, %v914
  %v951 = vpack.c.bf16 %v933, %v932
  %v952 = vpack.c.bf16 %v917, %v916
  %v953 = vpack.c.bf16 %v935, %v934
  %v954 = vpack.c.bf16 %v919, %v918
  %v955 = vpack.c.bf16 %v937, %v936
  %v956 = vpack.c.bf16 %v921, %v920
  %v957 = vpack.c.bf16 %v939, %v938
  %v958 = vpack.c.bf16 %v923, %v922
  %v959 = vpack.c.bf16 %v941, %v940
  %v960 = vpack.c.bf16 %v925, %v924
  %v961 = vpack.c.bf16 %v943, %v942
  %v962 = vpack.c.bf16 %v927, %v926
  %v963 = vpack.c.bf16 %v945, %v944
  %s964 = scalar_lea.vmem %s3, 384
  %v965 = vld [vmem:[%s964] sm:$0xf]
  %v966 = vld [vmem:[%s964 + $0x4] sm:$0xf]
  %v967 = vld [vmem:[%s964 + $0x8] sm:$0xf]
  %v968 = vld [vmem:[%s964 + $0xc] sm:$0xf]
  %v969 = vld [vmem:[%s964 + $0x10] sm:$0xf]
  %v970 = vld [vmem:[%s964 + $0x14] sm:$0xf]
  %v971 = vld [vmem:[%s964 + $0x18] sm:$0xf]
  %v972 = vld [vmem:[%s964 + $0x1c] sm:$0xf]
  %v973 = vld [vmem:[%s964 + $0x20] sm:$0xf]
  %v974 = vld [vmem:[%s964 + $0x24] sm:$0xf]
  %v975 = vld [vmem:[%s964 + $0x28] sm:$0xf]
  %v976 = vld [vmem:[%s964 + $0x2c] sm:$0xf]
  %v977 = vld [vmem:[%s964 + $0x30] sm:$0xf]
  %v978 = vld [vmem:[%s964 + $0x34] sm:$0xf]
  %v979 = vld [vmem:[%s964 + $0x38] sm:$0xf]
  %v980 = vld [vmem:[%s964 + $0x3c] sm:$0xf]
  %v981 = vld [vmem:[%s964 + $0x40] sm:$0xf]
  %v982 = vld [vmem:[%s964 + $0x44] sm:$0xf]
  %v983 = vld [vmem:[%s964 + $0x48] sm:$0xf]
  %v984 = vld [vmem:[%s964 + $0x4c] sm:$0xf]
  %v985 = vld [vmem:[%s964 + $0x50] sm:$0xf]
  %v986 = vld [vmem:[%s964 + $0x54] sm:$0xf]
  %v987 = vld [vmem:[%s964 + $0x58] sm:$0xf]
  %v988 = vld [vmem:[%s964 + $0x5c] sm:$0xf]
  %v989 = vld [vmem:[%s964 + $0x60] sm:$0xf]
  %v990 = vld [vmem:[%s964 + $0x64] sm:$0xf]
  %v991 = vld [vmem:[%s964 + $0x68] sm:$0xf]
  %v992 = vld [vmem:[%s964 + $0x6c] sm:$0xf]
  %v993 = vld [vmem:[%s964 + $0x70] sm:$0xf]
  %v994 = vld [vmem:[%s964 + $0x74] sm:$0xf]
  %v995 = vld [vmem:[%s964 + $0x78] sm:$0xf]
  %v996 = vld [vmem:[%s964 + $0x7c] sm:$0xf]
  %v1029 = vunpack.c.l.b16 %v965
  %v1030 = vunpack.c.l.b16 %v966
  %v1031 = vunpack.c.l.b16 %v967
  %v1032 = vunpack.c.l.b16 %v968
  %v1033 = vunpack.c.l.b16 %v969
  %v1034 = vunpack.c.l.b16 %v970
  %v1035 = vunpack.c.l.b16 %v971
  %v1036 = vunpack.c.l.b16 %v972
  %v1037 = vunpack.c.l.b16 %v973
  %v1038 = vunpack.c.l.b16 %v974
  %v1039 = vunpack.c.l.b16 %v975
  %v1040 = vunpack.c.l.b16 %v976
  %v1041 = vunpack.c.l.b16 %v977
  %v1042 = vunpack.c.l.b16 %v978
  %v1043 = vunpack.c.l.b16 %v979
  %v1044 = vunpack.c.l.b16 %v980
  %v1045 = vunpack.c.l.b16 %v981
  %v1046 = vunpack.c.l.b16 %v982
  %v1047 = vunpack.c.l.b16 %v983
  %v1048 = vunpack.c.l.b16 %v984
  %v1049 = vunpack.c.l.b16 %v985
  %v1050 = vunpack.c.l.b16 %v986
  %v1051 = vunpack.c.l.b16 %v987
  %v1052 = vunpack.c.l.b16 %v988
  %v1053 = vunpack.c.l.b16 %v989
  %v1054 = vunpack.c.l.b16 %v990
  %v1055 = vunpack.c.l.b16 %v991
  %v1056 = vunpack.c.l.b16 %v992
  %v1057 = vunpack.c.l.b16 %v993
  %v1058 = vunpack.c.l.b16 %v994
  %v1059 = vunpack.c.l.b16 %v995
  %v1060 = vunpack.c.l.b16 %v996
  %v1061 = vpack.c.b16 %v1030, %v1029
  %v1062 = vpack.c.b16 %v1032, %v1031
  %v1063 = vpack.c.b16 %v1034, %v1033
  %v1064 = vpack.c.b16 %v1036, %v1035
  %v1065 = vpack.c.b16 %v1038, %v1037
  %v1066 = vpack.c.b16 %v1040, %v1039
  %v1067 = vpack.c.b16 %v1042, %v1041
  %v1068 = vpack.c.b16 %v1044, %v1043
  %v1069 = vpack.c.b16 %v1046, %v1045
  %v1070 = vpack.c.b16 %v1048, %v1047
  %v1071 = vpack.c.b16 %v1050, %v1049
  %v1072 = vpack.c.b16 %v1052, %v1051
  %v1073 = vpack.c.b16 %v1054, %v1053
  %v1074 = vpack.c.b16 %v1056, %v1055
  %v1075 = vpack.c.b16 %v1058, %v1057
  %v1076 = vpack.c.b16 %v1060, %v1059
  %1093 = vmatpush.bf16.msra.mxu0 %v1068
  %1094 = vmatpush.bf16.msra.mxu0 %v1067
  %1095 = vmatpush.bf16.msra.mxu0 %v1066
  %1096 = vmatpush.bf16.msra.mxu0 %v1065
  %1097 = vmatpush.bf16.msra.mxu0 %v1064
  %1098 = vmatpush.bf16.msra.mxu0 %v1063
  %1099 = vmatpush.bf16.msra.mxu0 %v1062
  %1100 = vmatpush.bf16.msra.mxu0 %v1061
  %1101 = vmatmul.bf16.gmra.mxu0 %v946
  %v1102 = vpop.f32.mrf.mxu0
  %v1103 = vadd.f32 0.0, %v1102
  %v1104 = vpop.f32.mrf.mxu0
  %v1105 = vadd.f32 0.0, %v1104
  %1106 = vmatmul.bf16.gmra.mxu0 %v948
  %v1107 = vpop.f32.mrf.mxu0
  %v1108 = vadd.f32 0.0, %v1107
  %v1109 = vpop.f32.mrf.mxu0
  %v1110 = vadd.f32 0.0, %v1109
  %1111 = vmatmul.bf16.gmra.mxu0 %v950
  %v1112 = vpop.f32.mrf.mxu0
  %v1113 = vadd.f32 0.0, %v1112
  %v1114 = vpop.f32.mrf.mxu0
  %v1115 = vadd.f32 0.0, %v1114
  %1116 = vmatmul.bf16.gmra.mxu0 %v952
  %v1117 = vpop.f32.mrf.mxu0
  %v1118 = vadd.f32 0.0, %v1117
  %v1119 = vpop.f32.mrf.mxu0
  %v1120 = vadd.f32 0.0, %v1119
  %1121 = vmatmul.bf16.gmra.mxu0 %v954
  %v1122 = vpop.f32.mrf.mxu0
  %v1123 = vadd.f32 0.0, %v1122
  %v1124 = vpop.f32.mrf.mxu0
  %v1125 = vadd.f32 0.0, %v1124
  %1126 = vmatmul.bf16.gmra.mxu0 %v956
  %v1127 = vpop.f32.mrf.mxu0
  %v1128 = vadd.f32 0.0, %v1127
  %v1129 = vpop.f32.mrf.mxu0
  %v1130 = vadd.f32 0.0, %v1129
  %1131 = vmatmul.bf16.gmra.mxu0 %v958
  %v1132 = vpop.f32.mrf.mxu0
  %v1133 = vadd.f32 0.0, %v1132
  %v1134 = vpop.f32.mrf.mxu0
  %v1135 = vadd.f32 0.0, %v1134
  %1136 = vmatmul.bf16.gmra.mxu0 %v960
  %v1137 = vpop.f32.mrf.mxu0
  %v1138 = vadd.f32 0.0, %v1137
  %v1139 = vpop.f32.mrf.mxu0
  %v1140 = vadd.f32 0.0, %v1139
  %1141 = vmatmul.bf16.gmra.mxu0 %v962
  %v1142 = vpop.f32.mrf.mxu0
  %v1143 = vadd.f32 0.0, %v1142
  %v1144 = vpop.f32.mrf.mxu0
  %v1145 = vadd.f32 0.0, %v1144
  %1146 = vdwg.mxu0
  %1147 = vmatpush.bf16.msra.mxu0 %v1076
  %1148 = vmatpush.bf16.msra.mxu0 %v1075
  %1149 = vmatpush.bf16.msra.mxu0 %v1074
  %1150 = vmatpush.bf16.msra.mxu0 %v1073
  %1151 = vmatpush.bf16.msra.mxu0 %v1072
  %1152 = vmatpush.bf16.msra.mxu0 %v1071
  %1153 = vmatpush.bf16.msra.mxu0 %v1070
  %1154 = vmatpush.bf16.msra.mxu0 %v1069
  %1155 = vmatmul.bf16.gmra.mxu0 %v947
  %v1156 = vpop.f32.mrf.mxu0
  %v1157 = vadd.f32 %v1103, %v1156
  %v1158 = vpop.f32.mrf.mxu0
  %v1159 = vadd.f32 %v1105, %v1158
  %1160 = vmatmul.bf16.gmra.mxu0 %v949
  %v1161 = vpop.f32.mrf.mxu0
  %v1162 = vadd.f32 %v1108, %v1161
  %v1163 = vpop.f32.mrf.mxu0
  %v1164 = vadd.f32 %v1110, %v1163
  %1165 = vmatmul.bf16.gmra.mxu0 %v951
  %v1166 = vpop.f32.mrf.mxu0
  %v1167 = vadd.f32 %v1113, %v1166
  %v1168 = vpop.f32.mrf.mxu0
  %v1169 = vadd.f32 %v1115, %v1168
  %1170 = vmatmul.bf16.gmra.mxu0 %v953
  %v1171 = vpop.f32.mrf.mxu0
  %v1172 = vadd.f32 %v1118, %v1171
  %v1173 = vpop.f32.mrf.mxu0
  %v1174 = vadd.f32 %v1120, %v1173
  %1175 = vmatmul.bf16.gmra.mxu0 %v955
  %v1176 = vpop.f32.mrf.mxu0
  %v1177 = vadd.f32 %v1123, %v1176
  %v1178 = vpop.f32.mrf.mxu0
  %v1179 = vadd.f32 %v1125, %v1178
  %1180 = vmatmul.bf16.gmra.mxu0 %v957
  %v1181 = vpop.f32.mrf.mxu0
  %v1182 = vadd.f32 %v1128, %v1181
  %v1183 = vpop.f32.mrf.mxu0
  %v1184 = vadd.f32 %v1130, %v1183
  %1185 = vmatmul.bf16.gmra.mxu0 %v959
  %v1186 = vpop.f32.mrf.mxu0
  %v1187 = vadd.f32 %v1133, %v1186
  %v1188 = vpop.f32.mrf.mxu0
  %v1189 = vadd.f32 %v1135, %v1188
  %1190 = vmatmul.bf16.gmra.mxu0 %v961
  %v1191 = vpop.f32.mrf.mxu0
  %v1192 = vadd.f32 %v1138, %v1191
  %v1193 = vpop.f32.mrf.mxu0
  %v1194 = vadd.f32 %v1140, %v1193
  %1195 = vmatmul.bf16.gmra.mxu0 %v963
  %v1196 = vpop.f32.mrf.mxu0
  %v1197 = vadd.f32 %v1143, %v1196
  %v1198 = vpop.f32.mrf.mxu0
  %v1199 = vadd.f32 %v1145, %v1198
  %1200 = vdwg.mxu0
  %v1201 = vadd.f32 %v892, %v1157
  %v1202 = vadd.f32 %v893, %v1159
  %v1203 = vadd.f32 %v894, %v1162
  %v1204 = vadd.f32 %v895, %v1164
  %v1205 = vadd.f32 %v896, %v1167
  %v1206 = vadd.f32 %v897, %v1169
  %v1207 = vadd.f32 %v898, %v1172
  %v1208 = vadd.f32 %v899, %v1174
  %v1209 = vadd.f32 %v900, %v1177
  %v1210 = vadd.f32 %v901, %v1179
  %v1211 = vadd.f32 %v902, %v1182
  %v1212 = vadd.f32 %v903, %v1184
  %v1213 = vadd.f32 %v904, %v1187
  %v1214 = vadd.f32 %v905, %v1189
  %v1215 = vadd.f32 %v906, %v1192
  %v1216 = vadd.f32 %v907, %v1194
  %v1217 = vadd.f32 %v908, %v1197
  %v1218 = vadd.f32 %v909, %v1199
  %v1219 = vld [vmem:[%s0 + $0x19] sm:$0xff]
  %v1220 = vld [vmem:[%s0 + $0x21] sm:$0xff]
  %v1221 = vld [vmem:[%s0 + $0x29] sm:$0xff]
  %v1222 = vld [vmem:[%s0 + $0x31] sm:$0xff]
  %v1223 = vld [vmem:[%s0 + $0x39] sm:$0xff]
  %v1224 = vld [vmem:[%s0 + $0x41] sm:$0xff]
  %v1225 = vld [vmem:[%s0 + $0x49] sm:$0xff]
  %v1226 = vld [vmem:[%s0 + $0x51] sm:$0xff]
  %v1227 = vld [vmem:[%s0 + $0x59] sm:$0xff]
  %v1228 = vld [vmem:[%s0 + $0x61] sm:$0xff]
  %v1229 = vld [vmem:[%s0 + $0x69] sm:$0xff]
  %v1230 = vld [vmem:[%s0 + $0x71] sm:$0xff]
  %v1231 = vld [vmem:[%s0 + $0x79] sm:$0xff]
  %v1232 = vld [vmem:[%s0 + $0x81] sm:$0xff]
  %v1233 = vld [vmem:[%s0 + $0x89] sm:$0xff]
  %v1234 = vld [vmem:[%s0 + $0x91] sm:$0xff]
  %v1235 = vld [vmem:[%s0 + $0x99] sm:$0xff]
  %v1236 = vld [vmem:[%s0 + $0xa1] sm:$0xff]
  %v1237 = vpack.c.bf16 %v1220, %v1219
  %v1238 = vpack.c.bf16 %v1222, %v1221
  %v1239 = vpack.c.bf16 %v1224, %v1223
  %v1240 = vpack.c.bf16 %v1226, %v1225
  %v1241 = vpack.c.bf16 %v1228, %v1227
  %v1242 = vpack.c.bf16 %v1230, %v1229
  %v1243 = vpack.c.bf16 %v1232, %v1231
  %v1244 = vpack.c.bf16 %v1234, %v1233
  %v1245 = vpack.c.bf16 %v1236, %v1235
  %s1246 = scalar_lea.vmem %s3, 512
  %v1247 = vld [vmem:[%s1246] sm:$0xf]
  %v1248 = vld [vmem:[%s1246 + $0x4] sm:$0xf]
  %v1249 = vld [vmem:[%s1246 + $0x8] sm:$0xf]
  %v1250 = vld [vmem:[%s1246 + $0xc] sm:$0xf]
  %v1251 = vld [vmem:[%s1246 + $0x10] sm:$0xf]
  %v1252 = vld [vmem:[%s1246 + $0x14] sm:$0xf]
  %v1253 = vld [vmem:[%s1246 + $0x18] sm:$0xf]
  %v1254 = vld [vmem:[%s1246 + $0x1c] sm:$0xf]
  %v1255 = vld [vmem:[%s1246 + $0x20] sm:$0xf]
  %v1256 = vld [vmem:[%s1246 + $0x24] sm:$0xf]
  %v1257 = vld [vmem:[%s1246 + $0x28] sm:$0xf]
  %v1258 = vld [vmem:[%s1246 + $0x2c] sm:$0xf]
  %v1259 = vld [vmem:[%s1246 + $0x30] sm:$0xf]
  %v1260 = vld [vmem:[%s1246 + $0x34] sm:$0xf]
  %v1261 = vld [vmem:[%s1246 + $0x38] sm:$0xf]
  %v1262 = vld [vmem:[%s1246 + $0x3c] sm:$0xf]
  %v1263 = vld [vmem:[%s1246 + $0x40] sm:$0xf]
  %v1264 = vld [vmem:[%s1246 + $0x44] sm:$0xf]
  %v1265 = vld [vmem:[%s1246 + $0x48] sm:$0xf]
  %v1266 = vld [vmem:[%s1246 + $0x4c] sm:$0xf]
  %v1267 = vld [vmem:[%s1246 + $0x50] sm:$0xf]
  %v1268 = vld [vmem:[%s1246 + $0x54] sm:$0xf]
  %v1269 = vld [vmem:[%s1246 + $0x58] sm:$0xf]
  %v1270 = vld [vmem:[%s1246 + $0x5c] sm:$0xf]
  %v1271 = vld [vmem:[%s1246 + $0x60] sm:$0xf]
  %v1272 = vld [vmem:[%s1246 + $0x64] sm:$0xf]
  %v1273 = vld [vmem:[%s1246 + $0x68] sm:$0xf]
  %v1274 = vld [vmem:[%s1246 + $0x6c] sm:$0xf]
  %v1275 = vld [vmem:[%s1246 + $0x70] sm:$0xf]
  %v1276 = vld [vmem:[%s1246 + $0x74] sm:$0xf]
  %v1277 = vld [vmem:[%s1246 + $0x78] sm:$0xf]
  %v1278 = vld [vmem:[%s1246 + $0x7c] sm:$0xf]
  %v1311 = vunpack.c.l.b16 %v1247
  %v1312 = vunpack.c.l.b16 %v1248
  %v1313 = vunpack.c.l.b16 %v1249
  %v1314 = vunpack.c.l.b16 %v1250
  %v1315 = vunpack.c.l.b16 %v1251
  %v1316 = vunpack.c.l.b16 %v1252
  %v1317 = vunpack.c.l.b16 %v1253
  %v1318 = vunpack.c.l.b16 %v1254
  %v1319 = vunpack.c.l.b16 %v1255
  %v1320 = vunpack.c.l.b16 %v1256
  %v1321 = vunpack.c.l.b16 %v1257
  %v1322 = vunpack.c.l.b16 %v1258
  %v1323 = vunpack.c.l.b16 %v1259
  %v1324 = vunpack.c.l.b16 %v1260
  %v1325 = vunpack.c.l.b16 %v1261
  %v1326 = vunpack.c.l.b16 %v1262
  %v1327 = vunpack.c.l.b16 %v1263
  %v1328 = vunpack.c.l.b16 %v1264
  %v1329 = vunpack.c.l.b16 %v1265
  %v1330 = vunpack.c.l.b16 %v1266
  %v1331 = vunpack.c.l.b16 %v1267
  %v1332 = vunpack.c.l.b16 %v1268
  %v1333 = vunpack.c.l.b16 %v1269
  %v1334 = vunpack.c.l.b16 %v1270
  %v1335 = vunpack.c.l.b16 %v1271
  %v1336 = vunpack.c.l.b16 %v1272
  %v1337 = vunpack.c.l.b16 %v1273
  %v1338 = vunpack.c.l.b16 %v1274
  %v1339 = vunpack.c.l.b16 %v1275
  %v1340 = vunpack.c.l.b16 %v1276
  %v1341 = vunpack.c.l.b16 %v1277
  %v1342 = vunpack.c.l.b16 %v1278
  %v1343 = vpack.c.b16 %v1312, %v1311
  %v1344 = vpack.c.b16 %v1314, %v1313
  %v1345 = vpack.c.b16 %v1316, %v1315
  %v1346 = vpack.c.b16 %v1318, %v1317
  %v1347 = vpack.c.b16 %v1320, %v1319
  %v1348 = vpack.c.b16 %v1322, %v1321
  %v1349 = vpack.c.b16 %v1324, %v1323
  %v1350 = vpack.c.b16 %v1326, %v1325
  %v1351 = vpack.c.b16 %v1328, %v1327
  %v1352 = vpack.c.b16 %v1330, %v1329
  %v1353 = vpack.c.b16 %v1332, %v1331
  %v1354 = vpack.c.b16 %v1334, %v1333
  %v1355 = vpack.c.b16 %v1336, %v1335
  %v1356 = vpack.c.b16 %v1338, %v1337
  %v1357 = vpack.c.b16 %v1340, %v1339
  %v1358 = vpack.c.b16 %v1342, %v1341
  %1375 = vmatpush.bf16.msra.mxu0 %v1350
  %1376 = vmatpush.bf16.msra.mxu0 %v1349
  %1377 = vmatpush.bf16.msra.mxu0 %v1348
  %1378 = vmatpush.bf16.msra.mxu0 %v1347
  %1379 = vmatpush.bf16.msra.mxu0 %v1346
  %1380 = vmatpush.bf16.msra.mxu0 %v1345
  %1381 = vmatpush.bf16.msra.mxu0 %v1344
  %1382 = vmatpush.bf16.msra.mxu0 %v1343
  %1383 = vmatmul.bf16.gmra.mxu0 %v1237
  %v1384 = vpop.f32.mrf.mxu0
  %v1385 = vadd.f32 0.0, %v1384
  %v1386 = vpop.f32.mrf.mxu0
  %v1387 = vadd.f32 0.0, %v1386
  %1388 = vmatmul.bf16.gmra.mxu0 %v1238
  %v1389 = vpop.f32.mrf.mxu0
  %v1390 = vadd.f32 0.0, %v1389
  %v1391 = vpop.f32.mrf.mxu0
  %v1392 = vadd.f32 0.0, %v1391
  %1393 = vmatmul.bf16.gmra.mxu0 %v1239
  %v1394 = vpop.f32.mrf.mxu0
  %v1395 = vadd.f32 0.0, %v1394
  %v1396 = vpop.f32.mrf.mxu0
  %v1397 = vadd.f32 0.0, %v1396
  %1398 = vmatmul.bf16.gmra.mxu0 %v1240
  %v1399 = vpop.f32.mrf.mxu0
  %v1400 = vadd.f32 0.0, %v1399
  %v1401 = vpop.f32.mrf.mxu0
  %v1402 = vadd.f32 0.0, %v1401
  %1403 = vmatmul.bf16.gmra.mxu0 %v1241
  %v1404 = vpop.f32.mrf.mxu0
  %v1405 = vadd.f32 0.0, %v1404
  %v1406 = vpop.f32.mrf.mxu0
  %v1407 = vadd.f32 0.0, %v1406
  %1408 = vmatmul.bf16.gmra.mxu0 %v1242
  %v1409 = vpop.f32.mrf.mxu0
  %v1410 = vadd.f32 0.0, %v1409
  %v1411 = vpop.f32.mrf.mxu0
  %v1412 = vadd.f32 0.0, %v1411
  %1413 = vmatmul.bf16.gmra.mxu0 %v1243
  %v1414 = vpop.f32.mrf.mxu0
  %v1415 = vadd.f32 0.0, %v1414
  %v1416 = vpop.f32.mrf.mxu0
  %v1417 = vadd.f32 0.0, %v1416
  %1418 = vmatmul.bf16.gmra.mxu0 %v1244
  %v1419 = vpop.f32.mrf.mxu0
  %v1420 = vadd.f32 0.0, %v1419
  %v1421 = vpop.f32.mrf.mxu0
  %v1422 = vadd.f32 0.0, %v1421
  %1423 = vmatmul.bf16.gmra.mxu0 %v1245
  %v1424 = vpop.f32.mrf.mxu0
  %v1425 = vadd.f32 0.0, %v1424
  %v1426 = vpop.f32.mrf.mxu0
  %v1427 = vadd.f32 0.0, %v1426
  %1428 = vdwg.mxu0
  %1429 = vmatpush.bf16.msra.mxu0 %v1358
  %1430 = vmatpush.bf16.msra.mxu0 %v1357
  %1431 = vmatpush.bf16.msra.mxu0 %v1356
  %1432 = vmatpush.bf16.msra.mxu0 %v1355
  %1433 = vmatpush.bf16.msra.mxu0 %v1354
  %1434 = vmatpush.bf16.msra.mxu0 %v1353
  %1435 = vmatpush.bf16.msra.mxu0 %v1352
  %1436 = vmatpush.bf16.msra.mxu0 %v1351
  %1437 = vmatmul.bf16.gmra.mxu0 %v1237
  %v1438 = vpop.f32.mrf.mxu0
  %v1439 = vadd.f32 %v1385, %v1438
  %v1440 = vpop.f32.mrf.mxu0
  %v1441 = vadd.f32 %v1387, %v1440
  %1442 = vmatmul.bf16.gmra.mxu0 %v1238
  %v1443 = vpop.f32.mrf.mxu0
  %v1444 = vadd.f32 %v1390, %v1443
  %v1445 = vpop.f32.mrf.mxu0
  %v1446 = vadd.f32 %v1392, %v1445
  %1447 = vmatmul.bf16.gmra.mxu0 %v1239
  %v1448 = vpop.f32.mrf.mxu0
  %v1449 = vadd.f32 %v1395, %v1448
  %v1450 = vpop.f32.mrf.mxu0
  %v1451 = vadd.f32 %v1397, %v1450
  %1452 = vmatmul.bf16.gmra.mxu0 %v1240
  %v1453 = vpop.f32.mrf.mxu0
  %v1454 = vadd.f32 %v1400, %v1453
  %v1455 = vpop.f32.mrf.mxu0
  %v1456 = vadd.f32 %v1402, %v1455
  %1457 = vmatmul.bf16.gmra.mxu0 %v1241
  %v1458 = vpop.f32.mrf.mxu0
  %v1459 = vadd.f32 %v1405, %v1458
  %v1460 = vpop.f32.mrf.mxu0
  %v1461 = vadd.f32 %v1407, %v1460
  %1462 = vmatmul.bf16.gmra.mxu0 %v1242
  %v1463 = vpop.f32.mrf.mxu0
  %v1464 = vadd.f32 %v1410, %v1463
  %v1465 = vpop.f32.mrf.mxu0
  %v1466 = vadd.f32 %v1412, %v1465
  %1467 = vmatmul.bf16.gmra.mxu0 %v1243
  %v1468 = vpop.f32.mrf.mxu0
  %v1469 = vadd.f32 %v1415, %v1468
  %v1470 = vpop.f32.mrf.mxu0
  %v1471 = vadd.f32 %v1417, %v1470
  %1472 = vmatmul.bf16.gmra.mxu0 %v1244
  %v1473 = vpop.f32.mrf.mxu0
  %v1474 = vadd.f32 %v1420, %v1473
  %v1475 = vpop.f32.mrf.mxu0
  %v1476 = vadd.f32 %v1422, %v1475
  %1477 = vmatmul.bf16.gmra.mxu0 %v1245
  %v1478 = vpop.f32.mrf.mxu0
  %v1479 = vadd.f32 %v1425, %v1478
  %v1480 = vpop.f32.mrf.mxu0
  %v1481 = vadd.f32 %v1427, %v1480
  %1482 = vdwg.mxu0
  %v1483 = vadd.f32 %v1201, %v1439
  %v1484 = vadd.f32 %v1202, %v1441
  %v1485 = vadd.f32 %v1203, %v1444
  %v1486 = vadd.f32 %v1204, %v1446
  %v1487 = vadd.f32 %v1205, %v1449
  %v1488 = vadd.f32 %v1206, %v1451
  %v1489 = vadd.f32 %v1207, %v1454
  %v1490 = vadd.f32 %v1208, %v1456
  %v1491 = vadd.f32 %v1209, %v1459
  %v1492 = vadd.f32 %v1210, %v1461
  %v1493 = vadd.f32 %v1211, %v1464
  %v1494 = vadd.f32 %v1212, %v1466
  %v1495 = vadd.f32 %v1213, %v1469
  %v1496 = vadd.f32 %v1214, %v1471
  %v1497 = vadd.f32 %v1215, %v1474
  %v1498 = vadd.f32 %v1216, %v1476
  %v1499 = vadd.f32 %v1217, %v1479
  %v1500 = vadd.f32 %v1218, %v1481
  %v1501 = vld [vmem:[%s4] sm:$0x1]
  %v1503 = vperm.slane %v1501, 0
  %v1505 = vadd.f32 %v1483, %v1503
  %v1506 = vadd.f32 %v1484, %v1503
  %v1507 = vadd.f32 %v1485, %v1503
  %v1508 = vadd.f32 %v1486, %v1503
  %v1509 = vadd.f32 %v1487, %v1503
  %v1510 = vadd.f32 %v1488, %v1503
  %v1511 = vadd.f32 %v1489, %v1503
  %v1512 = vadd.f32 %v1490, %v1503
  %v1513 = vadd.f32 %v1491, %v1503
  %v1514 = vadd.f32 %v1492, %v1503
  %v1515 = vadd.f32 %v1493, %v1503
  %v1516 = vadd.f32 %v1494, %v1503
  %v1517 = vadd.f32 %v1495, %v1503
  %v1518 = vadd.f32 %v1496, %v1503
  %v1519 = vadd.f32 %v1497, %v1503
  %v1520 = vadd.f32 %v1498, %v1503
  %v1521 = vadd.f32 %v1499, %v1503
  %v1522 = vadd.f32 %v1500, %v1503
  %v1523 = vmax.f32 %v1505, 0.0
  %v1524 = vmax.f32 %v1506, 0.0
  %v1525 = vmax.f32 %v1507, 0.0
  %v1526 = vmax.f32 %v1508, 0.0
  %v1527 = vmax.f32 %v1509, 0.0
  %v1528 = vmax.f32 %v1510, 0.0
  %v1529 = vmax.f32 %v1511, 0.0
  %v1530 = vmax.f32 %v1512, 0.0
  %v1531 = vmax.f32 %v1513, 0.0
  %v1532 = vmax.f32 %v1514, 0.0
  %v1533 = vmax.f32 %v1515, 0.0
  %v1534 = vmax.f32 %v1516, 0.0
  %v1535 = vmax.f32 %v1517, 0.0
  %v1536 = vmax.f32 %v1518, 0.0
  %v1537 = vmax.f32 %v1519, 0.0
  %v1538 = vmax.f32 %v1520, 0.0
  %v1539 = vmax.f32 %v1521, 0.0
  %v1540 = vmax.f32 %v1522, 0.0
  %v1541 = vld [vmem:[%s2] sm:$0xff]
  %v1542 = vld [vmem:[%s2 + $0x8] sm:$0xff]
  %v1543 = vld [vmem:[%s2 + $0x10] sm:$0xff]
  %v1544 = vld [vmem:[%s2 + $0x18] sm:$0xff]
  %v1545 = vld [vmem:[%s2 + $0x20] sm:$0xff]
  %v1546 = vld [vmem:[%s2 + $0x28] sm:$0xff]
  %v1547 = vld [vmem:[%s2 + $0x30] sm:$0xff]
  %v1548 = vld [vmem:[%s2 + $0x38] sm:$0xff]
  %v1549 = vld [vmem:[%s2 + $0x40] sm:$0xff]
  %v1550 = vld [vmem:[%s2 + $0x48] sm:$0xff]
  %v1551 = vld [vmem:[%s2 + $0x50] sm:$0xff]
  %v1552 = vld [vmem:[%s2 + $0x58] sm:$0xff]
  %v1553 = vld [vmem:[%s2 + $0x60] sm:$0xff]
  %v1554 = vld [vmem:[%s2 + $0x68] sm:$0xff]
  %v1555 = vld [vmem:[%s2 + $0x70] sm:$0xff]
  %v1556 = vld [vmem:[%s2 + $0x78] sm:$0xff]
  %v1557 = vld [vmem:[%s2 + $0x80] sm:$0xff]
  %v1558 = vld [vmem:[%s2 + $0x88] sm:$0xff]
  %1560 = vset.pattern.permute.xlu0 0
  %1561 = vperm.xlu0 %1560, %v1541
  %v1562 = vpop.permute.xlu0 %1561
  %1565 = vset.pattern.permute.xlu0 0
  %1566 = vperm.xlu0 %1565, %v1542
  %v1567 = vpop.permute.xlu0 %1566
  %1570 = vset.pattern.permute.xlu0 0
  %1571 = vperm.xlu0 %1570, %v1543
  %v1572 = vpop.permute.xlu0 %1571
  %1575 = vset.pattern.permute.xlu0 0
  %1576 = vperm.xlu0 %1575, %v1544
  %v1577 = vpop.permute.xlu0 %1576
  %1580 = vset.pattern.permute.xlu0 0
  %1581 = vperm.xlu0 %1580, %v1545
  %v1582 = vpop.permute.xlu0 %1581
  %1585 = vset.pattern.permute.xlu0 0
  %1586 = vperm.xlu0 %1585, %v1546
  %v1587 = vpop.permute.xlu0 %1586
  %1590 = vset.pattern.permute.xlu0 0
  %1591 = vperm.xlu0 %1590, %v1547
  %v1592 = vpop.permute.xlu0 %1591
  %1595 = vset.pattern.permute.xlu0 0
  %1596 = vperm.xlu0 %1595, %v1548
  %v1597 = vpop.permute.xlu0 %1596
  %1600 = vset.pattern.permute.xlu0 0
  %1601 = vperm.xlu0 %1600, %v1549
  %v1602 = vpop.permute.xlu0 %1601
  %1605 = vset.pattern.permute.xlu0 0
  %1606 = vperm.xlu0 %1605, %v1550
  %v1607 = vpop.permute.xlu0 %1606
  %1610 = vset.pattern.permute.xlu0 0
  %1611 = vperm.xlu0 %1610, %v1551
  %v1612 = vpop.permute.xlu0 %1611
  %1615 = vset.pattern.permute.xlu0 0
  %1616 = vperm.xlu0 %1615, %v1552
  %v1617 = vpop.permute.xlu0 %1616
  %1620 = vset.pattern.permute.xlu0 0
  %1621 = vperm.xlu0 %1620, %v1553
  %v1622 = vpop.permute.xlu0 %1621
  %1625 = vset.pattern.permute.xlu0 0
  %1626 = vperm.xlu0 %1625, %v1554
  %v1627 = vpop.permute.xlu0 %1626
  %1630 = vset.pattern.permute.xlu0 0
  %1631 = vperm.xlu0 %1630, %v1555
  %v1632 = vpop.permute.xlu0 %1631
  %1635 = vset.pattern.permute.xlu0 0
  %1636 = vperm.xlu0 %1635, %v1556
  %v1637 = vpop.permute.xlu0 %1636
  %1640 = vset.pattern.permute.xlu0 0
  %1641 = vperm.xlu0 %1640, %v1557
  %v1642 = vpop.permute.xlu0 %1641
  %1645 = vset.pattern.permute.xlu0 0
  %1646 = vperm.xlu0 %1645, %v1558
  %v1647 = vpop.permute.xlu0 %1646
  %v1649 = vmul.f32 %v1523, %v1562
  %v1650 = vmul.f32 %v1524, %v1567
  %v1651 = vmul.f32 %v1525, %v1572
  %v1652 = vmul.f32 %v1526, %v1577
  %v1653 = vmul.f32 %v1527, %v1582
  %v1654 = vmul.f32 %v1528, %v1587
  %v1655 = vmul.f32 %v1529, %v1592
  %v1656 = vmul.f32 %v1530, %v1597
  %v1657 = vmul.f32 %v1531, %v1602
  %v1658 = vmul.f32 %v1532, %v1607
  %v1659 = vmul.f32 %v1533, %v1612
  %v1660 = vmul.f32 %v1534, %v1617
  %v1661 = vmul.f32 %v1535, %v1622
  %v1662 = vmul.f32 %v1536, %v1627
  %v1663 = vmul.f32 %v1537, %v1632
  %v1664 = vmul.f32 %v1538, %v1637
  %v1665 = vmul.f32 %v1539, %v1642
  %v1666 = vmul.f32 %v1540, %v1647
  %1667 = vst [vmem:[#allocation2] sm:$0xff] 0.0
  %1668 = vst [vmem:[#allocation2 + $0x8] sm:$0xff] 0.0
  %1669 = vst [vmem:[#allocation2 + $0xa0] sm:$0xff] 0.0
  %1670 = vst [vmem:[#allocation2 + $0xa8] sm:$0xff] 0.0
  %1671 = vst [vmem:[#allocation2 + $0x10] sm:$0xff] %v1649
  %1672 = vst [vmem:[#allocation2 + $0x18] sm:$0xff] %v1650
  %1673 = vst [vmem:[#allocation2 + $0x20] sm:$0xff] %v1651
  %1674 = vst [vmem:[#allocation2 + $0x28] sm:$0xff] %v1652
  %1675 = vst [vmem:[#allocation2 + $0x30] sm:$0xff] %v1653
  %1676 = vst [vmem:[#allocation2 + $0x38] sm:$0xff] %v1654
  %1677 = vst [vmem:[#allocation2 + $0x40] sm:$0xff] %v1655
  %1678 = vst [vmem:[#allocation2 + $0x48] sm:$0xff] %v1656
  %1679 = vst [vmem:[#allocation2 + $0x50] sm:$0xff] %v1657
  %1680 = vst [vmem:[#allocation2 + $0x58] sm:$0xff] %v1658
  %1681 = vst [vmem:[#allocation2 + $0x60] sm:$0xff] %v1659
  %1682 = vst [vmem:[#allocation2 + $0x68] sm:$0xff] %v1660
  %1683 = vst [vmem:[#allocation2 + $0x70] sm:$0xff] %v1661
  %1684 = vst [vmem:[#allocation2 + $0x78] sm:$0xff] %v1662
  %1685 = vst [vmem:[#allocation2 + $0x80] sm:$0xff] %v1663
  %1686 = vst [vmem:[#allocation2 + $0x88] sm:$0xff] %v1664
  %1687 = vst [vmem:[#allocation2 + $0x90] sm:$0xff] %v1665
  %1688 = vst [vmem:[#allocation2 + $0x98] sm:$0xff] %v1666
  %s1689 = smul.u32 4, 5
  %s1690 = smul.u32 %s1689, 32
  %s1691 = smul.u32 %s1690, 1
  %s1692 = sshll.u32 %s1691, 4
  %1693 = dma.done [#allocation4], %s1692
  %v1694 = vld [vmem:[#allocation2 + $0x7] sm:$0xff]
  %v1695 = vld [vmem:[#allocation2 + $0xf] sm:$0xff]
  %v1696 = vld [vmem:[#allocation2 + $0x17] sm:$0xff]
  %v1697 = vld [vmem:[#allocation2 + $0x1f] sm:$0xff]
  %v1698 = vld [vmem:[#allocation2 + $0x27] sm:$0xff]
  %v1699 = vld [vmem:[#allocation2 + $0x2f] sm:$0xff]
  %v1700 = vld [vmem:[#allocation2 + $0x37] sm:$0xff]
  %v1701 = vld [vmem:[#allocation2 + $0x3f] sm:$0xff]
  %v1702 = vld [vmem:[#allocation2 + $0x47] sm:$0xff]
  %v1703 = vld [vmem:[#allocation2 + $0x4f] sm:$0xff]
  %v1704 = vld [vmem:[#allocation2 + $0x57] sm:$0xff]
  %v1705 = vld [vmem:[#allocation2 + $0x5f] sm:$0xff]
  %v1706 = vld [vmem:[#allocation2 + $0x67] sm:$0xff]
  %v1707 = vld [vmem:[#allocation2 + $0x6f] sm:$0xff]
  %v1708 = vld [vmem:[#allocation2 + $0x77] sm:$0xff]
  %v1709 = vld [vmem:[#allocation2 + $0x7f] sm:$0xff]
  %v1710 = vld [vmem:[#allocation2 + $0x87] sm:$0xff]
  %v1711 = vld [vmem:[#allocation2 + $0x8f] sm:$0xff]
  %v1712 = vld [vmem:[#allocation2 + $0x8] sm:$0xff]
  %v1713 = vld [vmem:[#allocation2 + $0x10] sm:$0xff]
  %v1714 = vld [vmem:[#allocation2 + $0x18] sm:$0xff]
  %v1715 = vld [vmem:[#allocation2 + $0x20] sm:$0xff]
  %v1716 = vld [vmem:[#allocation2 + $0x28] sm:$0xff]
  %v1717 = vld [vmem:[#allocation2 + $0x30] sm:$0xff]
  %v1718 = vld [vmem:[#allocation2 + $0x38] sm:$0xff]
  %v1719 = vld [vmem:[#allocation2 + $0x40] sm:$0xff]
  %v1720 = vld [vmem:[#allocation2 + $0x48] sm:$0xff]
  %v1721 = vld [vmem:[#allocation2 + $0x50] sm:$0xff]
  %v1722 = vld [vmem:[#allocation2 + $0x58] sm:$0xff]
  %v1723 = vld [vmem:[#allocation2 + $0x60] sm:$0xff]
  %v1724 = vld [vmem:[#allocation2 + $0x68] sm:$0xff]
  %v1725 = vld [vmem:[#allocation2 + $0x70] sm:$0xff]
  %v1726 = vld [vmem:[#allocation2 + $0x78] sm:$0xff]
  %v1727 = vld [vmem:[#allocation2 + $0x80] sm:$0xff]
  %v1728 = vld [vmem:[#allocation2 + $0x88] sm:$0xff]
  %v1729 = vld [vmem:[#allocation2 + $0x90] sm:$0xff]
  %v1730 = vpack.c.bf16 %v1695, %v1694
  %v1731 = vpack.c.bf16 %v1713, %v1712
  %v1732 = vpack.c.bf16 %v1697, %v1696
  %v1733 = vpack.c.bf16 %v1715, %v1714
  %v1734 = vpack.c.bf16 %v1699, %v1698
  %v1735 = vpack.c.bf16 %v1717, %v1716
  %v1736 = vpack.c.bf16 %v1701, %v1700
  %v1737 = vpack.c.bf16 %v1719, %v1718
  %v1738 = vpack.c.bf16 %v1703, %v1702
  %v1739 = vpack.c.bf16 %v1721, %v1720
  %v1740 = vpack.c.bf16 %v1705, %v1704
  %v1741 = vpack.c.bf16 %v1723, %v1722
  %v1742 = vpack.c.bf16 %v1707, %v1706
  %v1743 = vpack.c.bf16 %v1725, %v1724
  %v1744 = vpack.c.bf16 %v1709, %v1708
  %v1745 = vpack.c.bf16 %v1727, %v1726
  %v1746 = vpack.c.bf16 %v1711, %v1710
  %v1747 = vpack.c.bf16 %v1729, %v1728
  %v1748 = vld [vmem:[#allocation3] sm:$0xf]
  %v1749 = vld [vmem:[#allocation3 + $0x4] sm:$0xf]
  %v1750 = vld [vmem:[#allocation3 + $0x8] sm:$0xf]
  %v1751 = vld [vmem:[#allocation3 + $0xc] sm:$0xf]
  %v1752 = vld [vmem:[#allocation3 + $0x10] sm:$0xf]
  %v1753 = vld [vmem:[#allocation3 + $0x14] sm:$0xf]
  %v1754 = vld [vmem:[#allocation3 + $0x18] sm:$0xf]
  %v1755 = vld [vmem:[#allocation3 + $0x1c] sm:$0xf]
  %v1756 = vld [vmem:[#allocation3 + $0x20] sm:$0xf]
  %v1757 = vld [vmem:[#allocation3 + $0x24] sm:$0xf]
  %v1758 = vld [vmem:[#allocation3 + $0x28] sm:$0xf]
  %v1759 = vld [vmem:[#allocation3 + $0x2c] sm:$0xf]
  %v1760 = vld [vmem:[#allocation3 + $0x30] sm:$0xf]
  %v1761 = vld [vmem:[#allocation3 + $0x34] sm:$0xf]
  %v1762 = vld [vmem:[#allocation3 + $0x38] sm:$0xf]
  %v1763 = vld [vmem:[#allocation3 + $0x3c] sm:$0xf]
  %v1764 = vld [vmem:[#allocation3 + $0x40] sm:$0xf]
  %v1765 = vld [vmem:[#allocation3 + $0x44] sm:$0xf]
  %v1766 = vld [vmem:[#allocation3 + $0x48] sm:$0xf]
  %v1767 = vld [vmem:[#allocation3 + $0x4c] sm:$0xf]
  %v1768 = vld [vmem:[#allocation3 + $0x50] sm:$0xf]
  %v1769 = vld [vmem:[#allocation3 + $0x54] sm:$0xf]
  %v1770 = vld [vmem:[#allocation3 + $0x58] sm:$0xf]
  %v1771 = vld [vmem:[#allocation3 + $0x5c] sm:$0xf]
  %v1772 = vld [vmem:[#allocation3 + $0x60] sm:$0xf]
  %v1773 = vld [vmem:[#allocation3 + $0x64] sm:$0xf]
  %v1774 = vld [vmem:[#allocation3 + $0x68] sm:$0xf]
  %v1775 = vld [vmem:[#allocation3 + $0x6c] sm:$0xf]
  %v1776 = vld [vmem:[#allocation3 + $0x70] sm:$0xf]
  %v1777 = vld [vmem:[#allocation3 + $0x74] sm:$0xf]
  %v1778 = vld [vmem:[#allocation3 + $0x78] sm:$0xf]
  %v1779 = vld [vmem:[#allocation3 + $0x7c] sm:$0xf]
  %v1780 = vld [vmem:[#allocation2 + $0x9] sm:$0xff]
  %v1781 = vld [vmem:[#allocation2 + $0x11] sm:$0xff]
  %v1782 = vld [vmem:[#allocation2 + $0x19] sm:$0xff]
  %v1783 = vld [vmem:[#allocation2 + $0x21] sm:$0xff]
  %v1784 = vld [vmem:[#allocation2 + $0x29] sm:$0xff]
  %v1785 = vld [vmem:[#allocation2 + $0x31] sm:$0xff]
  %v1786 = vld [vmem:[#allocation2 + $0x39] sm:$0xff]
  %v1787 = vld [vmem:[#allocation2 + $0x41] sm:$0xff]
  %v1788 = vld [vmem:[#allocation2 + $0x49] sm:$0xff]
  %v1789 = vld [vmem:[#allocation2 + $0x51] sm:$0xff]
  %v1790 = vld [vmem:[#allocation2 + $0x59] sm:$0xff]
  %v1791 = vld [vmem:[#allocation2 + $0x61] sm:$0xff]
  %v1792 = vld [vmem:[#allocation2 + $0x69] sm:$0xff]
  %v1793 = vld [vmem:[#allocation2 + $0x71] sm:$0xff]
  %v1794 = vld [vmem:[#allocation2 + $0x79] sm:$0xff]
  %v1795 = vld [vmem:[#allocation2 + $0x81] sm:$0xff]
  %v1796 = vld [vmem:[#allocation2 + $0x89] sm:$0xff]
  %v1797 = vld [vmem:[#allocation2 + $0x91] sm:$0xff]
  %v1798 = vld [vmem:[#allocation2 + $0x97] sm:$0xff]
  %v1799 = vpack.c.bf16 %v1781, %v1780
  %v1800 = vpack.c.bf16 %v1696, %v1695
  %v1801 = vpack.c.bf16 %v1783, %v1782
  %v1802 = vpack.c.bf16 %v1698, %v1697
  %v1803 = vpack.c.bf16 %v1785, %v1784
  %v1804 = vpack.c.bf16 %v1700, %v1699
  %v1805 = vpack.c.bf16 %v1787, %v1786
  %v1806 = vpack.c.bf16 %v1702, %v1701
  %v1807 = vpack.c.bf16 %v1789, %v1788
  %v1808 = vpack.c.bf16 %v1704, %v1703
  %v1809 = vpack.c.bf16 %v1791, %v1790
  %v1810 = vpack.c.bf16 %v1706, %v1705
  %v1811 = vpack.c.bf16 %v1793, %v1792
  %v1812 = vpack.c.bf16 %v1708, %v1707
  %v1813 = vpack.c.bf16 %v1795, %v1794
  %v1814 = vpack.c.bf16 %v1710, %v1709
  %v1815 = vpack.c.bf16 %v1797, %v1796
  %v1816 = vpack.c.bf16 %v1798, %v1711
  %s1817 = scalar_lea.vmem [#allocation3], 128
  %v1818 = vld [vmem:[%s1817] sm:$0xf]
  %v1819 = vld [vmem:[%s1817 + $0x4] sm:$0xf]
  %v1820 = vld [vmem:[%s1817 + $0x8] sm:$0xf]
  %v1821 = vld [vmem:[%s1817 + $0xc] sm:$0xf]
  %v1822 = vld [vmem:[%s1817 + $0x10] sm:$0xf]
  %v1823 = vld [vmem:[%s1817 + $0x14] sm:$0xf]
  %v1824 = vld [vmem:[%s1817 + $0x18] sm:$0xf]
  %v1825 = vld [vmem:[%s1817 + $0x1c] sm:$0xf]
  %v1826 = vld [vmem:[%s1817 + $0x20] sm:$0xf]
  %v1827 = vld [vmem:[%s1817 + $0x24] sm:$0xf]
  %v1828 = vld [vmem:[%s1817 + $0x28] sm:$0xf]
  %v1829 = vld [vmem:[%s1817 + $0x2c] sm:$0xf]
  %v1830 = vld [vmem:[%s1817 + $0x30] sm:$0xf]
  %v1831 = vld [vmem:[%s1817 + $0x34] sm:$0xf]
  %v1832 = vld [vmem:[%s1817 + $0x38] sm:$0xf]
  %v1833 = vld [vmem:[%s1817 + $0x3c] sm:$0xf]
  %v1834 = vld [vmem:[%s1817 + $0x40] sm:$0xf]
  %v1835 = vld [vmem:[%s1817 + $0x44] sm:$0xf]
  %v1836 = vld [vmem:[%s1817 + $0x48] sm:$0xf]
  %v1837 = vld [vmem:[%s1817 + $0x4c] sm:$0xf]
  %v1838 = vld [vmem:[%s1817 + $0x50] sm:$0xf]
  %v1839 = vld [vmem:[%s1817 + $0x54] sm:$0xf]
  %v1840 = vld [vmem:[%s1817 + $0x58] sm:$0xf]
  %v1841 = vld [vmem:[%s1817 + $0x5c] sm:$0xf]
  %v1842 = vld [vmem:[%s1817 + $0x60] sm:$0xf]
  %v1843 = vld [vmem:[%s1817 + $0x64] sm:$0xf]
  %v1844 = vld [vmem:[%s1817 + $0x68] sm:$0xf]
  %v1845 = vld [vmem:[%s1817 + $0x6c] sm:$0xf]
  %v1846 = vld [vmem:[%s1817 + $0x70] sm:$0xf]
  %v1847 = vld [vmem:[%s1817 + $0x74] sm:$0xf]
  %v1848 = vld [vmem:[%s1817 + $0x78] sm:$0xf]
  %v1849 = vld [vmem:[%s1817 + $0x7c] sm:$0xf]
  %v1882 = vunpack.c.l.b16 %v1818
  %v1883 = vunpack.c.l.b16 %v1819
  %v1884 = vunpack.c.l.b16 %v1820
  %v1885 = vunpack.c.l.b16 %v1821
  %v1886 = vunpack.c.l.b16 %v1822
  %v1887 = vunpack.c.l.b16 %v1823
  %v1888 = vunpack.c.l.b16 %v1824
  %v1889 = vunpack.c.l.b16 %v1825
  %v1890 = vunpack.c.l.b16 %v1826
  %v1891 = vunpack.c.l.b16 %v1827
  %v1892 = vunpack.c.l.b16 %v1828
  %v1893 = vunpack.c.l.b16 %v1829
  %v1894 = vunpack.c.l.b16 %v1830
  %v1895 = vunpack.c.l.b16 %v1831
  %v1896 = vunpack.c.l.b16 %v1832
  %v1897 = vunpack.c.l.b16 %v1833
  %v1898 = vunpack.c.l.b16 %v1834
  %v1899 = vunpack.c.l.b16 %v1835
  %v1900 = vunpack.c.l.b16 %v1836
  %v1901 = vunpack.c.l.b16 %v1837
  %v1902 = vunpack.c.l.b16 %v1838
  %v1903 = vunpack.c.l.b16 %v1839
  %v1904 = vunpack.c.l.b16 %v1840
  %v1905 = vunpack.c.l.b16 %v1841
  %v1906 = vunpack.c.l.b16 %v1842
  %v1907 = vunpack.c.l.b16 %v1843
  %v1908 = vunpack.c.l.b16 %v1844
  %v1909 = vunpack.c.l.b16 %v1845
  %v1910 = vunpack.c.l.b16 %v1846
  %v1911 = vunpack.c.l.b16 %v1847
  %v1912 = vunpack.c.l.b16 %v1848
  %v1913 = vunpack.c.l.b16 %v1849
  %v1914 = vpack.c.b16 %v1883, %v1882
  %v1915 = vpack.c.b16 %v1885, %v1884
  %v1916 = vpack.c.b16 %v1887, %v1886
  %v1917 = vpack.c.b16 %v1889, %v1888
  %v1918 = vpack.c.b16 %v1891, %v1890
  %v1919 = vpack.c.b16 %v1893, %v1892
  %v1920 = vpack.c.b16 %v1895, %v1894
  %v1921 = vpack.c.b16 %v1897, %v1896
  %v1922 = vpack.c.b16 %v1899, %v1898
  %v1923 = vpack.c.b16 %v1901, %v1900
  %v1924 = vpack.c.b16 %v1903, %v1902
  %v1925 = vpack.c.b16 %v1905, %v1904
  %v1926 = vpack.c.b16 %v1907, %v1906
  %v1927 = vpack.c.b16 %v1909, %v1908
  %v1928 = vpack.c.b16 %v1911, %v1910
  %v1929 = vpack.c.b16 %v1913, %v1912
  %1946 = vmatpush.bf16.msra.mxu0 %v1921
  %1947 = vmatpush.bf16.msra.mxu0 %v1920
  %1948 = vmatpush.bf16.msra.mxu0 %v1919
  %1949 = vmatpush.bf16.msra.mxu0 %v1918
  %1950 = vmatpush.bf16.msra.mxu0 %v1917
  %1951 = vmatpush.bf16.msra.mxu0 %v1916
  %1952 = vmatpush.bf16.msra.mxu0 %v1915
  %1953 = vmatpush.bf16.msra.mxu0 %v1914
  %1954 = vmatmul.bf16.gmra.mxu0 %v1799
  %v1955 = vpop.f32.mrf.mxu0
  %v1956 = vadd.f32 0.0, %v1955
  %v1957 = vpop.f32.mrf.mxu0
  %v1958 = vadd.f32 0.0, %v1957
  %1959 = vmatmul.bf16.gmra.mxu0 %v1801
  %v1960 = vpop.f32.mrf.mxu0
  %v1961 = vadd.f32 0.0, %v1960
  %v1962 = vpop.f32.mrf.mxu0
  %v1963 = vadd.f32 0.0, %v1962
  %1964 = vmatmul.bf16.gmra.mxu0 %v1803
  %v1965 = vpop.f32.mrf.mxu0
  %v1966 = vadd.f32 0.0, %v1965
  %v1967 = vpop.f32.mrf.mxu0
  %v1968 = vadd.f32 0.0, %v1967
  %1969 = vmatmul.bf16.gmra.mxu0 %v1805
  %v1970 = vpop.f32.mrf.mxu0
  %v1971 = vadd.f32 0.0, %v1970
  %v1972 = vpop.f32.mrf.mxu0
  %v1973 = vadd.f32 0.0, %v1972
  %1974 = vmatmul.bf16.gmra.mxu0 %v1807
  %v1975 = vpop.f32.mrf.mxu0
  %v1976 = vadd.f32 0.0, %v1975
  %v1977 = vpop.f32.mrf.mxu0
  %v1978 = vadd.f32 0.0, %v1977
  %1979 = vmatmul.bf16.gmra.mxu0 %v1809
  %v1980 = vpop.f32.mrf.mxu0
  %v1981 = vadd.f32 0.0, %v1980
  %v1982 = vpop.f32.mrf.mxu0
  %v1983 = vadd.f32 0.0, %v1982
  %1984 = vmatmul.bf16.gmra.mxu0 %v1811
  %v1985 = vpop.f32.mrf.mxu0
  %v1986 = vadd.f32 0.0, %v1985
  %v1987 = vpop.f32.mrf.mxu0
  %v1988 = vadd.f32 0.0, %v1987
  %1989 = vmatmul.bf16.gmra.mxu0 %v1813
  %v1990 = vpop.f32.mrf.mxu0
  %v1991 = vadd.f32 0.0, %v1990
  %v1992 = vpop.f32.mrf.mxu0
  %v1993 = vadd.f32 0.0, %v1992
  %1994 = vmatmul.bf16.gmra.mxu0 %v1815
  %v1995 = vpop.f32.mrf.mxu0
  %v1996 = vadd.f32 0.0, %v1995
  %v1997 = vpop.f32.mrf.mxu0
  %v1998 = vadd.f32 0.0, %v1997
  %1999 = vdwg.mxu0
  %2000 = vmatpush.bf16.msra.mxu0 %v1929
  %2001 = vmatpush.bf16.msra.mxu0 %v1928
  %2002 = vmatpush.bf16.msra.mxu0 %v1927
  %2003 = vmatpush.bf16.msra.mxu0 %v1926
  %2004 = vmatpush.bf16.msra.mxu0 %v1925
  %2005 = vmatpush.bf16.msra.mxu0 %v1924
  %2006 = vmatpush.bf16.msra.mxu0 %v1923
  %2007 = vmatpush.bf16.msra.mxu0 %v1922
  %2008 = vmatmul.bf16.gmra.mxu0 %v1800
  %v2009 = vpop.f32.mrf.mxu0
  %v2010 = vadd.f32 %v1956, %v2009
  %v2011 = vpop.f32.mrf.mxu0
  %v2012 = vadd.f32 %v1958, %v2011
  %2013 = vmatmul.bf16.gmra.mxu0 %v1802
  %v2014 = vpop.f32.mrf.mxu0
  %v2015 = vadd.f32 %v1961, %v2014
  %v2016 = vpop.f32.mrf.mxu0
  %v2017 = vadd.f32 %v1963, %v2016
  %2018 = vmatmul.bf16.gmra.mxu0 %v1804
  %v2019 = vpop.f32.mrf.mxu0
  %v2020 = vadd.f32 %v1966, %v2019
  %v2021 = vpop.f32.mrf.mxu0
  %v2022 = vadd.f32 %v1968, %v2021
  %2023 = vmatmul.bf16.gmra.mxu0 %v1806
  %v2024 = vpop.f32.mrf.mxu0
  %v2025 = vadd.f32 %v1971, %v2024
  %v2026 = vpop.f32.mrf.mxu0
  %v2027 = vadd.f32 %v1973, %v2026
  %2028 = vmatmul.bf16.gmra.mxu0 %v1808
  %v2029 = vpop.f32.mrf.mxu0
  %v2030 = vadd.f32 %v1976, %v2029
  %v2031 = vpop.f32.mrf.mxu0
  %v2032 = vadd.f32 %v1978, %v2031
  %2033 = vmatmul.bf16.gmra.mxu0 %v1810
  %v2034 = vpop.f32.mrf.mxu0
  %v2035 = vadd.f32 %v1981, %v2034
  %v2036 = vpop.f32.mrf.mxu0
  %v2037 = vadd.f32 %v1983, %v2036
  %2038 = vmatmul.bf16.gmra.mxu0 %v1812
  %v2039 = vpop.f32.mrf.mxu0
  %v2040 = vadd.f32 %v1986, %v2039
  %v2041 = vpop.f32.mrf.mxu0
  %v2042 = vadd.f32 %v1988, %v2041
  %2043 = vmatmul.bf16.gmra.mxu0 %v1814
  %v2044 = vpop.f32.mrf.mxu0
  %v2045 = vadd.f32 %v1991, %v2044
  %v2046 = vpop.f32.mrf.mxu0
  %v2047 = vadd.f32 %v1993, %v2046
  %2048 = vmatmul.bf16.gmra.mxu0 %v1816
  %v2049 = vpop.f32.mrf.mxu0
  %v2050 = vadd.f32 %v1996, %v2049
  %v2051 = vpop.f32.mrf.mxu0
  %v2052 = vadd.f32 %v1998, %v2051
  %2053 = vdwg.mxu0
  %v2086 = vunpack.c.l.b16 %v1748
  %v2087 = vunpack.c.l.b16 %v1749
  %v2088 = vunpack.c.l.b16 %v1750
  %v2089 = vunpack.c.l.b16 %v1751
  %v2090 = vunpack.c.l.b16 %v1752
  %v2091 = vunpack.c.l.b16 %v1753
  %v2092 = vunpack.c.l.b16 %v1754
  %v2093 = vunpack.c.l.b16 %v1755
  %v2094 = vunpack.c.l.b16 %v1756
  %v2095 = vunpack.c.l.b16 %v1757
  %v2096 = vunpack.c.l.b16 %v1758
  %v2097 = vunpack.c.l.b16 %v1759
  %v2098 = vunpack.c.l.b16 %v1760
  %v2099 = vunpack.c.l.b16 %v1761
  %v2100 = vunpack.c.l.b16 %v1762
  %v2101 = vunpack.c.l.b16 %v1763
  %v2102 = vunpack.c.l.b16 %v1764
  %v2103 = vunpack.c.l.b16 %v1765
  %v2104 = vunpack.c.l.b16 %v1766
  %v2105 = vunpack.c.l.b16 %v1767
  %v2106 = vunpack.c.l.b16 %v1768
  %v2107 = vunpack.c.l.b16 %v1769
  %v2108 = vunpack.c.l.b16 %v1770
  %v2109 = vunpack.c.l.b16 %v1771
  %v2110 = vunpack.c.l.b16 %v1772
  %v2111 = vunpack.c.l.b16 %v1773
  %v2112 = vunpack.c.l.b16 %v1774
  %v2113 = vunpack.c.l.b16 %v1775
  %v2114 = vunpack.c.l.b16 %v1776
  %v2115 = vunpack.c.l.b16 %v1777
  %v2116 = vunpack.c.l.b16 %v1778
  %v2117 = vunpack.c.l.b16 %v1779
  %v2118 = vpack.c.b16 %v2087, %v2086
  %v2119 = vpack.c.b16 %v2089, %v2088
  %v2120 = vpack.c.b16 %v2091, %v2090
  %v2121 = vpack.c.b16 %v2093, %v2092
  %v2122 = vpack.c.b16 %v2095, %v2094
  %v2123 = vpack.c.b16 %v2097, %v2096
  %v2124 = vpack.c.b16 %v2099, %v2098
  %v2125 = vpack.c.b16 %v2101, %v2100
  %v2126 = vpack.c.b16 %v2103, %v2102
  %v2127 = vpack.c.b16 %v2105, %v2104
  %v2128 = vpack.c.b16 %v2107, %v2106
  %v2129 = vpack.c.b16 %v2109, %v2108
  %v2130 = vpack.c.b16 %v2111, %v2110
  %v2131 = vpack.c.b16 %v2113, %v2112
  %v2132 = vpack.c.b16 %v2115, %v2114
  %v2133 = vpack.c.b16 %v2117, %v2116
  %2150 = vmatpush.bf16.msra.mxu0 %v2125
  %2151 = vmatpush.bf16.msra.mxu0 %v2124
  %2152 = vmatpush.bf16.msra.mxu0 %v2123
  %2153 = vmatpush.bf16.msra.mxu0 %v2122
  %2154 = vmatpush.bf16.msra.mxu0 %v2121
  %2155 = vmatpush.bf16.msra.mxu0 %v2120
  %2156 = vmatpush.bf16.msra.mxu0 %v2119
  %2157 = vmatpush.bf16.msra.mxu0 %v2118
  %2158 = vmatmul.bf16.gmra.mxu0 %v1730
  %v2159 = vpop.f32.mrf.mxu0
  %v2160 = vadd.f32 %v2010, %v2159
  %v2161 = vpop.f32.mrf.mxu0
  %v2162 = vadd.f32 %v2012, %v2161
  %2163 = vmatmul.bf16.gmra.mxu0 %v1732
  %v2164 = vpop.f32.mrf.mxu0
  %v2165 = vadd.f32 %v2015, %v2164
  %v2166 = vpop.f32.mrf.mxu0
  %v2167 = vadd.f32 %v2017, %v2166
  %2168 = vmatmul.bf16.gmra.mxu0 %v1734
  %v2169 = vpop.f32.mrf.mxu0
  %v2170 = vadd.f32 %v2020, %v2169
  %v2171 = vpop.f32.mrf.mxu0
  %v2172 = vadd.f32 %v2022, %v2171
  %2173 = vmatmul.bf16.gmra.mxu0 %v1736
  %v2174 = vpop.f32.mrf.mxu0
  %v2175 = vadd.f32 %v2025, %v2174
  %v2176 = vpop.f32.mrf.mxu0
  %v2177 = vadd.f32 %v2027, %v2176
  %2178 = vmatmul.bf16.gmra.mxu0 %v1738
  %v2179 = vpop.f32.mrf.mxu0
  %v2180 = vadd.f32 %v2030, %v2179
  %v2181 = vpop.f32.mrf.mxu0
  %v2182 = vadd.f32 %v2032, %v2181
  %2183 = vmatmul.bf16.gmra.mxu0 %v1740
  %v2184 = vpop.f32.mrf.mxu0
  %v2185 = vadd.f32 %v2035, %v2184
  %v2186 = vpop.f32.mrf.mxu0
  %v2187 = vadd.f32 %v2037, %v2186
  %2188 = vmatmul.bf16.gmra.mxu0 %v1742
  %v2189 = vpop.f32.mrf.mxu0
  %v2190 = vadd.f32 %v2040, %v2189
  %v2191 = vpop.f32.mrf.mxu0
  %v2192 = vadd.f32 %v2042, %v2191
  %2193 = vmatmul.bf16.gmra.mxu0 %v1744
  %v2194 = vpop.f32.mrf.mxu0
  %v2195 = vadd.f32 %v2045, %v2194
  %v2196 = vpop.f32.mrf.mxu0
  %v2197 = vadd.f32 %v2047, %v2196
  %2198 = vmatmul.bf16.gmra.mxu0 %v1746
  %v2199 = vpop.f32.mrf.mxu0
  %v2200 = vadd.f32 %v2050, %v2199
  %v2201 = vpop.f32.mrf.mxu0
  %v2202 = vadd.f32 %v2052, %v2201
  %2203 = vdwg.mxu0
  %2204 = vmatpush.bf16.msra.mxu0 %v2133
  %2205 = vmatpush.bf16.msra.mxu0 %v2132
  %2206 = vmatpush.bf16.msra.mxu0 %v2131
  %2207 = vmatpush.bf16.msra.mxu0 %v2130
  %2208 = vmatpush.bf16.msra.mxu0 %v2129
  %2209 = vmatpush.bf16.msra.mxu0 %v2128
  %2210 = vmatpush.bf16.msra.mxu0 %v2127
  %2211 = vmatpush.bf16.msra.mxu0 %v2126
  %2212 = vmatmul.bf16.gmra.mxu0 %v1731
  %v2213 = vpop.f32.mrf.mxu0
  %v2214 = vadd.f32 %v2160, %v2213
  %v2215 = vpop.f32.mrf.mxu0
  %v2216 = vadd.f32 %v2162, %v2215
  %2217 = vmatmul.bf16.gmra.mxu0 %v1733
  %v2218 = vpop.f32.mrf.mxu0
  %v2219 = vadd.f32 %v2165, %v2218
  %v2220 = vpop.f32.mrf.mxu0
  %v2221 = vadd.f32 %v2167, %v2220
  %2222 = vmatmul.bf16.gmra.mxu0 %v1735
  %v2223 = vpop.f32.mrf.mxu0
  %v2224 = vadd.f32 %v2170, %v2223
  %v2225 = vpop.f32.mrf.mxu0
  %v2226 = vadd.f32 %v2172, %v2225
  %2227 = vmatmul.bf16.gmra.mxu0 %v1737
  %v2228 = vpop.f32.mrf.mxu0
  %v2229 = vadd.f32 %v2175, %v2228
  %v2230 = vpop.f32.mrf.mxu0
  %v2231 = vadd.f32 %v2177, %v2230
  %2232 = vmatmul.bf16.gmra.mxu0 %v1739
  %v2233 = vpop.f32.mrf.mxu0
  %v2234 = vadd.f32 %v2180, %v2233
  %v2235 = vpop.f32.mrf.mxu0
  %v2236 = vadd.f32 %v2182, %v2235
  %2237 = vmatmul.bf16.gmra.mxu0 %v1741
  %v2238 = vpop.f32.mrf.mxu0
  %v2239 = vadd.f32 %v2185, %v2238
  %v2240 = vpop.f32.mrf.mxu0
  %v2241 = vadd.f32 %v2187, %v2240
  %2242 = vmatmul.bf16.gmra.mxu0 %v1743
  %v2243 = vpop.f32.mrf.mxu0
  %v2244 = vadd.f32 %v2190, %v2243
  %v2245 = vpop.f32.mrf.mxu0
  %v2246 = vadd.f32 %v2192, %v2245
  %2247 = vmatmul.bf16.gmra.mxu0 %v1745
  %v2248 = vpop.f32.mrf.mxu0
  %v2249 = vadd.f32 %v2195, %v2248
  %v2250 = vpop.f32.mrf.mxu0
  %v2251 = vadd.f32 %v2197, %v2250
  %2252 = vmatmul.bf16.gmra.mxu0 %v1747
  %v2253 = vpop.f32.mrf.mxu0
  %v2254 = vadd.f32 %v2200, %v2253
  %v2255 = vpop.f32.mrf.mxu0
  %v2256 = vadd.f32 %v2202, %v2255
  %2257 = vdwg.mxu0
  %v2258 = vld [vmem:[#allocation2 + $0x10] sm:$0xff]
  %v2259 = vld [vmem:[#allocation2 + $0x18] sm:$0xff]
  %v2260 = vld [vmem:[#allocation2 + $0x20] sm:$0xff]
  %v2261 = vld [vmem:[#allocation2 + $0x28] sm:$0xff]
  %v2262 = vld [vmem:[#allocation2 + $0x30] sm:$0xff]
  %v2263 = vld [vmem:[#allocation2 + $0x38] sm:$0xff]
  %v2264 = vld [vmem:[#allocation2 + $0x40] sm:$0xff]
  %v2265 = vld [vmem:[#allocation2 + $0x48] sm:$0xff]
  %v2266 = vld [vmem:[#allocation2 + $0x50] sm:$0xff]
  %v2267 = vld [vmem:[#allocation2 + $0x58] sm:$0xff]
  %v2268 = vld [vmem:[#allocation2 + $0x60] sm:$0xff]
  %v2269 = vld [vmem:[#allocation2 + $0x68] sm:$0xff]
  %v2270 = vld [vmem:[#allocation2 + $0x70] sm:$0xff]
  %v2271 = vld [vmem:[#allocation2 + $0x78] sm:$0xff]
  %v2272 = vld [vmem:[#allocation2 + $0x80] sm:$0xff]
  %v2273 = vld [vmem:[#allocation2 + $0x88] sm:$0xff]
  %v2274 = vld [vmem:[#allocation2 + $0x90] sm:$0xff]
  %v2275 = vld [vmem:[#allocation2 + $0x98] sm:$0xff]
  %v2276 = vld [vmem:[#allocation2 + $0x11] sm:$0xff]
  %v2277 = vld [vmem:[#allocation2 + $0x19] sm:$0xff]
  %v2278 = vld [vmem:[#allocation2 + $0x21] sm:$0xff]
  %v2279 = vld [vmem:[#allocation2 + $0x29] sm:$0xff]
  %v2280 = vld [vmem:[#allocation2 + $0x31] sm:$0xff]
  %v2281 = vld [vmem:[#allocation2 + $0x39] sm:$0xff]
  %v2282 = vld [vmem:[#allocation2 + $0x41] sm:$0xff]
  %v2283 = vld [vmem:[#allocation2 + $0x49] sm:$0xff]
  %v2284 = vld [vmem:[#allocation2 + $0x51] sm:$0xff]
  %v2285 = vld [vmem:[#allocation2 + $0x59] sm:$0xff]
  %v2286 = vld [vmem:[#allocation2 + $0x61] sm:$0xff]
  %v2287 = vld [vmem:[#allocation2 + $0x69] sm:$0xff]
  %v2288 = vld [vmem:[#allocation2 + $0x71] sm:$0xff]
  %v2289 = vld [vmem:[#allocation2 + $0x79] sm:$0xff]
  %v2290 = vld [vmem:[#allocation2 + $0x81] sm:$0xff]
  %v2291 = vld [vmem:[#allocation2 + $0x89] sm:$0xff]
  %v2292 = vld [vmem:[#allocation2 + $0x91] sm:$0xff]
  %v2293 = vld [vmem:[#allocation2 + $0x99] sm:$0xff]
  %v2294 = vpack.c.bf16 %v2259, %v2258
  %v2295 = vpack.c.bf16 %v2277, %v2276
  %v2296 = vpack.c.bf16 %v2261, %v2260
  %v2297 = vpack.c.bf16 %v2279, %v2278
  %v2298 = vpack.c.bf16 %v2263, %v2262
  %v2299 = vpack.c.bf16 %v2281, %v2280
  %v2300 = vpack.c.bf16 %v2265, %v2264
  %v2301 = vpack.c.bf16 %v2283, %v2282
  %v2302 = vpack.c.bf16 %v2267, %v2266
  %v2303 = vpack.c.bf16 %v2285, %v2284
  %v2304 = vpack.c.bf16 %v2269, %v2268
  %v2305 = vpack.c.bf16 %v2287, %v2286
  %v2306 = vpack.c.bf16 %v2271, %v2270
  %v2307 = vpack.c.bf16 %v2289, %v2288
  %v2308 = vpack.c.bf16 %v2273, %v2272
  %v2309 = vpack.c.bf16 %v2291, %v2290
  %v2310 = vpack.c.bf16 %v2275, %v2274
  %v2311 = vpack.c.bf16 %v2293, %v2292
  %s2312 = scalar_lea.vmem [#allocation3], 256
  %v2313 = vld [vmem:[%s2312] sm:$0xf]
  %v2314 = vld [vmem:[%s2312 + $0x4] sm:$0xf]
  %v2315 = vld [vmem:[%s2312 + $0x8] sm:$0xf]
  %v2316 = vld [vmem:[%s2312 + $0xc] sm:$0xf]
  %v2317 = vld [vmem:[%s2312 + $0x10] sm:$0xf]
  %v2318 = vld [vmem:[%s2312 + $0x14] sm:$0xf]
  %v2319 = vld [vmem:[%s2312 + $0x18] sm:$0xf]
  %v2320 = vld [vmem:[%s2312 + $0x1c] sm:$0xf]
  %v2321 = vld [vmem:[%s2312 + $0x20] sm:$0xf]
  %v2322 = vld [vmem:[%s2312 + $0x24] sm:$0xf]
  %v2323 = vld [vmem:[%s2312 + $0x28] sm:$0xf]
  %v2324 = vld [vmem:[%s2312 + $0x2c] sm:$0xf]
  %v2325 = vld [vmem:[%s2312 + $0x30] sm:$0xf]
  %v2326 = vld [vmem:[%s2312 + $0x34] sm:$0xf]
  %v2327 = vld [vmem:[%s2312 + $0x38] sm:$0xf]
  %v2328 = vld [vmem:[%s2312 + $0x3c] sm:$0xf]
  %v2329 = vld [vmem:[%s2312 + $0x40] sm:$0xf]
  %v2330 = vld [vmem:[%s2312 + $0x44] sm:$0xf]
  %v2331 = vld [vmem:[%s2312 + $0x48] sm:$0xf]
  %v2332 = vld [vmem:[%s2312 + $0x4c] sm:$0xf]
  %v2333 = vld [vmem:[%s2312 + $0x50] sm:$0xf]
  %v2334 = vld [vmem:[%s2312 + $0x54] sm:$0xf]
  %v2335 = vld [vmem:[%s2312 + $0x58] sm:$0xf]
  %v2336 = vld [vmem:[%s2312 + $0x5c] sm:$0xf]
  %v2337 = vld [vmem:[%s2312 + $0x60] sm:$0xf]
  %v2338 = vld [vmem:[%s2312 + $0x64] sm:$0xf]
  %v2339 = vld [vmem:[%s2312 + $0x68] sm:$0xf]
  %v2340 = vld [vmem:[%s2312 + $0x6c] sm:$0xf]
  %v2341 = vld [vmem:[%s2312 + $0x70] sm:$0xf]
  %v2342 = vld [vmem:[%s2312 + $0x74] sm:$0xf]
  %v2343 = vld [vmem:[%s2312 + $0x78] sm:$0xf]
  %v2344 = vld [vmem:[%s2312 + $0x7c] sm:$0xf]
  %v2377 = vunpack.c.l.b16 %v2313
  %v2378 = vunpack.c.l.b16 %v2314
  %v2379 = vunpack.c.l.b16 %v2315
  %v2380 = vunpack.c.l.b16 %v2316
  %v2381 = vunpack.c.l.b16 %v2317
  %v2382 = vunpack.c.l.b16 %v2318
  %v2383 = vunpack.c.l.b16 %v2319
  %v2384 = vunpack.c.l.b16 %v2320
  %v2385 = vunpack.c.l.b16 %v2321
  %v2386 = vunpack.c.l.b16 %v2322
  %v2387 = vunpack.c.l.b16 %v2323
  %v2388 = vunpack.c.l.b16 %v2324
  %v2389 = vunpack.c.l.b16 %v2325
  %v2390 = vunpack.c.l.b16 %v2326
  %v2391 = vunpack.c.l.b16 %v2327
  %v2392 = vunpack.c.l.b16 %v2328
  %v2393 = vunpack.c.l.b16 %v2329
  %v2394 = vunpack.c.l.b16 %v2330
  %v2395 = vunpack.c.l.b16 %v2331
  %v2396 = vunpack.c.l.b16 %v2332
  %v2397 = vunpack.c.l.b16 %v2333
  %v2398 = vunpack.c.l.b16 %v2334
  %v2399 = vunpack.c.l.b16 %v2335
  %v2400 = vunpack.c.l.b16 %v2336
  %v2401 = vunpack.c.l.b16 %v2337
  %v2402 = vunpack.c.l.b16 %v2338
  %v2403 = vunpack.c.l.b16 %v2339
  %v2404 = vunpack.c.l.b16 %v2340
  %v2405 = vunpack.c.l.b16 %v2341
  %v2406 = vunpack.c.l.b16 %v2342
  %v2407 = vunpack.c.l.b16 %v2343
  %v2408 = vunpack.c.l.b16 %v2344
  %v2409 = vpack.c.b16 %v2378, %v2377
  %v2410 = vpack.c.b16 %v2380, %v2379
  %v2411 = vpack.c.b16 %v2382, %v2381
  %v2412 = vpack.c.b16 %v2384, %v2383
  %v2413 = vpack.c.b16 %v2386, %v2385
  %v2414 = vpack.c.b16 %v2388, %v2387
  %v2415 = vpack.c.b16 %v2390, %v2389
  %v2416 = vpack.c.b16 %v2392, %v2391
  %v2417 = vpack.c.b16 %v2394, %v2393
  %v2418 = vpack.c.b16 %v2396, %v2395
  %v2419 = vpack.c.b16 %v2398, %v2397
  %v2420 = vpack.c.b16 %v2400, %v2399
  %v2421 = vpack.c.b16 %v2402, %v2401
  %v2422 = vpack.c.b16 %v2404, %v2403
  %v2423 = vpack.c.b16 %v2406, %v2405
  %v2424 = vpack.c.b16 %v2408, %v2407
  %2441 = vmatpush.bf16.msra.mxu0 %v2416
  %2442 = vmatpush.bf16.msra.mxu0 %v2415
  %2443 = vmatpush.bf16.msra.mxu0 %v2414
  %2444 = vmatpush.bf16.msra.mxu0 %v2413
  %2445 = vmatpush.bf16.msra.mxu0 %v2412
  %2446 = vmatpush.bf16.msra.mxu0 %v2411
  %2447 = vmatpush.bf16.msra.mxu0 %v2410
  %2448 = vmatpush.bf16.msra.mxu0 %v2409
  %2449 = vmatmul.bf16.gmra.mxu0 %v2294
  %v2450 = vpop.f32.mrf.mxu0
  %v2451 = vadd.f32 0.0, %v2450
  %v2452 = vpop.f32.mrf.mxu0
  %v2453 = vadd.f32 0.0, %v2452
  %2454 = vmatmul.bf16.gmra.mxu0 %v2296
  %v2455 = vpop.f32.mrf.mxu0
  %v2456 = vadd.f32 0.0, %v2455
  %v2457 = vpop.f32.mrf.mxu0
  %v2458 = vadd.f32 0.0, %v2457
  %2459 = vmatmul.bf16.gmra.mxu0 %v2298
  %v2460 = vpop.f32.mrf.mxu0
  %v2461 = vadd.f32 0.0, %v2460
  %v2462 = vpop.f32.mrf.mxu0
  %v2463 = vadd.f32 0.0, %v2462
  %2464 = vmatmul.bf16.gmra.mxu0 %v2300
  %v2465 = vpop.f32.mrf.mxu0
  %v2466 = vadd.f32 0.0, %v2465
  %v2467 = vpop.f32.mrf.mxu0
  %v2468 = vadd.f32 0.0, %v2467
  %2469 = vmatmul.bf16.gmra.mxu0 %v2302
  %v2470 = vpop.f32.mrf.mxu0
  %v2471 = vadd.f32 0.0, %v2470
  %v2472 = vpop.f32.mrf.mxu0
  %v2473 = vadd.f32 0.0, %v2472
  %2474 = vmatmul.bf16.gmra.mxu0 %v2304
  %v2475 = vpop.f32.mrf.mxu0
  %v2476 = vadd.f32 0.0, %v2475
  %v2477 = vpop.f32.mrf.mxu0
  %v2478 = vadd.f32 0.0, %v2477
  %2479 = vmatmul.bf16.gmra.mxu0 %v2306
  %v2480 = vpop.f32.mrf.mxu0
  %v2481 = vadd.f32 0.0, %v2480
  %v2482 = vpop.f32.mrf.mxu0
  %v2483 = vadd.f32 0.0, %v2482
  %2484 = vmatmul.bf16.gmra.mxu0 %v2308
  %v2485 = vpop.f32.mrf.mxu0
  %v2486 = vadd.f32 0.0, %v2485
  %v2487 = vpop.f32.mrf.mxu0
  %v2488 = vadd.f32 0.0, %v2487
  %2489 = vmatmul.bf16.gmra.mxu0 %v2310
  %v2490 = vpop.f32.mrf.mxu0
  %v2491 = vadd.f32 0.0, %v2490
  %v2492 = vpop.f32.mrf.mxu0
  %v2493 = vadd.f32 0.0, %v2492
  %2494 = vdwg.mxu0
  %2495 = vmatpush.bf16.msra.mxu0 %v2424
  %2496 = vmatpush.bf16.msra.mxu0 %v2423
  %2497 = vmatpush.bf16.msra.mxu0 %v2422
  %2498 = vmatpush.bf16.msra.mxu0 %v2421
  %2499 = vmatpush.bf16.msra.mxu0 %v2420
  %2500 = vmatpush.bf16.msra.mxu0 %v2419
  %2501 = vmatpush.bf16.msra.mxu0 %v2418
  %2502 = vmatpush.bf16.msra.mxu0 %v2417
  %2503 = vmatmul.bf16.gmra.mxu0 %v2295
  %v2504 = vpop.f32.mrf.mxu0
  %v2505 = vadd.f32 %v2451, %v2504
  %v2506 = vpop.f32.mrf.mxu0
  %v2507 = vadd.f32 %v2453, %v2506
  %2508 = vmatmul.bf16.gmra.mxu0 %v2297
  %v2509 = vpop.f32.mrf.mxu0
  %v2510 = vadd.f32 %v2456, %v2509
  %v2511 = vpop.f32.mrf.mxu0
  %v2512 = vadd.f32 %v2458, %v2511
  %2513 = vmatmul.bf16.gmra.mxu0 %v2299
  %v2514 = vpop.f32.mrf.mxu0
  %v2515 = vadd.f32 %v2461, %v2514
  %v2516 = vpop.f32.mrf.mxu0
  %v2517 = vadd.f32 %v2463, %v2516
  %2518 = vmatmul.bf16.gmra.mxu0 %v2301
  %v2519 = vpop.f32.mrf.mxu0
  %v2520 = vadd.f32 %v2466, %v2519
  %v2521 = vpop.f32.mrf.mxu0
  %v2522 = vadd.f32 %v2468, %v2521
  %2523 = vmatmul.bf16.gmra.mxu0 %v2303
  %v2524 = vpop.f32.mrf.mxu0
  %v2525 = vadd.f32 %v2471, %v2524
  %v2526 = vpop.f32.mrf.mxu0
  %v2527 = vadd.f32 %v2473, %v2526
  %2528 = vmatmul.bf16.gmra.mxu0 %v2305
  %v2529 = vpop.f32.mrf.mxu0
  %v2530 = vadd.f32 %v2476, %v2529
  %v2531 = vpop.f32.mrf.mxu0
  %v2532 = vadd.f32 %v2478, %v2531
  %2533 = vmatmul.bf16.gmra.mxu0 %v2307
  %v2534 = vpop.f32.mrf.mxu0
  %v2535 = vadd.f32 %v2481, %v2534
  %v2536 = vpop.f32.mrf.mxu0
  %v2537 = vadd.f32 %v2483, %v2536
  %2538 = vmatmul.bf16.gmra.mxu0 %v2309
  %v2539 = vpop.f32.mrf.mxu0
  %v2540 = vadd.f32 %v2486, %v2539
  %v2541 = vpop.f32.mrf.mxu0
  %v2542 = vadd.f32 %v2488, %v2541
  %2543 = vmatmul.bf16.gmra.mxu0 %v2311
  %v2544 = vpop.f32.mrf.mxu0
  %v2545 = vadd.f32 %v2491, %v2544
  %v2546 = vpop.f32.mrf.mxu0
  %v2547 = vadd.f32 %v2493, %v2546
  %2548 = vdwg.mxu0
  %v2549 = vadd.f32 %v2214, %v2505
  %v2550 = vadd.f32 %v2216, %v2507
  %v2551 = vadd.f32 %v2219, %v2510
  %v2552 = vadd.f32 %v2221, %v2512
  %v2553 = vadd.f32 %v2224, %v2515
  %v2554 = vadd.f32 %v2226, %v2517
  %v2555 = vadd.f32 %v2229, %v2520
  %v2556 = vadd.f32 %v2231, %v2522
  %v2557 = vadd.f32 %v2234, %v2525
  %v2558 = vadd.f32 %v2236, %v2527
  %v2559 = vadd.f32 %v2239, %v2530
  %v2560 = vadd.f32 %v2241, %v2532
  %v2561 = vadd.f32 %v2244, %v2535
  %v2562 = vadd.f32 %v2246, %v2537
  %v2563 = vadd.f32 %v2249, %v2540
  %v2564 = vadd.f32 %v2251, %v2542
  %v2565 = vadd.f32 %v2254, %v2545
  %v2566 = vadd.f32 %v2256, %v2547
  %v2567 = vld [vmem:[#allocation2 + $0x17] sm:$0xff]
  %v2568 = vld [vmem:[#allocation2 + $0x1f] sm:$0xff]
  %v2569 = vld [vmem:[#allocation2 + $0x27] sm:$0xff]
  %v2570 = vld [vmem:[#allocation2 + $0x2f] sm:$0xff]
  %v2571 = vld [vmem:[#allocation2 + $0x37] sm:$0xff]
  %v2572 = vld [vmem:[#allocation2 + $0x3f] sm:$0xff]
  %v2573 = vld [vmem:[#allocation2 + $0x47] sm:$0xff]
  %v2574 = vld [vmem:[#allocation2 + $0x4f] sm:$0xff]
  %v2575 = vld [vmem:[#allocation2 + $0x57] sm:$0xff]
  %v2576 = vld [vmem:[#allocation2 + $0x5f] sm:$0xff]
  %v2577 = vld [vmem:[#allocation2 + $0x67] sm:$0xff]
  %v2578 = vld [vmem:[#allocation2 + $0x6f] sm:$0xff]
  %v2579 = vld [vmem:[#allocation2 + $0x77] sm:$0xff]
  %v2580 = vld [vmem:[#allocation2 + $0x7f] sm:$0xff]
  %v2581 = vld [vmem:[#allocation2 + $0x87] sm:$0xff]
  %v2582 = vld [vmem:[#allocation2 + $0x8f] sm:$0xff]
  %v2583 = vld [vmem:[#allocation2 + $0x97] sm:$0xff]
  %v2584 = vld [vmem:[#allocation2 + $0x9f] sm:$0xff]
  %v2585 = vld [vmem:[#allocation2 + $0x18] sm:$0xff]
  %v2586 = vld [vmem:[#allocation2 + $0x20] sm:$0xff]
  %v2587 = vld [vmem:[#allocation2 + $0x28] sm:$0xff]
  %v2588 = vld [vmem:[#allocation2 + $0x30] sm:$0xff]
  %v2589 = vld [vmem:[#allocation2 + $0x38] sm:$0xff]
  %v2590 = vld [vmem:[#allocation2 + $0x40] sm:$0xff]
  %v2591 = vld [vmem:[#allocation2 + $0x48] sm:$0xff]
  %v2592 = vld [vmem:[#allocation2 + $0x50] sm:$0xff]
  %v2593 = vld [vmem:[#allocation2 + $0x58] sm:$0xff]
  %v2594 = vld [vmem:[#allocation2 + $0x60] sm:$0xff]
  %v2595 = vld [vmem:[#allocation2 + $0x68] sm:$0xff]
  %v2596 = vld [vmem:[#allocation2 + $0x70] sm:$0xff]
  %v2597 = vld [vmem:[#allocation2 + $0x78] sm:$0xff]
  %v2598 = vld [vmem:[#allocation2 + $0x80] sm:$0xff]
  %v2599 = vld [vmem:[#allocation2 + $0x88] sm:$0xff]
  %v2600 = vld [vmem:[#allocation2 + $0x90] sm:$0xff]
  %v2601 = vld [vmem:[#allocation2 + $0x98] sm:$0xff]
  %v2602 = vld [vmem:[#allocation2 + $0xa0] sm:$0xff]
  %v2603 = vpack.c.bf16 %v2568, %v2567
  %v2604 = vpack.c.bf16 %v2586, %v2585
  %v2605 = vpack.c.bf16 %v2570, %v2569
  %v2606 = vpack.c.bf16 %v2588, %v2587
  %v2607 = vpack.c.bf16 %v2572, %v2571
  %v2608 = vpack.c.bf16 %v2590, %v2589
  %v2609 = vpack.c.bf16 %v2574, %v2573
  %v2610 = vpack.c.bf16 %v2592, %v2591
  %v2611 = vpack.c.bf16 %v2576, %v2575
  %v2612 = vpack.c.bf16 %v2594, %v2593
  %v2613 = vpack.c.bf16 %v2578, %v2577
  %v2614 = vpack.c.bf16 %v2596, %v2595
  %v2615 = vpack.c.bf16 %v2580, %v2579
  %v2616 = vpack.c.bf16 %v2598, %v2597
  %v2617 = vpack.c.bf16 %v2582, %v2581
  %v2618 = vpack.c.bf16 %v2600, %v2599
  %v2619 = vpack.c.bf16 %v2584, %v2583
  %v2620 = vpack.c.bf16 %v2602, %v2601
  %s2621 = scalar_lea.vmem [#allocation3], 384
  %v2622 = vld [vmem:[%s2621] sm:$0xf]
  %v2623 = vld [vmem:[%s2621 + $0x4] sm:$0xf]
  %v2624 = vld [vmem:[%s2621 + $0x8] sm:$0xf]
  %v2625 = vld [vmem:[%s2621 + $0xc] sm:$0xf]
  %v2626 = vld [vmem:[%s2621 + $0x10] sm:$0xf]
  %v2627 = vld [vmem:[%s2621 + $0x14] sm:$0xf]
  %v2628 = vld [vmem:[%s2621 + $0x18] sm:$0xf]
  %v2629 = vld [vmem:[%s2621 + $0x1c] sm:$0xf]
  %v2630 = vld [vmem:[%s2621 + $0x20] sm:$0xf]
  %v2631 = vld [vmem:[%s2621 + $0x24] sm:$0xf]
  %v2632 = vld [vmem:[%s2621 + $0x28] sm:$0xf]
  %v2633 = vld [vmem:[%s2621 + $0x2c] sm:$0xf]
  %v2634 = vld [vmem:[%s2621 + $0x30] sm:$0xf]
  %v2635 = vld [vmem:[%s2621 + $0x34] sm:$0xf]
  %v2636 = vld [vmem:[%s2621 + $0x38] sm:$0xf]
  %v2637 = vld [vmem:[%s2621 + $0x3c] sm:$0xf]
  %v2638 = vld [vmem:[%s2621 + $0x40] sm:$0xf]
  %v2639 = vld [vmem:[%s2621 + $0x44] sm:$0xf]
  %v2640 = vld [vmem:[%s2621 + $0x48] sm:$0xf]
  %v2641 = vld [vmem:[%s2621 + $0x4c] sm:$0xf]
  %v2642 = vld [vmem:[%s2621 + $0x50] sm:$0xf]
  %v2643 = vld [vmem:[%s2621 + $0x54] sm:$0xf]
  %v2644 = vld [vmem:[%s2621 + $0x58] sm:$0xf]
  %v2645 = vld [vmem:[%s2621 + $0x5c] sm:$0xf]
  %v2646 = vld [vmem:[%s2621 + $0x60] sm:$0xf]
  %v2647 = vld [vmem:[%s2621 + $0x64] sm:$0xf]
  %v2648 = vld [vmem:[%s2621 + $0x68] sm:$0xf]
  %v2649 = vld [vmem:[%s2621 + $0x6c] sm:$0xf]
  %v2650 = vld [vmem:[%s2621 + $0x70] sm:$0xf]
  %v2651 = vld [vmem:[%s2621 + $0x74] sm:$0xf]
  %v2652 = vld [vmem:[%s2621 + $0x78] sm:$0xf]
  %v2653 = vld [vmem:[%s2621 + $0x7c] sm:$0xf]
  %v2686 = vunpack.c.l.b16 %v2622
  %v2687 = vunpack.c.l.b16 %v2623
  %v2688 = vunpack.c.l.b16 %v2624
  %v2689 = vunpack.c.l.b16 %v2625
  %v2690 = vunpack.c.l.b16 %v2626
  %v2691 = vunpack.c.l.b16 %v2627
  %v2692 = vunpack.c.l.b16 %v2628
  %v2693 = vunpack.c.l.b16 %v2629
  %v2694 = vunpack.c.l.b16 %v2630
  %v2695 = vunpack.c.l.b16 %v2631
  %v2696 = vunpack.c.l.b16 %v2632
  %v2697 = vunpack.c.l.b16 %v2633
  %v2698 = vunpack.c.l.b16 %v2634
  %v2699 = vunpack.c.l.b16 %v2635
  %v2700 = vunpack.c.l.b16 %v2636
  %v2701 = vunpack.c.l.b16 %v2637
  %v2702 = vunpack.c.l.b16 %v2638
  %v2703 = vunpack.c.l.b16 %v2639
  %v2704 = vunpack.c.l.b16 %v2640
  %v2705 = vunpack.c.l.b16 %v2641
  %v2706 = vunpack.c.l.b16 %v2642
  %v2707 = vunpack.c.l.b16 %v2643
  %v2708 = vunpack.c.l.b16 %v2644
  %v2709 = vunpack.c.l.b16 %v2645
  %v2710 = vunpack.c.l.b16 %v2646
  %v2711 = vunpack.c.l.b16 %v2647
  %v2712 = vunpack.c.l.b16 %v2648
  %v2713 = vunpack.c.l.b16 %v2649
  %v2714 = vunpack.c.l.b16 %v2650
  %v2715 = vunpack.c.l.b16 %v2651
  %v2716 = vunpack.c.l.b16 %v2652
  %v2717 = vunpack.c.l.b16 %v2653
  %v2718 = vpack.c.b16 %v2687, %v2686
  %v2719 = vpack.c.b16 %v2689, %v2688
  %v2720 = vpack.c.b16 %v2691, %v2690
  %v2721 = vpack.c.b16 %v2693, %v2692
  %v2722 = vpack.c.b16 %v2695, %v2694
  %v2723 = vpack.c.b16 %v2697, %v2696
  %v2724 = vpack.c.b16 %v2699, %v2698
  %v2725 = vpack.c.b16 %v2701, %v2700
  %v2726 = vpack.c.b16 %v2703, %v2702
  %v2727 = vpack.c.b16 %v2705, %v2704
  %v2728 = vpack.c.b16 %v2707, %v2706
  %v2729 = vpack.c.b16 %v2709, %v2708
  %v2730 = vpack.c.b16 %v2711, %v2710
  %v2731 = vpack.c.b16 %v2713, %v2712
  %v2732 = vpack.c.b16 %v2715, %v2714
  %v2733 = vpack.c.b16 %v2717, %v2716
  %2750 = vmatpush.bf16.msra.mxu0 %v2725
  %2751 = vmatpush.bf16.msra.mxu0 %v2724
  %2752 = vmatpush.bf16.msra.mxu0 %v2723
  %2753 = vmatpush.bf16.msra.mxu0 %v2722
  %2754 = vmatpush.bf16.msra.mxu0 %v2721
  %2755 = vmatpush.bf16.msra.mxu0 %v2720
  %2756 = vmatpush.bf16.msra.mxu0 %v2719
  %2757 = vmatpush.bf16.msra.mxu0 %v2718
  %2758 = vmatmul.bf16.gmra.mxu0 %v2603
  %v2759 = vpop.f32.mrf.mxu0
  %v2760 = vadd.f32 0.0, %v2759
  %v2761 = vpop.f32.mrf.mxu0
  %v2762 = vadd.f32 0.0, %v2761
  %2763 = vmatmul.bf16.gmra.mxu0 %v2605
  %v2764 = vpop.f32.mrf.mxu0
  %v2765 = vadd.f32 0.0, %v2764
  %v2766 = vpop.f32.mrf.mxu0
  %v2767 = vadd.f32 0.0, %v2766
  %2768 = vmatmul.bf16.gmra.mxu0 %v2607
  %v2769 = vpop.f32.mrf.mxu0
  %v2770 = vadd.f32 0.0, %v2769
  %v2771 = vpop.f32.mrf.mxu0
  %v2772 = vadd.f32 0.0, %v2771
  %2773 = vmatmul.bf16.gmra.mxu0 %v2609
  %v2774 = vpop.f32.mrf.mxu0
  %v2775 = vadd.f32 0.0, %v2774
  %v2776 = vpop.f32.mrf.mxu0
  %v2777 = vadd.f32 0.0, %v2776
  %2778 = vmatmul.bf16.gmra.mxu0 %v2611
  %v2779 = vpop.f32.mrf.mxu0
  %v2780 = vadd.f32 0.0, %v2779
  %v2781 = vpop.f32.mrf.mxu0
  %v2782 = vadd.f32 0.0, %v2781
  %2783 = vmatmul.bf16.gmra.mxu0 %v2613
  %v2784 = vpop.f32.mrf.mxu0
  %v2785 = vadd.f32 0.0, %v2784
  %v2786 = vpop.f32.mrf.mxu0
  %v2787 = vadd.f32 0.0, %v2786
  %2788 = vmatmul.bf16.gmra.mxu0 %v2615
  %v2789 = vpop.f32.mrf.mxu0
  %v2790 = vadd.f32 0.0, %v2789
  %v2791 = vpop.f32.mrf.mxu0
  %v2792 = vadd.f32 0.0, %v2791
  %2793 = vmatmul.bf16.gmra.mxu0 %v2617
  %v2794 = vpop.f32.mrf.mxu0
  %v2795 = vadd.f32 0.0, %v2794
  %v2796 = vpop.f32.mrf.mxu0
  %v2797 = vadd.f32 0.0, %v2796
  %2798 = vmatmul.bf16.gmra.mxu0 %v2619
  %v2799 = vpop.f32.mrf.mxu0
  %v2800 = vadd.f32 0.0, %v2799
  %v2801 = vpop.f32.mrf.mxu0
  %v2802 = vadd.f32 0.0, %v2801
  %2803 = vdwg.mxu0
  %2804 = vmatpush.bf16.msra.mxu0 %v2733
  %2805 = vmatpush.bf16.msra.mxu0 %v2732
  %2806 = vmatpush.bf16.msra.mxu0 %v2731
  %2807 = vmatpush.bf16.msra.mxu0 %v2730
  %2808 = vmatpush.bf16.msra.mxu0 %v2729
  %2809 = vmatpush.bf16.msra.mxu0 %v2728
  %2810 = vmatpush.bf16.msra.mxu0 %v2727
  %2811 = vmatpush.bf16.msra.mxu0 %v2726
  %2812 = vmatmul.bf16.gmra.mxu0 %v2604
  %v2813 = vpop.f32.mrf.mxu0
  %v2814 = vadd.f32 %v2760, %v2813
  %v2815 = vpop.f32.mrf.mxu0
  %v2816 = vadd.f32 %v2762, %v2815
  %2817 = vmatmul.bf16.gmra.mxu0 %v2606
  %v2818 = vpop.f32.mrf.mxu0
  %v2819 = vadd.f32 %v2765, %v2818
  %v2820 = vpop.f32.mrf.mxu0
  %v2821 = vadd.f32 %v2767, %v2820
  %2822 = vmatmul.bf16.gmra.mxu0 %v2608
  %v2823 = vpop.f32.mrf.mxu0
  %v2824 = vadd.f32 %v2770, %v2823
  %v2825 = vpop.f32.mrf.mxu0
  %v2826 = vadd.f32 %v2772, %v2825
  %2827 = vmatmul.bf16.gmra.mxu0 %v2610
  %v2828 = vpop.f32.mrf.mxu0
  %v2829 = vadd.f32 %v2775, %v2828
  %v2830 = vpop.f32.mrf.mxu0
  %v2831 = vadd.f32 %v2777, %v2830
  %2832 = vmatmul.bf16.gmra.mxu0 %v2612
  %v2833 = vpop.f32.mrf.mxu0
  %v2834 = vadd.f32 %v2780, %v2833
  %v2835 = vpop.f32.mrf.mxu0
  %v2836 = vadd.f32 %v2782, %v2835
  %2837 = vmatmul.bf16.gmra.mxu0 %v2614
  %v2838 = vpop.f32.mrf.mxu0
  %v2839 = vadd.f32 %v2785, %v2838
  %v2840 = vpop.f32.mrf.mxu0
  %v2841 = vadd.f32 %v2787, %v2840
  %2842 = vmatmul.bf16.gmra.mxu0 %v2616
  %v2843 = vpop.f32.mrf.mxu0
  %v2844 = vadd.f32 %v2790, %v2843
  %v2845 = vpop.f32.mrf.mxu0
  %v2846 = vadd.f32 %v2792, %v2845
  %2847 = vmatmul.bf16.gmra.mxu0 %v2618
  %v2848 = vpop.f32.mrf.mxu0
  %v2849 = vadd.f32 %v2795, %v2848
  %v2850 = vpop.f32.mrf.mxu0
  %v2851 = vadd.f32 %v2797, %v2850
  %2852 = vmatmul.bf16.gmra.mxu0 %v2620
  %v2853 = vpop.f32.mrf.mxu0
  %v2854 = vadd.f32 %v2800, %v2853
  %v2855 = vpop.f32.mrf.mxu0
  %v2856 = vadd.f32 %v2802, %v2855
  %2857 = vdwg.mxu0
  %v2858 = vadd.f32 %v2549, %v2814
  %v2859 = vadd.f32 %v2550, %v2816
  %v2860 = vadd.f32 %v2551, %v2819
  %v2861 = vadd.f32 %v2552, %v2821
  %v2862 = vadd.f32 %v2553, %v2824
  %v2863 = vadd.f32 %v2554, %v2826
  %v2864 = vadd.f32 %v2555, %v2829
  %v2865 = vadd.f32 %v2556, %v2831
  %v2866 = vadd.f32 %v2557, %v2834
  %v2867 = vadd.f32 %v2558, %v2836
  %v2868 = vadd.f32 %v2559, %v2839
  %v2869 = vadd.f32 %v2560, %v2841
  %v2870 = vadd.f32 %v2561, %v2844
  %v2871 = vadd.f32 %v2562, %v2846
  %v2872 = vadd.f32 %v2563, %v2849
  %v2873 = vadd.f32 %v2564, %v2851
  %v2874 = vadd.f32 %v2565, %v2854
  %v2875 = vadd.f32 %v2566, %v2856
  %v2876 = vld [vmem:[#allocation2 + $0x19] sm:$0xff]
  %v2877 = vld [vmem:[#allocation2 + $0x21] sm:$0xff]
  %v2878 = vld [vmem:[#allocation2 + $0x29] sm:$0xff]
  %v2879 = vld [vmem:[#allocation2 + $0x31] sm:$0xff]
  %v2880 = vld [vmem:[#allocation2 + $0x39] sm:$0xff]
  %v2881 = vld [vmem:[#allocation2 + $0x41] sm:$0xff]
  %v2882 = vld [vmem:[#allocation2 + $0x49] sm:$0xff]
  %v2883 = vld [vmem:[#allocation2 + $0x51] sm:$0xff]
  %v2884 = vld [vmem:[#allocation2 + $0x59] sm:$0xff]
  %v2885 = vld [vmem:[#allocation2 + $0x61] sm:$0xff]
  %v2886 = vld [vmem:[#allocation2 + $0x69] sm:$0xff]
  %v2887 = vld [vmem:[#allocation2 + $0x71] sm:$0xff]
  %v2888 = vld [vmem:[#allocation2 + $0x79] sm:$0xff]
  %v2889 = vld [vmem:[#allocation2 + $0x81] sm:$0xff]
  %v2890 = vld [vmem:[#allocation2 + $0x89] sm:$0xff]
  %v2891 = vld [vmem:[#allocation2 + $0x91] sm:$0xff]
  %v2892 = vld [vmem:[#allocation2 + $0x99] sm:$0xff]
  %v2893 = vld [vmem:[#allocation2 + $0xa1] sm:$0xff]
  %v2894 = vpack.c.bf16 %v2877, %v2876
  %v2895 = vpack.c.bf16 %v2879, %v2878
  %v2896 = vpack.c.bf16 %v2881, %v2880
  %v2897 = vpack.c.bf16 %v2883, %v2882
  %v2898 = vpack.c.bf16 %v2885, %v2884
  %v2899 = vpack.c.bf16 %v2887, %v2886
  %v2900 = vpack.c.bf16 %v2889, %v2888
  %v2901 = vpack.c.bf16 %v2891, %v2890
  %v2902 = vpack.c.bf16 %v2893, %v2892
  %s2903 = scalar_lea.vmem [#allocation3], 512
  %v2904 = vld [vmem:[%s2903] sm:$0xf]
  %v2905 = vld [vmem:[%s2903 + $0x4] sm:$0xf]
  %v2906 = vld [vmem:[%s2903 + $0x8] sm:$0xf]
  %v2907 = vld [vmem:[%s2903 + $0xc] sm:$0xf]
  %v2908 = vld [vmem:[%s2903 + $0x10] sm:$0xf]
  %v2909 = vld [vmem:[%s2903 + $0x14] sm:$0xf]
  %v2910 = vld [vmem:[%s2903 + $0x18] sm:$0xf]
  %v2911 = vld [vmem:[%s2903 + $0x1c] sm:$0xf]
  %v2912 = vld [vmem:[%s2903 + $0x20] sm:$0xf]
  %v2913 = vld [vmem:[%s2903 + $0x24] sm:$0xf]
  %v2914 = vld [vmem:[%s2903 + $0x28] sm:$0xf]
  %v2915 = vld [vmem:[%s2903 + $0x2c] sm:$0xf]
  %v2916 = vld [vmem:[%s2903 + $0x30] sm:$0xf]
  %v2917 = vld [vmem:[%s2903 + $0x34] sm:$0xf]
  %v2918 = vld [vmem:[%s2903 + $0x38] sm:$0xf]
  %v2919 = vld [vmem:[%s2903 + $0x3c] sm:$0xf]
  %v2920 = vld [vmem:[%s2903 + $0x40] sm:$0xf]
  %v2921 = vld [vmem:[%s2903 + $0x44] sm:$0xf]
  %v2922 = vld [vmem:[%s2903 + $0x48] sm:$0xf]
  %v2923 = vld [vmem:[%s2903 + $0x4c] sm:$0xf]
  %v2924 = vld [vmem:[%s2903 + $0x50] sm:$0xf]
  %v2925 = vld [vmem:[%s2903 + $0x54] sm:$0xf]
  %v2926 = vld [vmem:[%s2903 + $0x58] sm:$0xf]
  %v2927 = vld [vmem:[%s2903 + $0x5c] sm:$0xf]
  %v2928 = vld [vmem:[%s2903 + $0x60] sm:$0xf]
  %v2929 = vld [vmem:[%s2903 + $0x64] sm:$0xf]
  %v2930 = vld [vmem:[%s2903 + $0x68] sm:$0xf]
  %v2931 = vld [vmem:[%s2903 + $0x6c] sm:$0xf]
  %v2932 = vld [vmem:[%s2903 + $0x70] sm:$0xf]
  %v2933 = vld [vmem:[%s2903 + $0x74] sm:$0xf]
  %v2934 = vld [vmem:[%s2903 + $0x78] sm:$0xf]
  %v2935 = vld [vmem:[%s2903 + $0x7c] sm:$0xf]
  %v2968 = vunpack.c.l.b16 %v2904
  %v2969 = vunpack.c.l.b16 %v2905
  %v2970 = vunpack.c.l.b16 %v2906
  %v2971 = vunpack.c.l.b16 %v2907
  %v2972 = vunpack.c.l.b16 %v2908
  %v2973 = vunpack.c.l.b16 %v2909
  %v2974 = vunpack.c.l.b16 %v2910
  %v2975 = vunpack.c.l.b16 %v2911
  %v2976 = vunpack.c.l.b16 %v2912
  %v2977 = vunpack.c.l.b16 %v2913
  %v2978 = vunpack.c.l.b16 %v2914
  %v2979 = vunpack.c.l.b16 %v2915
  %v2980 = vunpack.c.l.b16 %v2916
  %v2981 = vunpack.c.l.b16 %v2917
  %v2982 = vunpack.c.l.b16 %v2918
  %v2983 = vunpack.c.l.b16 %v2919
  %v2984 = vunpack.c.l.b16 %v2920
  %v2985 = vunpack.c.l.b16 %v2921
  %v2986 = vunpack.c.l.b16 %v2922
  %v2987 = vunpack.c.l.b16 %v2923
  %v2988 = vunpack.c.l.b16 %v2924
  %v2989 = vunpack.c.l.b16 %v2925
  %v2990 = vunpack.c.l.b16 %v2926
  %v2991 = vunpack.c.l.b16 %v2927
  %v2992 = vunpack.c.l.b16 %v2928
  %v2993 = vunpack.c.l.b16 %v2929
  %v2994 = vunpack.c.l.b16 %v2930
  %v2995 = vunpack.c.l.b16 %v2931
  %v2996 = vunpack.c.l.b16 %v2932
  %v2997 = vunpack.c.l.b16 %v2933
  %v2998 = vunpack.c.l.b16 %v2934
  %v2999 = vunpack.c.l.b16 %v2935
  %v3000 = vpack.c.b16 %v2969, %v2968
  %v3001 = vpack.c.b16 %v2971, %v2970
  %v3002 = vpack.c.b16 %v2973, %v2972
  %v3003 = vpack.c.b16 %v2975, %v2974
  %v3004 = vpack.c.b16 %v2977, %v2976
  %v3005 = vpack.c.b16 %v2979, %v2978
  %v3006 = vpack.c.b16 %v2981, %v2980
  %v3007 = vpack.c.b16 %v2983, %v2982
  %v3008 = vpack.c.b16 %v2985, %v2984
  %v3009 = vpack.c.b16 %v2987, %v2986
  %v3010 = vpack.c.b16 %v2989, %v2988
  %v3011 = vpack.c.b16 %v2991, %v2990
  %v3012 = vpack.c.b16 %v2993, %v2992
  %v3013 = vpack.c.b16 %v2995, %v2994
  %v3014 = vpack.c.b16 %v2997, %v2996
  %v3015 = vpack.c.b16 %v2999, %v2998
  %3032 = vmatpush.bf16.msra.mxu0 %v3007
  %3033 = vmatpush.bf16.msra.mxu0 %v3006
  %3034 = vmatpush.bf16.msra.mxu0 %v3005
  %3035 = vmatpush.bf16.msra.mxu0 %v3004
  %3036 = vmatpush.bf16.msra.mxu0 %v3003
  %3037 = vmatpush.bf16.msra.mxu0 %v3002
  %3038 = vmatpush.bf16.msra.mxu0 %v3001
  %3039 = vmatpush.bf16.msra.mxu0 %v3000
  %3040 = vmatmul.bf16.gmra.mxu0 %v2894
  %v3041 = vpop.f32.mrf.mxu0
  %v3042 = vadd.f32 0.0, %v3041
  %v3043 = vpop.f32.mrf.mxu0
  %v3044 = vadd.f32 0.0, %v3043
  %3045 = vmatmul.bf16.gmra.mxu0 %v2895
  %v3046 = vpop.f32.mrf.mxu0
  %v3047 = vadd.f32 0.0, %v3046
  %v3048 = vpop.f32.mrf.mxu0
  %v3049 = vadd.f32 0.0, %v3048
  %3050 = vmatmul.bf16.gmra.mxu0 %v2896
  %v3051 = vpop.f32.mrf.mxu0
  %v3052 = vadd.f32 0.0, %v3051
  %v3053 = vpop.f32.mrf.mxu0
  %v3054 = vadd.f32 0.0, %v3053
  %3055 = vmatmul.bf16.gmra.mxu0 %v2897
  %v3056 = vpop.f32.mrf.mxu0
  %v3057 = vadd.f32 0.0, %v3056
  %v3058 = vpop.f32.mrf.mxu0
  %v3059 = vadd.f32 0.0, %v3058
  %3060 = vmatmul.bf16.gmra.mxu0 %v2898
  %v3061 = vpop.f32.mrf.mxu0
  %v3062 = vadd.f32 0.0, %v3061
  %v3063 = vpop.f32.mrf.mxu0
  %v3064 = vadd.f32 0.0, %v3063
  %3065 = vmatmul.bf16.gmra.mxu0 %v2899
  %v3066 = vpop.f32.mrf.mxu0
  %v3067 = vadd.f32 0.0, %v3066
  %v3068 = vpop.f32.mrf.mxu0
  %v3069 = vadd.f32 0.0, %v3068
  %3070 = vmatmul.bf16.gmra.mxu0 %v2900
  %v3071 = vpop.f32.mrf.mxu0
  %v3072 = vadd.f32 0.0, %v3071
  %v3073 = vpop.f32.mrf.mxu0
  %v3074 = vadd.f32 0.0, %v3073
  %3075 = vmatmul.bf16.gmra.mxu0 %v2901
  %v3076 = vpop.f32.mrf.mxu0
  %v3077 = vadd.f32 0.0, %v3076
  %v3078 = vpop.f32.mrf.mxu0
  %v3079 = vadd.f32 0.0, %v3078
  %3080 = vmatmul.bf16.gmra.mxu0 %v2902
  %v3081 = vpop.f32.mrf.mxu0
  %v3082 = vadd.f32 0.0, %v3081
  %v3083 = vpop.f32.mrf.mxu0
  %v3084 = vadd.f32 0.0, %v3083
  %3085 = vdwg.mxu0
  %3086 = vmatpush.bf16.msra.mxu0 %v3015
  %3087 = vmatpush.bf16.msra.mxu0 %v3014
  %3088 = vmatpush.bf16.msra.mxu0 %v3013
  %3089 = vmatpush.bf16.msra.mxu0 %v3012
  %3090 = vmatpush.bf16.msra.mxu0 %v3011
  %3091 = vmatpush.bf16.msra.mxu0 %v3010
  %3092 = vmatpush.bf16.msra.mxu0 %v3009
  %3093 = vmatpush.bf16.msra.mxu0 %v3008
  %3094 = vmatmul.bf16.gmra.mxu0 %v2894
  %v3095 = vpop.f32.mrf.mxu0
  %v3096 = vadd.f32 %v3042, %v3095
  %v3097 = vpop.f32.mrf.mxu0
  %v3098 = vadd.f32 %v3044, %v3097
  %3099 = vmatmul.bf16.gmra.mxu0 %v2895
  %v3100 = vpop.f32.mrf.mxu0
  %v3101 = vadd.f32 %v3047, %v3100
  %v3102 = vpop.f32.mrf.mxu0
  %v3103 = vadd.f32 %v3049, %v3102
  %3104 = vmatmul.bf16.gmra.mxu0 %v2896
  %v3105 = vpop.f32.mrf.mxu0
  %v3106 = vadd.f32 %v3052, %v3105
  %v3107 = vpop.f32.mrf.mxu0
  %v3108 = vadd.f32 %v3054, %v3107
  %3109 = vmatmul.bf16.gmra.mxu0 %v2897
  %v3110 = vpop.f32.mrf.mxu0
  %v3111 = vadd.f32 %v3057, %v3110
  %v3112 = vpop.f32.mrf.mxu0
  %v3113 = vadd.f32 %v3059, %v3112
  %3114 = vmatmul.bf16.gmra.mxu0 %v2898
  %v3115 = vpop.f32.mrf.mxu0
  %v3116 = vadd.f32 %v3062, %v3115
  %v3117 = vpop.f32.mrf.mxu0
  %v3118 = vadd.f32 %v3064, %v3117
  %3119 = vmatmul.bf16.gmra.mxu0 %v2899
  %v3120 = vpop.f32.mrf.mxu0
  %v3121 = vadd.f32 %v3067, %v3120
  %v3122 = vpop.f32.mrf.mxu0
  %v3123 = vadd.f32 %v3069, %v3122
  %3124 = vmatmul.bf16.gmra.mxu0 %v2900
  %v3125 = vpop.f32.mrf.mxu0
  %v3126 = vadd.f32 %v3072, %v3125
  %v3127 = vpop.f32.mrf.mxu0
  %v3128 = vadd.f32 %v3074, %v3127
  %3129 = vmatmul.bf16.gmra.mxu0 %v2901
  %v3130 = vpop.f32.mrf.mxu0
  %v3131 = vadd.f32 %v3077, %v3130
  %v3132 = vpop.f32.mrf.mxu0
  %v3133 = vadd.f32 %v3079, %v3132
  %3134 = vmatmul.bf16.gmra.mxu0 %v2902
  %v3135 = vpop.f32.mrf.mxu0
  %v3136 = vadd.f32 %v3082, %v3135
  %v3137 = vpop.f32.mrf.mxu0
  %v3138 = vadd.f32 %v3084, %v3137
  %3139 = vdwg.mxu0
  %v3140 = vadd.f32 %v2858, %v3096
  %v3141 = vadd.f32 %v2859, %v3098
  %v3142 = vadd.f32 %v2860, %v3101
  %v3143 = vadd.f32 %v2861, %v3103
  %v3144 = vadd.f32 %v2862, %v3106
  %v3145 = vadd.f32 %v2863, %v3108
  %v3146 = vadd.f32 %v2864, %v3111
  %v3147 = vadd.f32 %v2865, %v3113
  %v3148 = vadd.f32 %v2866, %v3116
  %v3149 = vadd.f32 %v2867, %v3118
  %v3150 = vadd.f32 %v2868, %v3121
  %v3151 = vadd.f32 %v2869, %v3123
  %v3152 = vadd.f32 %v2870, %v3126
  %v3153 = vadd.f32 %v2871, %v3128
  %v3154 = vadd.f32 %v2872, %v3131
  %v3155 = vadd.f32 %v2873, %v3133
  %v3156 = vadd.f32 %v2874, %v3136
  %v3157 = vadd.f32 %v2875, %v3138
  %v3158 = vld [vmem:[%s6] sm:$0x1]
  %v3160 = vperm.slane %v3158, 0
  %v3162 = vadd.f32 %v3140, %v3160
  %v3163 = vadd.f32 %v3141, %v3160
  %v3164 = vadd.f32 %v3142, %v3160
  %v3165 = vadd.f32 %v3143, %v3160
  %v3166 = vadd.f32 %v3144, %v3160
  %v3167 = vadd.f32 %v3145, %v3160
  %v3168 = vadd.f32 %v3146, %v3160
  %v3169 = vadd.f32 %v3147, %v3160
  %v3170 = vadd.f32 %v3148, %v3160
  %v3171 = vadd.f32 %v3149, %v3160
  %v3172 = vadd.f32 %v3150, %v3160
  %v3173 = vadd.f32 %v3151, %v3160
  %v3174 = vadd.f32 %v3152, %v3160
  %v3175 = vadd.f32 %v3153, %v3160
  %v3176 = vadd.f32 %v3154, %v3160
  %v3177 = vadd.f32 %v3155, %v3160
  %v3178 = vadd.f32 %v3156, %v3160
  %v3179 = vadd.f32 %v3157, %v3160
  %v3180 = vld [vmem:[%s1] sm:$0xff]
  %v3181 = vld [vmem:[%s1 + $0x8] sm:$0xff]
  %v3182 = vld [vmem:[%s1 + $0x10] sm:$0xff]
  %v3183 = vld [vmem:[%s1 + $0x18] sm:$0xff]
  %v3184 = vld [vmem:[%s1 + $0x20] sm:$0xff]
  %v3185 = vld [vmem:[%s1 + $0x28] sm:$0xff]
  %v3186 = vld [vmem:[%s1 + $0x30] sm:$0xff]
  %v3187 = vld [vmem:[%s1 + $0x38] sm:$0xff]
  %v3188 = vld [vmem:[%s1 + $0x40] sm:$0xff]
  %v3189 = vld [vmem:[%s1 + $0x48] sm:$0xff]
  %v3190 = vld [vmem:[%s1 + $0x50] sm:$0xff]
  %v3191 = vld [vmem:[%s1 + $0x58] sm:$0xff]
  %v3192 = vld [vmem:[%s1 + $0x60] sm:$0xff]
  %v3193 = vld [vmem:[%s1 + $0x68] sm:$0xff]
  %v3194 = vld [vmem:[%s1 + $0x70] sm:$0xff]
  %v3195 = vld [vmem:[%s1 + $0x78] sm:$0xff]
  %v3196 = vld [vmem:[%s1 + $0x80] sm:$0xff]
  %v3197 = vld [vmem:[%s1 + $0x88] sm:$0xff]
  %v3198 = vadd.f32 %v3162, %v3180
  %v3199 = vadd.f32 %v3163, %v3181
  %v3200 = vadd.f32 %v3164, %v3182
  %v3201 = vadd.f32 %v3165, %v3183
  %v3202 = vadd.f32 %v3166, %v3184
  %v3203 = vadd.f32 %v3167, %v3185
  %v3204 = vadd.f32 %v3168, %v3186
  %v3205 = vadd.f32 %v3169, %v3187
  %v3206 = vadd.f32 %v3170, %v3188
  %v3207 = vadd.f32 %v3171, %v3189
  %v3208 = vadd.f32 %v3172, %v3190
  %v3209 = vadd.f32 %v3173, %v3191
  %v3210 = vadd.f32 %v3174, %v3192
  %v3211 = vadd.f32 %v3175, %v3193
  %v3212 = vadd.f32 %v3176, %v3194
  %v3213 = vadd.f32 %v3177, %v3195
  %v3214 = vadd.f32 %v3178, %v3196
  %v3215 = vadd.f32 %v3179, %v3197
  %v3216 = vmax.f32 %v3198, 0.0
  %v3217 = vmax.f32 %v3199, 0.0
  %v3218 = vmax.f32 %v3200, 0.0
  %v3219 = vmax.f32 %v3201, 0.0
  %v3220 = vmax.f32 %v3202, 0.0
  %v3221 = vmax.f32 %v3203, 0.0
  %v3222 = vmax.f32 %v3204, 0.0
  %v3223 = vmax.f32 %v3205, 0.0
  %v3224 = vmax.f32 %v3206, 0.0
  %v3225 = vmax.f32 %v3207, 0.0
  %v3226 = vmax.f32 %v3208, 0.0
  %v3227 = vmax.f32 %v3209, 0.0
  %v3228 = vmax.f32 %v3210, 0.0
  %v3229 = vmax.f32 %v3211, 0.0
  %v3230 = vmax.f32 %v3212, 0.0
  %v3231 = vmax.f32 %v3213, 0.0
  %v3232 = vmax.f32 %v3214, 0.0
  %v3233 = vmax.f32 %v3215, 0.0
  %3234 = vst [vmem:[%s7] sm:$0xff] %v3216
  %3235 = vst [vmem:[%s7 + $0x8] sm:$0xff] %v3217
  %3236 = vst [vmem:[%s7 + $0x10] sm:$0xff] %v3218
  %3237 = vst [vmem:[%s7 + $0x18] sm:$0xff] %v3219
  %3238 = vst [vmem:[%s7 + $0x20] sm:$0xff] %v3220
  %3239 = vst [vmem:[%s7 + $0x28] sm:$0xff] %v3221
  %3240 = vst [vmem:[%s7 + $0x30] sm:$0xff] %v3222
  %3241 = vst [vmem:[%s7 + $0x38] sm:$0xff] %v3223
  %3242 = vst [vmem:[%s7 + $0x40] sm:$0xff] %v3224
  %3243 = vst [vmem:[%s7 + $0x48] sm:$0xff] %v3225
  %3244 = vst [vmem:[%s7 + $0x50] sm:$0xff] %v3226
  %3245 = vst [vmem:[%s7 + $0x58] sm:$0xff] %v3227
  %3246 = vst [vmem:[%s7 + $0x60] sm:$0xff] %v3228
  %3247 = vst [vmem:[%s7 + $0x68] sm:$0xff] %v3229
  %3248 = vst [vmem:[%s7 + $0x70] sm:$0xff] %v3230
  %3249 = vst [vmem:[%s7 + $0x78] sm:$0xff] %v3231
  %3250 = vst [vmem:[%s7 + $0x80] sm:$0xff] %v3232
  %3251 = vst [vmem:[%s7 + $0x88] sm:$0xff] %v3233
  // Predicated region
  $region30: #{pathogen_residual_block.1} parent=0 // pred_check
    _
  $region31: #{pathogen_residual_block.1} parent=0 // pred_check_branch
    %3253 = sbr.rel (0) target = $region33
  $region32: #{pathogen_residual_block.1} parent=0 // pred_region
    _
  $region33: #{pathogen_residual_block.1} parent=0 // pred_fallthru
    _
  // Predicated region
  $region34: #{pathogen_residual_block.1} parent=0 // pred_check
    _
  $region35: #{pathogen_residual_block.1} parent=0 // pred_check_branch
    %3255 = sbr.rel (0) target = $region37
  $region36: #{pathogen_residual_block.1} parent=0 // pred_region
    _
  $region37: #{pathogen_residual_block.1} parent=0 // pred_fallthru
    _
  %3256 = vsyncmov [#allocation4]
  %s3257 = vpop.sfrf %3256
  %p3258 = scmp.eq.s32.totalorder %s3257, 0
  %p3259 = pneg %p3258
  %3261 = shalt.err (%p3259)

</llo_original>
